<compile_context>
chip_gen: v7x
topology: tpu7x:2x2x1
jax: 0.10.0
libtpu: 0.0.40
codegen_flags: <defaults>
</compile_context>

<pallas_src>
import jax
import jax.numpy as jnp
from jax import lax
from jax.experimental import pallas as pl
from jax.experimental.pallas import tpu as pltpu


NUM_LAYERS = 2  # nn.LSTM default num_layers in LSTMencoder.__init__

_VMEM = pl.BlockSpec(memory_space=pltpu.MemorySpace.VMEM)


# ---------------------------------------------------------------------------
# Fused stacked-LSTM Pallas kernel
# ---------------------------------------------------------------------------

def _make_stacked_lstm_kernel(num_layers):
    """Builds a kernel for a `num_layers`-deep unidirectional LSTM over (T*B, D) rows.

    Ref layout (all 2-D):
      inputs : x_ref (T*B, D) bf16, msk_ref (T*B, 1) f32,
               then per layer: w_ih (Din, 4H) bf16, w_hh (H, 4H) bf16, b (1, 4H) f32
      outputs: out_ref (T*B, H) f32, hn_ref (L*B, H) f32, cn_ref (L*B, H) f32
      scratch: xg_sc (T*B, 4H) f32 (hoisted gate pre-activations),
               seq_sc (T*B, H) f32 (inter-layer hidden sequence)
    Row r corresponds to (t, b) with t = r // B, b = r % B (time-major).
    """

    def kernel(*refs):
        x_ref, msk_ref = refs[0], refs[1]
        layer_refs = refs[2:2 + 3 * num_layers]
        out_ref, hn_ref, cn_ref = refs[2 + 3 * num_layers:5 + 3 * num_layers]
        xg_sc, seq_sc = refs[5 + 3 * num_layers:]

        TB = x_ref.shape[0]
        H = hn_ref.shape[1]
        B = hn_ref.shape[0] // num_layers
        T = TB // B

        cur_in = x_ref
        for layer in range(num_layers):
            wih_ref = layer_refs[3 * layer + 0]
            whh_ref = layer_refs[3 * layer + 1]
            b_ref = layer_refs[3 * layer + 2]

            # Hoisted input projection for all timesteps at once: one big MXU matmul
            # instead of T tiny ones inside the serial recurrence (perf review #1).
            xg_sc[...] = (
                jnp.dot(cur_in[...].astype(wih_ref.dtype), wih_ref[...],
                        preferred_element_type=jnp.float32)
                + b_ref[...])

            dst_ref = out_ref if layer == num_layers - 1 else seq_sc

            def step(t, carry, whh_ref=whh_ref, dst_ref=dst_ref):
                h, c = carry
                rows = pl.ds(t * B, B)
                # Only the recurrent matmul + gate elementwise remain per step.
                gates = xg_sc[rows, :] + jnp.dot(
                    h.astype(whh_ref.dtype), whh_ref[...],
                    preferred_element_type=jnp.float32)            # (B, 4H) f32
                i = jax.nn.sigmoid(gates[:, 0 * H:1 * H])
                f = jax.nn.sigmoid(gates[:, 1 * H:2 * H])
                g = jnp.tanh(gates[:, 2 * H:3 * H])
                o = jax.nn.sigmoid(gates[:, 3 * H:4 * H])
                c_new = f * c + i * g
                h_new = o * jnp.tanh(c_new)
                dst_ref[rows, :] = h_new       # unmasked; zeroed lane-dense after loops
                m = msk_ref[rows, :]           # (B, 1) precomputed validity mask
                # Freeze the state past each sequence's length (packed-LSTM semantics).
                return (m * h_new + (1.0 - m) * h,
                        m * c_new + (1.0 - m) * c)

            zeros = jnp.zeros((B, H), jnp.float32)
            hT, cT = lax.fori_loop(0, T, step, (zeros, zeros), unroll=True)
            hn_ref[layer * B:(layer + 1) * B, :] = hT
            cn_ref[layer * B:(layer + 1) * B, :] = cT
            cur_in = dst_ref

        # pad_packed_sequence zero padding, applied once lane-dense (perf review #8/#10).
        out_ref[...] = out_ref[...] * msk_ref[...]

    return kernel


# ---------------------------------------------------------------------------
# pallas_call wrapper (whole problem resident in VMEM at these shapes)
# ---------------------------------------------------------------------------

def _run_stacked_lstm(x_sorted_btd, lengths_sorted, layer_params):
    """Run the fused stacked LSTM on length-sorted, batch-first input.

    x_sorted_btd: (B, T, D) f32; lengths_sorted: (B,) int32
    layer_params: list of (w_ih (Din,4H) bf16, w_hh (H,4H) bf16, b (1,4H) f32)
    Returns (out (B, T, H) f32, h_n (L, B, H) f32, c_n (L, B, H) f32).
    """
    B, T, D = x_sorted_btd.shape
    H = layer_params[0][1].shape[0]
    L = len(layer_params)

    # Time-major with time folded into the row axis; bf16 halves VMEM/DMA bytes.
    x2d = jnp.transpose(x_sorted_btd, (1, 0, 2)).reshape(T * B, D).astype(jnp.bfloat16)

    # Precompute the packed-sequence validity mask once (off the serial critical path).
    t_ids = jnp.arange(T, dtype=jnp.int32)
    msk = (t_ids[:, None] < lengths_sorted[None, :].astype(jnp.int32))
    msk2d = msk.astype(jnp.float32).reshape(T * B, 1)

    flat_w = []
    for (w_ih, w_hh, b) in layer_params:
        flat_w += [w_ih, w_hh, b]

    out2d, hn2d, cn2d = pl.pallas_call(
        _make_stacked_lstm_kernel(L),
        out_shape=(jax.ShapeDtypeStruct((T * B, H), jnp.float32),
                   jax.ShapeDtypeStruct((L * B, H), jnp.float32),
                   jax.ShapeDtypeStruct((L * B, H), jnp.float32)),
        in_specs=[_VMEM] * (2 + 3 * L),
        out_specs=(_VMEM, _VMEM, _VMEM),
        scratch_shapes=[pltpu.VMEM((T * B, 4 * H), jnp.float32),
                        pltpu.VMEM((T * B, H), jnp.float32)],
    )(x2d, msk2d, *flat_w)

    out = jnp.transpose(out2d.reshape(T, B, H), (1, 0, 2))      # (B, T, H) batch-first
    h_n = hn2d.reshape(L, B, H)
    c_n = cn2d.reshape(L, B, H)
    return out, h_n, c_n


# ---------------------------------------------------------------------------
# LSTMencoder.forward equivalent
# ---------------------------------------------------------------------------

@jax.jit
def lstm_encoder_forward(params, x, x_lengths):
    """Port of LSTMencoder.forward(x, x_lengths).

    x: (B, T, input_dim) f32 batch-first; x_lengths: (B,) int valid lengths.
    Returns (hidden_original=(h_n, c_n), unpacked_original), exactly as the module.
    """
    # ---- sort by length, descending (pack_padded_sequence requirement) ----
    sorted_idx = jnp.argsort(-x_lengths)
    sorted_len = x_lengths[sorted_idx]
    sorted_inputs = x[sorted_idx]

    # PyTorch nn.LSTM parameter mapping: transpose weights to (in, 4H) and pre-sum the
    # separate b_ih / b_hh biases (parity with a real checkpoint); bf16 matmul operands.
    layer_params = []
    for l in range(NUM_LAYERS):
        w_ih = params[f"weight_ih_l{l}"].T.astype(jnp.bfloat16)     # (Din, 4H)
        w_hh = params[f"weight_hh_l{l}"].T.astype(jnp.bfloat16)     # (H, 4H)
        b = (params[f"bias_ih_l{l}"] + params[f"bias_hh_l{l}"]).astype(jnp.float32)[None, :]
        layer_params.append((w_ih, w_hh, b))

    unpacked_sorted, h_n_sorted, c_n_sorted = _run_stacked_lstm(
        sorted_inputs, sorted_len, layer_params)

    # ---- restore the original batch order (as the module does) ----
    original_idx = jnp.argsort(sorted_idx)
    hidden_original = (h_n_sorted[:, original_idx, :], c_n_sorted[:, original_idx, :])
    unpacked_original = unpacked_sorted[original_idx]
    # TODO(synk): pad_packed_sequence trims the time axis to max(x_lengths); with static
    # shapes we return the full T with zeros past each length (same values, wider pad).
    return hidden_original, unpacked_original


# ---------------------------------------------------------------------------
# Parameter init (PyTorch nn.LSTM layout) and demo
# ---------------------------------------------------------------------------

def init_lstm_params(key, input_dim, hidden_dim, num_layers=NUM_LAYERS):
    params = {}
    scale = hidden_dim ** -0.5
    k = key
    for l in range(num_layers):
        din = input_dim if l == 0 else hidden_dim
        k, k1, k2, k3, k4 = jax.random.split(k, 5)
        params[f"weight_ih_l{l}"] = scale * jax.random.uniform(
            k1, (4 * hidden_dim, din), jnp.float32, -1.0, 1.0)
        params[f"weight_hh_l{l}"] = scale * jax.random.uniform(
            k2, (4 * hidden_dim, hidden_dim), jnp.float32, -1.0, 1.0)
        params[f"bias_ih_l{l}"] = scale * jax.random.uniform(
            k3, (4 * hidden_dim,), jnp.float32, -1.0, 1.0)
        params[f"bias_hh_l{l}"] = scale * jax.random.uniform(
            k4, (4 * hidden_dim,), jnp.float32, -1.0, 1.0)
    return params


if __name__ == "__main__":
    key = jax.random.PRNGKey(0)
    k_par, k_in = jax.random.split(key)

    B, T, INPUT_DIM, HIDDEN = 2, 8, 16, 32   # 4H = 128 -> one full MXU lane tile
    params = init_lstm_params(k_par, INPUT_DIM, HIDDEN)

    x = jax.random.normal(k_in, (B, T, INPUT_DIM), jnp.float32)
    x_lengths = jnp.array([5, 8], jnp.int32)   # deliberately unsorted; module sorts

    (h_n, c_n), unpacked = lstm_encoder_forward(params, x, x_lengths)
    jax.block_until_ready((h_n, c_n, unpacked))

    assert unpacked.shape == (B, T, HIDDEN)
    assert h_n.shape == (NUM_LAYERS, B, HIDDEN)
    assert c_n.shape == (NUM_LAYERS, B, HIDDEN)
    assert bool(jnp.all(jnp.isfinite(unpacked)))
    assert bool(jnp.all(jnp.isfinite(h_n))) and bool(jnp.all(jnp.isfinite(c_n)))
    # pad_packed_sequence semantics: positions past each sequence's length are zero.
    assert float(jnp.abs(unpacked[0, 5:, :]).max()) == 0.0
    print("KERNEL_OK")
</pallas_src>

<mosaic_0001>
module attributes {stable_mosaic.version = 11 : i64} {
  func.func @kernel(%arg0: memref<16x16xbf16, #tpu.memory_space<vmem>>, %arg1: memref<16x1xf32, #tpu.memory_space<vmem>>, %arg2: memref<16x128xbf16, #tpu.memory_space<vmem>>, %arg3: memref<32x128xbf16, #tpu.memory_space<vmem>>, %arg4: memref<1x128xf32, #tpu.memory_space<vmem>>, %arg5: memref<32x128xbf16, #tpu.memory_space<vmem>>, %arg6: memref<32x128xbf16, #tpu.memory_space<vmem>>, %arg7: memref<1x128xf32, #tpu.memory_space<vmem>>, %arg8: memref<16x32xf32, #tpu.memory_space<vmem>>, %arg9: memref<4x32xf32, #tpu.memory_space<vmem>>, %arg10: memref<4x32xf32, #tpu.memory_space<vmem>>, %arg11: memref<16x128xf32, #tpu.memory_space<vmem>>, %arg12: memref<16x32xf32, #tpu.memory_space<vmem>>) attributes {dimension_semantics = [], scalar_prefetch = 0 : i64, scratch_operands = 2 : i64, tpu.core_type = #tpu.core_type<tc>} {
    %c0 = arith.constant 0 : index
    %c0_0 = arith.constant 0 : index
    %0 = vector.load %arg0[%c0, %c0_0] : memref<16x16xbf16, #tpu.memory_space<vmem>>, vector<16x16xbf16>
    %c0_1 = arith.constant 0 : index
    %c0_2 = arith.constant 0 : index
    %1 = vector.load %arg2[%c0_1, %c0_2] : memref<16x128xbf16, #tpu.memory_space<vmem>>, vector<16x128xbf16>
    %cst = arith.constant dense<0.000000e+00> : vector<16x128xf32>
    %2 = tpu.matmul %0, %1, %cst {dimension_numbers = #tpu.dot_dimension_numbers<[1], [0], [0], [1], [0, 0, 1, 1], [], []>} : vector<16x16xbf16>, vector<16x128xbf16>, vector<16x128xf32> -> vector<16x128xf32>
    %c0_3 = arith.constant 0 : index
    %c0_4 = arith.constant 0 : index
    %3 = vector.load %arg4[%c0_3, %c0_4] : memref<1x128xf32, #tpu.memory_space<vmem>>, vector<1x128xf32>
    %4 = vector.broadcast %3 : vector<1x128xf32> to vector<16x128xf32>
    %5 = arith.addf %2, %4 : vector<16x128xf32>
    %c0_5 = arith.constant 0 : index
    %c0_6 = arith.constant 0 : index
    %6 = vector.load %arg11[%c0_5, %c0_6] : memref<16x128xf32, #tpu.memory_space<vmem>>, vector<16x128xf32>
    tpu.vector_store %arg11[%c0_5, %c0_6], %5 {strides = array<i32>} : memref<16x128xf32, #tpu.memory_space<vmem>>, vector<16x128xf32>,
    %cst_7 = arith.constant 0.000000e+00 : f32
    %7 = vector.broadcast %cst_7 : f32 to vector<2x32xf32>
    %c0_i32 = arith.constant 0 : i32
    %c2_i32 = arith.constant 2 : i32
    %8 = arith.muli %c0_i32, %c2_i32 : i32
    %9 = arith.index_cast %8 : i32 to index
    %c0_8 = arith.constant 0 : index
    %10 = vector.load %arg11[%9, %c0_8] : memref<16x128xf32, #tpu.memory_space<vmem>>, vector<2x128xf32>
    %11 = arith.truncf %7 : vector<2x32xf32> to vector<2x32xbf16>
    %c0_9 = arith.constant 0 : index
    %c0_10 = arith.constant 0 : index
    %12 = vector.load %arg3[%c0_9, %c0_10] : memref<32x128xbf16, #tpu.memory_space<vmem>>, vector<32x128xbf16>
    %cst_11 = arith.constant dense<0.000000e+00> : vector<2x128xf32>
    %13 = tpu.matmul %11, %12, %cst_11 {dimension_numbers = #tpu.dot_dimension_numbers<[1], [0], [0], [1], [0, 0, 1, 1], [], []>} : vector<2x32xbf16>, vector<32x128xbf16>, vector<2x128xf32> -> vector<2x128xf32>
    %14 = arith.addf %10, %13 : vector<2x128xf32>
    %15 = vector.extract_strided_slice %14 {offsets = [0, 0], sizes = [2, 32], strides = [1, 1]} : vector<2x128xf32> to vector<2x32xf32>
    %16 = arith.negf %15 : vector<2x32xf32>
    %17 = math.exp %16 : vector<2x32xf32>
    %cst_12 = arith.constant 1.000000e+00 : f32
    %18 = vector.broadcast %cst_12 : f32 to vector<2x32xf32>
    %19 = arith.addf %18, %17 : vector<2x32xf32>
    %20 = arith.divf %18, %19 : vector<2x32xf32>
    %21 = vector.extract_strided_slice %14 {offsets = [0, 32], sizes = [2, 32], strides = [1, 1]} : vector<2x128xf32> to vector<2x32xf32>
    %22 = arith.negf %21 : vector<2x32xf32>
    %23 = math.exp %22 : vector<2x32xf32>
    %cst_13 = arith.constant 1.000000e+00 : f32
    %24 = vector.broadcast %cst_13 : f32 to vector<2x32xf32>
    %25 = arith.addf %24, %23 : vector<2x32xf32>
    %26 = arith.divf %24, %25 : vector<2x32xf32>
    %27 = vector.extract_strided_slice %14 {offsets = [0, 64], sizes = [2, 32], strides = [1, 1]} : vector<2x128xf32> to vector<2x32xf32>
    %28 = math.tanh %27 : vector<2x32xf32>
    %29 = vector.extract_strided_slice %14 {offsets = [0, 96], sizes = [2, 32], strides = [1, 1]} : vector<2x128xf32> to vector<2x32xf32>
    %30 = arith.negf %29 : vector<2x32xf32>
    %31 = math.exp %30 : vector<2x32xf32>
    %cst_14 = arith.constant 1.000000e+00 : f32
    %32 = vector.broadcast %cst_14 : f32 to vector<2x32xf32>
    %33 = arith.addf %32, %31 : vector<2x32xf32>
    %34 = arith.divf %32, %33 : vector<2x32xf32>
    %35 = arith.mulf %26, %7 : vector<2x32xf32>
    %36 = arith.mulf %20, %28 : vector<2x32xf32>
    %37 = arith.addf %35, %36 : vector<2x32xf32>
    %38 = math.tanh %37 : vector<2x32xf32>
    %39 = arith.mulf %34, %38 : vector<2x32xf32>
    %40 = arith.index_cast %8 : i32 to index
    %c0_15 = arith.constant 0 : index
    %41 = vector.load %arg12[%40, %c0_15] : memref<16x32xf32, #tpu.memory_space<vmem>>, vector<2x32xf32>
    tpu.vector_store %arg12[%40, %c0_15], %39 {strides = array<i32>} : memref<16x32xf32, #tpu.memory_space<vmem>>, vector<2x32xf32>,
    %42 = arith.index_cast %8 : i32 to index
    %c0_16 = arith.constant 0 : index
    %43 = vector.load %arg1[%42, %c0_16] : memref<16x1xf32, #tpu.memory_space<vmem>>, vector<2x1xf32>
    %44 = vector.broadcast %43 : vector<2x1xf32> to vector<2x32xf32>
    %45 = arith.mulf %44, %39 : vector<2x32xf32>
    %cst_17 = arith.constant 1.000000e+00 : f32
    %46 = vector.broadcast %cst_17 : f32 to vector<2x1xf32>
    %47 = arith.subf %46, %43 : vector<2x1xf32>
    %48 = vector.broadcast %47 : vector<2x1xf32> to vector<2x32xf32>
    %49 = arith.mulf %48, %7 : vector<2x32xf32>
    %50 = arith.addf %45, %49 : vector<2x32xf32>
    %51 = vector.broadcast %43 : vector<2x1xf32> to vector<2x32xf32>
    %52 = arith.mulf %51, %37 : vector<2x32xf32>
    %cst_18 = arith.constant 1.000000e+00 : f32
    %53 = vector.broadcast %cst_18 : f32 to vector<2x1xf32>
    %54 = arith.subf %53, %43 : vector<2x1xf32>
    %55 = vector.broadcast %54 : vector<2x1xf32> to vector<2x32xf32>
    %56 = arith.mulf %55, %7 : vector<2x32xf32>
    %57 = arith.addf %52, %56 : vector<2x32xf32>
    %c1_i32 = arith.constant 1 : i32
    %c2_i32_19 = arith.constant 2 : i32
    %58 = arith.muli %c1_i32, %c2_i32_19 : i32
    %59 = arith.index_cast %58 : i32 to index
    %c0_20 = arith.constant 0 : index
    %60 = vector.load %arg11[%59, %c0_20] : memref<16x128xf32, #tpu.memory_space<vmem>>, vector<2x128xf32>
    %61 = arith.truncf %50 : vector<2x32xf32> to vector<2x32xbf16>
    %c0_21 = arith.constant 0 : index
    %c0_22 = arith.constant 0 : index
    %62 = vector.load %arg3[%c0_21, %c0_22] : memref<32x128xbf16, #tpu.memory_space<vmem>>, vector<32x128xbf16>
    %cst_23 = arith.constant dense<0.000000e+00> : vector<2x128xf32>
    %63 = tpu.matmul %61, %62, %cst_23 {dimension_numbers = #tpu.dot_dimension_numbers<[1], [0], [0], [1], [0, 0, 1, 1], [], []>} : vector<2x32xbf16>, vector<32x128xbf16>, vector<2x128xf32> -> vector<2x128xf32>
    %64 = arith.addf %60, %63 : vector<2x128xf32>
    %65 = vector.extract_strided_slice %64 {offsets = [0, 0], sizes = [2, 32], strides = [1, 1]} : vector<2x128xf32> to vector<2x32xf32>
    %66 = arith.negf %65 : vector<2x32xf32>
    %67 = math.exp %66 : vector<2x32xf32>
    %cst_24 = arith.constant 1.000000e+00 : f32
    %68 = vector.broadcast %cst_24 : f32 to vector<2x32xf32>
    %69 = arith.addf %68, %67 : vector<2x32xf32>
    %70 = arith.divf %68, %69 : vector<2x32xf32>
    %71 = vector.extract_strided_slice %64 {offsets = [0, 32], sizes = [2, 32], strides = [1, 1]} : vector<2x128xf32> to vector<2x32xf32>
    %72 = arith.negf %71 : vector<2x32xf32>
    %73 = math.exp %72 : vector<2x32xf32>
    %cst_25 = arith.constant 1.000000e+00 : f32
    %74 = vector.broadcast %cst_25 : f32 to vector<2x32xf32>
    %75 = arith.addf %74, %73 : vector<2x32xf32>
    %76 = arith.divf %74, %75 : vector<2x32xf32>
    %77 = vector.extract_strided_slice %64 {offsets = [0, 64], sizes = [2, 32], strides = [1, 1]} : vector<2x128xf32> to vector<2x32xf32>
    %78 = math.tanh %77 : vector<2x32xf32>
    %79 = vector.extract_strided_slice %64 {offsets = [0, 96], sizes = [2, 32], strides = [1, 1]} : vector<2x128xf32> to vector<2x32xf32>
    %80 = arith.negf %79 : vector<2x32xf32>
    %81 = math.exp %80 : vector<2x32xf32>
    %cst_26 = arith.constant 1.000000e+00 : f32
    %82 = vector.broadcast %cst_26 : f32 to vector<2x32xf32>
    %83 = arith.addf %82, %81 : vector<2x32xf32>
    %84 = arith.divf %82, %83 : vector<2x32xf32>
    %85 = arith.mulf %76, %57 : vector<2x32xf32>
    %86 = arith.mulf %70, %78 : vector<2x32xf32>
    %87 = arith.addf %85, %86 : vector<2x32xf32>
    %88 = math.tanh %87 : vector<2x32xf32>
    %89 = arith.mulf %84, %88 : vector<2x32xf32>
    %90 = arith.index_cast %58 : i32 to index
    %c0_27 = arith.constant 0 : index
    %91 = vector.load %arg12[%90, %c0_27] : memref<16x32xf32, #tpu.memory_space<vmem>>, vector<2x32xf32>
    tpu.vector_store %arg12[%90, %c0_27], %89 {strides = array<i32>} : memref<16x32xf32, #tpu.memory_space<vmem>>, vector<2x32xf32>,
    %92 = arith.index_cast %58 : i32 to index
    %c0_28 = arith.constant 0 : index
    %93 = vector.load %arg1[%92, %c0_28] : memref<16x1xf32, #tpu.memory_space<vmem>>, vector<2x1xf32>
    %94 = vector.broadcast %93 : vector<2x1xf32> to vector<2x32xf32>
    %95 = arith.mulf %94, %89 : vector<2x32xf32>
    %cst_29 = arith.constant 1.000000e+00 : f32
    %96 = vector.broadcast %cst_29 : f32 to vector<2x1xf32>
    %97 = arith.subf %96, %93 : vector<2x1xf32>
    %98 = vector.broadcast %97 : vector<2x1xf32> to vector<2x32xf32>
    %99 = arith.mulf %98, %50 : vector<2x32xf32>
    %100 = arith.addf %95, %99 : vector<2x32xf32>
    %101 = vector.broadcast %93 : vector<2x1xf32> to vector<2x32xf32>
    %102 = arith.mulf %101, %87 : vector<2x32xf32>
    %cst_30 = arith.constant 1.000000e+00 : f32
    %103 = vector.broadcast %cst_30 : f32 to vector<2x1xf32>
    %104 = arith.subf %103, %93 : vector<2x1xf32>
    %105 = vector.broadcast %104 : vector<2x1xf32> to vector<2x32xf32>
    %106 = arith.mulf %105, %57 : vector<2x32xf32>
    %107 = arith.addf %102, %106 : vector<2x32xf32>
    %c2_i32_31 = arith.constant 2 : i32
    %c2_i32_32 = arith.constant 2 : i32
    %108 = arith.muli %c2_i32_31, %c2_i32_32 : i32
    %109 = arith.index_cast %108 : i32 to index
    %c0_33 = arith.constant 0 : index
    %110 = vector.load %arg11[%109, %c0_33] : memref<16x128xf32, #tpu.memory_space<vmem>>, vector<2x128xf32>
    %111 = arith.truncf %100 : vector<2x32xf32> to vector<2x32xbf16>
    %c0_34 = arith.constant 0 : index
    %c0_35 = arith.constant 0 : index
    %112 = vector.load %arg3[%c0_34, %c0_35] : memref<32x128xbf16, #tpu.memory_space<vmem>>, vector<32x128xbf16>
    %cst_36 = arith.constant dense<0.000000e+00> : vector<2x128xf32>
    %113 = tpu.matmul %111, %112, %cst_36 {dimension_numbers = #tpu.dot_dimension_numbers<[1], [0], [0], [1], [0, 0, 1, 1], [], []>} : vector<2x32xbf16>, vector<32x128xbf16>, vector<2x128xf32> -> vector<2x128xf32>
    %114 = arith.addf %110, %113 : vector<2x128xf32>
    %115 = vector.extract_strided_slice %114 {offsets = [0, 0], sizes = [2, 32], strides = [1, 1]} : vector<2x128xf32> to vector<2x32xf32>
    %116 = arith.negf %115 : vector<2x32xf32>
    %117 = math.exp %116 : vector<2x32xf32>
    %cst_37 = arith.constant 1.000000e+00 : f32
    %118 = vector.broadcast %cst_37 : f32 to vector<2x32xf32>
    %119 = arith.addf %118, %117 : vector<2x32xf32>
    %120 = arith.divf %118, %119 : vector<2x32xf32>
    %121 = vector.extract_strided_slice %114 {offsets = [0, 32], sizes = [2, 32], strides = [1, 1]} : vector<2x128xf32> to vector<2x32xf32>
    %122 = arith.negf %121 : vector<2x32xf32>
    %123 = math.exp %122 : vector<2x32xf32>
    %cst_38 = arith.constant 1.000000e+00 : f32
    %124 = vector.broadcast %cst_38 : f32 to vector<2x32xf32>
    %125 = arith.addf %124, %123 : vector<2x32xf32>
    %126 = arith.divf %124, %125 : vector<2x32xf32>
    %127 = vector.extract_strided_slice %114 {offsets = [0, 64], sizes = [2, 32], strides = [1, 1]} : vector<2x128xf32> to vector<2x32xf32>
    %128 = math.tanh %127 : vector<2x32xf32>
    %129 = vector.extract_strided_slice %114 {offsets = [0, 96], sizes = [2, 32], strides = [1, 1]} : vector<2x128xf32> to vector<2x32xf32>
    %130 = arith.negf %129 : vector<2x32xf32>
    %131 = math.exp %130 : vector<2x32xf32>
    %cst_39 = arith.constant 1.000000e+00 : f32
    %132 = vector.broadcast %cst_39 : f32 to vector<2x32xf32>
    %133 = arith.addf %132, %131 : vector<2x32xf32>
    %134 = arith.divf %132, %133 : vector<2x32xf32>
    %135 = arith.mulf %126, %107 : vector<2x32xf32>
    %136 = arith.mulf %120, %128 : vector<2x32xf32>
    %137 = arith.addf %135, %136 : vector<2x32xf32>
    %138 = math.tanh %137 : vector<2x32xf32>
    %139 = arith.mulf %134, %138 : vector<2x32xf32>
    %140 = arith.index_cast %108 : i32 to index
    %c0_40 = arith.constant 0 : index
    %141 = vector.load %arg12[%140, %c0_40] : memref<16x32xf32, #tpu.memory_space<vmem>>, vector<2x32xf32>
    tpu.vector_store %arg12[%140, %c0_40], %139 {strides = array<i32>} : memref<16x32xf32, #tpu.memory_space<vmem>>, vector<2x32xf32>,
    %142 = arith.index_cast %108 : i32 to index
    %c0_41 = arith.constant 0 : index
    %143 = vector.load %arg1[%142, %c0_41] : memref<16x1xf32, #tpu.memory_space<vmem>>, vector<2x1xf32>
    %144 = vector.broadcast %143 : vector<2x1xf32> to vector<2x32xf32>
    %145 = arith.mulf %144, %139 : vector<2x32xf32>
    %cst_42 = arith.constant 1.000000e+00 : f32
    %146 = vector.broadcast %cst_42 : f32 to vector<2x1xf32>
    %147 = arith.subf %146, %143 : vector<2x1xf32>
    %148 = vector.broadcast %147 : vector<2x1xf32> to vector<2x32xf32>
    %149 = arith.mulf %148, %100 : vector<2x32xf32>
    %150 = arith.addf %145, %149 : vector<2x32xf32>
    %151 = vector.broadcast %143 : vector<2x1xf32> to vector<2x32xf32>
    %152 = arith.mulf %151, %137 : vector<2x32xf32>
    %cst_43 = arith.constant 1.000000e+00 : f32
    %153 = vector.broadcast %cst_43 : f32 to vector<2x1xf32>
    %154 = arith.subf %153, %143 : vector<2x1xf32>
    %155 = vector.broadcast %154 : vector<2x1xf32> to vector<2x32xf32>
    %156 = arith.mulf %155, %107 : vector<2x32xf32>
    %157 = arith.addf %152, %156 : vector<2x32xf32>
    %c3_i32 = arith.constant 3 : i32
    %c2_i32_44 = arith.constant 2 : i32
    %158 = arith.muli %c3_i32, %c2_i32_44 : i32
    %159 = arith.index_cast %158 : i32 to index
    %c0_45 = arith.constant 0 : index
    %160 = vector.load %arg11[%159, %c0_45] : memref<16x128xf32, #tpu.memory_space<vmem>>, vector<2x128xf32>
    %161 = arith.truncf %150 : vector<2x32xf32> to vector<2x32xbf16>
    %c0_46 = arith.constant 0 : index
    %c0_47 = arith.constant 0 : index
    %162 = vector.load %arg3[%c0_46, %c0_47] : memref<32x128xbf16, #tpu.memory_space<vmem>>, vector<32x128xbf16>
    %cst_48 = arith.constant dense<0.000000e+00> : vector<2x128xf32>
    %163 = tpu.matmul %161, %162, %cst_48 {dimension_numbers = #tpu.dot_dimension_numbers<[1], [0], [0], [1], [0, 0, 1, 1], [], []>} : vector<2x32xbf16>, vector<32x128xbf16>, vector<2x128xf32> -> vector<2x128xf32>
    %164 = arith.addf %160, %163 : vector<2x128xf32>
    %165 = vector.extract_strided_slice %164 {offsets = [0, 0], sizes = [2, 32], strides = [1, 1]} : vector<2x128xf32> to vector<2x32xf32>
    %166 = arith.negf %165 : vector<2x32xf32>
    %167 = math.exp %166 : vector<2x32xf32>
    %cst_49 = arith.constant 1.000000e+00 : f32
    %168 = vector.broadcast %cst_49 : f32 to vector<2x32xf32>
    %169 = arith.addf %168, %167 : vector<2x32xf32>
    %170 = arith.divf %168, %169 : vector<2x32xf32>
    %171 = vector.extract_strided_slice %164 {offsets = [0, 32], sizes = [2, 32], strides = [1, 1]} : vector<2x128xf32> to vector<2x32xf32>
    %172 = arith.negf %171 : vector<2x32xf32>
    %173 = math.exp %172 : vector<2x32xf32>
    %cst_50 = arith.constant 1.000000e+00 : f32
    %174 = vector.broadcast %cst_50 : f32 to vector<2x32xf32>
    %175 = arith.addf %174, %173 : vector<2x32xf32>
    %176 = arith.divf %174, %175 : vector<2x32xf32>
    %177 = vector.extract_strided_slice %164 {offsets = [0, 64], sizes = [2, 32], strides = [1, 1]} : vector<2x128xf32> to vector<2x32xf32>
    %178 = math.tanh %177 : vector<2x32xf32>
    %179 = vector.extract_strided_slice %164 {offsets = [0, 96], sizes = [2, 32], strides = [1, 1]} : vector<2x128xf32> to vector<2x32xf32>
    %180 = arith.negf %179 : vector<2x32xf32>
    %181 = math.exp %180 : vector<2x32xf32>
    %cst_51 = arith.constant 1.000000e+00 : f32
    %182 = vector.broadcast %cst_51 : f32 to vector<2x32xf32>
    %183 = arith.addf %182, %181 : vector<2x32xf32>
    %184 = arith.divf %182, %183 : vector<2x32xf32>
    %185 = arith.mulf %176, %157 : vector<2x32xf32>
    %186 = arith.mulf %170, %178 : vector<2x32xf32>
    %187 = arith.addf %185, %186 : vector<2x32xf32>
    %188 = math.tanh %187 : vector<2x32xf32>
    %189 = arith.mulf %184, %188 : vector<2x32xf32>
    %190 = arith.index_cast %158 : i32 to index
    %c0_52 = arith.constant 0 : index
    %191 = vector.load %arg12[%190, %c0_52] : memref<16x32xf32, #tpu.memory_space<vmem>>, vector<2x32xf32>
    tpu.vector_store %arg12[%190, %c0_52], %189 {strides = array<i32>} : memref<16x32xf32, #tpu.memory_space<vmem>>, vector<2x32xf32>,
    %192 = arith.index_cast %158 : i32 to index
    %c0_53 = arith.constant 0 : index
    %193 = vector.load %arg1[%192, %c0_53] : memref<16x1xf32, #tpu.memory_space<vmem>>, vector<2x1xf32>
    %194 = vector.broadcast %193 : vector<2x1xf32> to vector<2x32xf32>
    %195 = arith.mulf %194, %189 : vector<2x32xf32>
    %cst_54 = arith.constant 1.000000e+00 : f32
    %196 = vector.broadcast %cst_54 : f32 to vector<2x1xf32>
    %197 = arith.subf %196, %193 : vector<2x1xf32>
    %198 = vector.broadcast %197 : vector<2x1xf32> to vector<2x32xf32>
    %199 = arith.mulf %198, %150 : vector<2x32xf32>
    %200 = arith.addf %195, %199 : vector<2x32xf32>
    %201 = vector.broadcast %193 : vector<2x1xf32> to vector<2x32xf32>
    %202 = arith.mulf %201, %187 : vector<2x32xf32>
    %cst_55 = arith.constant 1.000000e+00 : f32
    %203 = vector.broadcast %cst_55 : f32 to vector<2x1xf32>
    %204 = arith.subf %203, %193 : vector<2x1xf32>
    %205 = vector.broadcast %204 : vector<2x1xf32> to vector<2x32xf32>
    %206 = arith.mulf %205, %157 : vector<2x32xf32>
    %207 = arith.addf %202, %206 : vector<2x32xf32>
    %c4_i32 = arith.constant 4 : i32
    %c2_i32_56 = arith.constant 2 : i32
    %208 = arith.muli %c4_i32, %c2_i32_56 : i32
    %209 = arith.index_cast %208 : i32 to index
    %c0_57 = arith.constant 0 : index
    %210 = vector.load %arg11[%209, %c0_57] : memref<16x128xf32, #tpu.memory_space<vmem>>, vector<2x128xf32>
    %211 = arith.truncf %200 : vector<2x32xf32> to vector<2x32xbf16>
    %c0_58 = arith.constant 0 : index
    %c0_59 = arith.constant 0 : index
    %212 = vector.load %arg3[%c0_58, %c0_59] : memref<32x128xbf16, #tpu.memory_space<vmem>>, vector<32x128xbf16>
    %cst_60 = arith.constant dense<0.000000e+00> : vector<2x128xf32>
    %213 = tpu.matmul %211, %212, %cst_60 {dimension_numbers = #tpu.dot_dimension_numbers<[1], [0], [0], [1], [0, 0, 1, 1], [], []>} : vector<2x32xbf16>, vector<32x128xbf16>, vector<2x128xf32> -> vector<2x128xf32>
    %214 = arith.addf %210, %213 : vector<2x128xf32>
    %215 = vector.extract_strided_slice %214 {offsets = [0, 0], sizes = [2, 32], strides = [1, 1]} : vector<2x128xf32> to vector<2x32xf32>
    %216 = arith.negf %215 : vector<2x32xf32>
    %217 = math.exp %216 : vector<2x32xf32>
    %cst_61 = arith.constant 1.000000e+00 : f32
    %218 = vector.broadcast %cst_61 : f32 to vector<2x32xf32>
    %219 = arith.addf %218, %217 : vector<2x32xf32>
    %220 = arith.divf %218, %219 : vector<2x32xf32>
    %221 = vector.extract_strided_slice %214 {offsets = [0, 32], sizes = [2, 32], strides = [1, 1]} : vector<2x128xf32> to vector<2x32xf32>
    %222 = arith.negf %221 : vector<2x32xf32>
    %223 = math.exp %222 : vector<2x32xf32>
    %cst_62 = arith.constant 1.000000e+00 : f32
    %224 = vector.broadcast %cst_62 : f32 to vector<2x32xf32>
    %225 = arith.addf %224, %223 : vector<2x32xf32>
    %226 = arith.divf %224, %225 : vector<2x32xf32>
    %227 = vector.extract_strided_slice %214 {offsets = [0, 64], sizes = [2, 32], strides = [1, 1]} : vector<2x128xf32> to vector<2x32xf32>
    %228 = math.tanh %227 : vector<2x32xf32>
    %229 = vector.extract_strided_slice %214 {offsets = [0, 96], sizes = [2, 32], strides = [1, 1]} : vector<2x128xf32> to vector<2x32xf32>
    %230 = arith.negf %229 : vector<2x32xf32>
    %231 = math.exp %230 : vector<2x32xf32>
    %cst_63 = arith.constant 1.000000e+00 : f32
    %232 = vector.broadcast %cst_63 : f32 to vector<2x32xf32>
    %233 = arith.addf %232, %231 : vector<2x32xf32>
    %234 = arith.divf %232, %233 : vector<2x32xf32>
    %235 = arith.mulf %226, %207 : vector<2x32xf32>
    %236 = arith.mulf %220, %228 : vector<2x32xf32>
    %237 = arith.addf %235, %236 : vector<2x32xf32>
    %238 = math.tanh %237 : vector<2x32xf32>
    %239 = arith.mulf %234, %238 : vector<2x32xf32>
    %240 = arith.index_cast %208 : i32 to index
    %c0_64 = arith.constant 0 : index
    %241 = vector.load %arg12[%240, %c0_64] : memref<16x32xf32, #tpu.memory_space<vmem>>, vector<2x32xf32>
    tpu.vector_store %arg12[%240, %c0_64], %239 {strides = array<i32>} : memref<16x32xf32, #tpu.memory_space<vmem>>, vector<2x32xf32>,
    %242 = arith.index_cast %208 : i32 to index
    %c0_65 = arith.constant 0 : index
    %243 = vector.load %arg1[%242, %c0_65] : memref<16x1xf32, #tpu.memory_space<vmem>>, vector<2x1xf32>
    %244 = vector.broadcast %243 : vector<2x1xf32> to vector<2x32xf32>
    %245 = arith.mulf %244, %239 : vector<2x32xf32>
    %cst_66 = arith.constant 1.000000e+00 : f32
    %246 = vector.broadcast %cst_66 : f32 to vector<2x1xf32>
    %247 = arith.subf %246, %243 : vector<2x1xf32>
    %248 = vector.broadcast %247 : vector<2x1xf32> to vector<2x32xf32>
    %249 = arith.mulf %248, %200 : vector<2x32xf32>
    %250 = arith.addf %245, %249 : vector<2x32xf32>
    %251 = vector.broadcast %243 : vector<2x1xf32> to vector<2x32xf32>
    %252 = arith.mulf %251, %237 : vector<2x32xf32>
    %cst_67 = arith.constant 1.000000e+00 : f32
    %253 = vector.broadcast %cst_67 : f32 to vector<2x1xf32>
    %254 = arith.subf %253, %243 : vector<2x1xf32>
    %255 = vector.broadcast %254 : vector<2x1xf32> to vector<2x32xf32>
    %256 = arith.mulf %255, %207 : vector<2x32xf32>
    %257 = arith.addf %252, %256 : vector<2x32xf32>
    %c5_i32 = arith.constant 5 : i32
    %c2_i32_68 = arith.constant 2 : i32
    %258 = arith.muli %c5_i32, %c2_i32_68 : i32
    %259 = arith.index_cast %258 : i32 to index
    %c0_69 = arith.constant 0 : index
    %260 = vector.load %arg11[%259, %c0_69] : memref<16x128xf32, #tpu.memory_space<vmem>>, vector<2x128xf32>
    %261 = arith.truncf %250 : vector<2x32xf32> to vector<2x32xbf16>
    %c0_70 = arith.constant 0 : index
    %c0_71 = arith.constant 0 : index
    %262 = vector.load %arg3[%c0_70, %c0_71] : memref<32x128xbf16, #tpu.memory_space<vmem>>, vector<32x128xbf16>
    %cst_72 = arith.constant dense<0.000000e+00> : vector<2x128xf32>
    %263 = tpu.matmul %261, %262, %cst_72 {dimension_numbers = #tpu.dot_dimension_numbers<[1], [0], [0], [1], [0, 0, 1, 1], [], []>} : vector<2x32xbf16>, vector<32x128xbf16>, vector<2x128xf32> -> vector<2x128xf32>
    %264 = arith.addf %260, %263 : vector<2x128xf32>
    %265 = vector.extract_strided_slice %264 {offsets = [0, 0], sizes = [2, 32], strides = [1, 1]} : vector<2x128xf32> to vector<2x32xf32>
    %266 = arith.negf %265 : vector<2x32xf32>
    %267 = math.exp %266 : vector<2x32xf32>
    %cst_73 = arith.constant 1.000000e+00 : f32
    %268 = vector.broadcast %cst_73 : f32 to vector<2x32xf32>
    %269 = arith.addf %268, %267 : vector<2x32xf32>
    %270 = arith.divf %268, %269 : vector<2x32xf32>
    %271 = vector.extract_strided_slice %264 {offsets = [0, 32], sizes = [2, 32], strides = [1, 1]} : vector<2x128xf32> to vector<2x32xf32>
    %272 = arith.negf %271 : vector<2x32xf32>
    %273 = math.exp %272 : vector<2x32xf32>
    %cst_74 = arith.constant 1.000000e+00 : f32
    %274 = vector.broadcast %cst_74 : f32 to vector<2x32xf32>
    %275 = arith.addf %274, %273 : vector<2x32xf32>
    %276 = arith.divf %274, %275 : vector<2x32xf32>
    %277 = vector.extract_strided_slice %264 {offsets = [0, 64], sizes = [2, 32], strides = [1, 1]} : vector<2x128xf32> to vector<2x32xf32>
    %278 = math.tanh %277 : vector<2x32xf32>
    %279 = vector.extract_strided_slice %264 {offsets = [0, 96], sizes = [2, 32], strides = [1, 1]} : vector<2x128xf32> to vector<2x32xf32>
    %280 = arith.negf %279 : vector<2x32xf32>
    %281 = math.exp %280 : vector<2x32xf32>
    %cst_75 = arith.constant 1.000000e+00 : f32
    %282 = vector.broadcast %cst_75 : f32 to vector<2x32xf32>
    %283 = arith.addf %282, %281 : vector<2x32xf32>
    %284 = arith.divf %282, %283 : vector<2x32xf32>
    %285 = arith.mulf %276, %257 : vector<2x32xf32>
    %286 = arith.mulf %270, %278 : vector<2x32xf32>
    %287 = arith.addf %285, %286 : vector<2x32xf32>
    %288 = math.tanh %287 : vector<2x32xf32>
    %289 = arith.mulf %284, %288 : vector<2x32xf32>
    %290 = arith.index_cast %258 : i32 to index
    %c0_76 = arith.constant 0 : index
    %291 = vector.load %arg12[%290, %c0_76] : memref<16x32xf32, #tpu.memory_space<vmem>>, vector<2x32xf32>
    tpu.vector_store %arg12[%290, %c0_76], %289 {strides = array<i32>} : memref<16x32xf32, #tpu.memory_space<vmem>>, vector<2x32xf32>,
    %292 = arith.index_cast %258 : i32 to index
    %c0_77 = arith.constant 0 : index
    %293 = vector.load %arg1[%292, %c0_77] : memref<16x1xf32, #tpu.memory_space<vmem>>, vector<2x1xf32>
    %294 = vector.broadcast %293 : vector<2x1xf32> to vector<2x32xf32>
    %295 = arith.mulf %294, %289 : vector<2x32xf32>
    %cst_78 = arith.constant 1.000000e+00 : f32
    %296 = vector.broadcast %cst_78 : f32 to vector<2x1xf32>
    %297 = arith.subf %296, %293 : vector<2x1xf32>
    %298 = vector.broadcast %297 : vector<2x1xf32> to vector<2x32xf32>
    %299 = arith.mulf %298, %250 : vector<2x32xf32>
    %300 = arith.addf %295, %299 : vector<2x32xf32>
    %301 = vector.broadcast %293 : vector<2x1xf32> to vector<2x32xf32>
    %302 = arith.mulf %301, %287 : vector<2x32xf32>
    %cst_79 = arith.constant 1.000000e+00 : f32
    %303 = vector.broadcast %cst_79 : f32 to vector<2x1xf32>
    %304 = arith.subf %303, %293 : vector<2x1xf32>
    %305 = vector.broadcast %304 : vector<2x1xf32> to vector<2x32xf32>
    %306 = arith.mulf %305, %257 : vector<2x32xf32>
    %307 = arith.addf %302, %306 : vector<2x32xf32>
    %c6_i32 = arith.constant 6 : i32
    %c2_i32_80 = arith.constant 2 : i32
    %308 = arith.muli %c6_i32, %c2_i32_80 : i32
    %309 = arith.index_cast %308 : i32 to index
    %c0_81 = arith.constant 0 : index
    %310 = vector.load %arg11[%309, %c0_81] : memref<16x128xf32, #tpu.memory_space<vmem>>, vector<2x128xf32>
    %311 = arith.truncf %300 : vector<2x32xf32> to vector<2x32xbf16>
    %c0_82 = arith.constant 0 : index
    %c0_83 = arith.constant 0 : index
    %312 = vector.load %arg3[%c0_82, %c0_83] : memref<32x128xbf16, #tpu.memory_space<vmem>>, vector<32x128xbf16>
    %cst_84 = arith.constant dense<0.000000e+00> : vector<2x128xf32>
    %313 = tpu.matmul %311, %312, %cst_84 {dimension_numbers = #tpu.dot_dimension_numbers<[1], [0], [0], [1], [0, 0, 1, 1], [], []>} : vector<2x32xbf16>, vector<32x128xbf16>, vector<2x128xf32> -> vector<2x128xf32>
    %314 = arith.addf %310, %313 : vector<2x128xf32>
    %315 = vector.extract_strided_slice %314 {offsets = [0, 0], sizes = [2, 32], strides = [1, 1]} : vector<2x128xf32> to vector<2x32xf32>
    %316 = arith.negf %315 : vector<2x32xf32>
    %317 = math.exp %316 : vector<2x32xf32>
    %cst_85 = arith.constant 1.000000e+00 : f32
    %318 = vector.broadcast %cst_85 : f32 to vector<2x32xf32>
    %319 = arith.addf %318, %317 : vector<2x32xf32>
    %320 = arith.divf %318, %319 : vector<2x32xf32>
    %321 = vector.extract_strided_slice %314 {offsets = [0, 32], sizes = [2, 32], strides = [1, 1]} : vector<2x128xf32> to vector<2x32xf32>
    %322 = arith.negf %321 : vector<2x32xf32>
    %323 = math.exp %322 : vector<2x32xf32>
    %cst_86 = arith.constant 1.000000e+00 : f32
    %324 = vector.broadcast %cst_86 : f32 to vector<2x32xf32>
    %325 = arith.addf %324, %323 : vector<2x32xf32>
    %326 = arith.divf %324, %325 : vector<2x32xf32>
    %327 = vector.extract_strided_slice %314 {offsets = [0, 64], sizes = [2, 32], strides = [1, 1]} : vector<2x128xf32> to vector<2x32xf32>
    %328 = math.tanh %327 : vector<2x32xf32>
    %329 = vector.extract_strided_slice %314 {offsets = [0, 96], sizes = [2, 32], strides = [1, 1]} : vector<2x128xf32> to vector<2x32xf32>
    %330 = arith.negf %329 : vector<2x32xf32>
    %331 = math.exp %330 : vector<2x32xf32>
    %cst_87 = arith.constant 1.000000e+00 : f32
    %332 = vector.broadcast %cst_87 : f32 to vector<2x32xf32>
    %333 = arith.addf %332, %331 : vector<2x32xf32>
    %334 = arith.divf %332, %333 : vector<2x32xf32>
    %335 = arith.mulf %326, %307 : vector<2x32xf32>
    %336 = arith.mulf %320, %328 : vector<2x32xf32>
    %337 = arith.addf %335, %336 : vector<2x32xf32>
    %338 = math.tanh %337 : vector<2x32xf32>
    %339 = arith.mulf %334, %338 : vector<2x32xf32>
    %340 = arith.index_cast %308 : i32 to index
    %c0_88 = arith.constant 0 : index
    %341 = vector.load %arg12[%340, %c0_88] : memref<16x32xf32, #tpu.memory_space<vmem>>, vector<2x32xf32>
    tpu.vector_store %arg12[%340, %c0_88], %339 {strides = array<i32>} : memref<16x32xf32, #tpu.memory_space<vmem>>, vector<2x32xf32>,
    %342 = arith.index_cast %308 : i32 to index
    %c0_89 = arith.constant 0 : index
    %343 = vector.load %arg1[%342, %c0_89] : memref<16x1xf32, #tpu.memory_space<vmem>>, vector<2x1xf32>
    %344 = vector.broadcast %343 : vector<2x1xf32> to vector<2x32xf32>
    %345 = arith.mulf %344, %339 : vector<2x32xf32>
    %cst_90 = arith.constant 1.000000e+00 : f32
    %346 = vector.broadcast %cst_90 : f32 to vector<2x1xf32>
    %347 = arith.subf %346, %343 : vector<2x1xf32>
    %348 = vector.broadcast %347 : vector<2x1xf32> to vector<2x32xf32>
    %349 = arith.mulf %348, %300 : vector<2x32xf32>
    %350 = arith.addf %345, %349 : vector<2x32xf32>
    %351 = vector.broadcast %343 : vector<2x1xf32> to vector<2x32xf32>
    %352 = arith.mulf %351, %337 : vector<2x32xf32>
    %cst_91 = arith.constant 1.000000e+00 : f32
    %353 = vector.broadcast %cst_91 : f32 to vector<2x1xf32>
    %354 = arith.subf %353, %343 : vector<2x1xf32>
    %355 = vector.broadcast %354 : vector<2x1xf32> to vector<2x32xf32>
    %356 = arith.mulf %355, %307 : vector<2x32xf32>
    %357 = arith.addf %352, %356 : vector<2x32xf32>
    %c7_i32 = arith.constant 7 : i32
    %c2_i32_92 = arith.constant 2 : i32
    %358 = arith.muli %c7_i32, %c2_i32_92 : i32
    %359 = arith.index_cast %358 : i32 to index
    %c0_93 = arith.constant 0 : index
    %360 = vector.load %arg11[%359, %c0_93] : memref<16x128xf32, #tpu.memory_space<vmem>>, vector<2x128xf32>
    %361 = arith.truncf %350 : vector<2x32xf32> to vector<2x32xbf16>
    %c0_94 = arith.constant 0 : index
    %c0_95 = arith.constant 0 : index
    %362 = vector.load %arg3[%c0_94, %c0_95] : memref<32x128xbf16, #tpu.memory_space<vmem>>, vector<32x128xbf16>
    %cst_96 = arith.constant dense<0.000000e+00> : vector<2x128xf32>
    %363 = tpu.matmul %361, %362, %cst_96 {dimension_numbers = #tpu.dot_dimension_numbers<[1], [0], [0], [1], [0, 0, 1, 1], [], []>} : vector<2x32xbf16>, vector<32x128xbf16>, vector<2x128xf32> -> vector<2x128xf32>
    %364 = arith.addf %360, %363 : vector<2x128xf32>
    %365 = vector.extract_strided_slice %364 {offsets = [0, 0], sizes = [2, 32], strides = [1, 1]} : vector<2x128xf32> to vector<2x32xf32>
    %366 = arith.negf %365 : vector<2x32xf32>
    %367 = math.exp %366 : vector<2x32xf32>
    %cst_97 = arith.constant 1.000000e+00 : f32
    %368 = vector.broadcast %cst_97 : f32 to vector<2x32xf32>
    %369 = arith.addf %368, %367 : vector<2x32xf32>
    %370 = arith.divf %368, %369 : vector<2x32xf32>
    %371 = vector.extract_strided_slice %364 {offsets = [0, 32], sizes = [2, 32], strides = [1, 1]} : vector<2x128xf32> to vector<2x32xf32>
    %372 = arith.negf %371 : vector<2x32xf32>
    %373 = math.exp %372 : vector<2x32xf32>
    %cst_98 = arith.constant 1.000000e+00 : f32
    %374 = vector.broadcast %cst_98 : f32 to vector<2x32xf32>
    %375 = arith.addf %374, %373 : vector<2x32xf32>
    %376 = arith.divf %374, %375 : vector<2x32xf32>
    %377 = vector.extract_strided_slice %364 {offsets = [0, 64], sizes = [2, 32], strides = [1, 1]} : vector<2x128xf32> to vector<2x32xf32>
    %378 = math.tanh %377 : vector<2x32xf32>
    %379 = vector.extract_strided_slice %364 {offsets = [0, 96], sizes = [2, 32], strides = [1, 1]} : vector<2x128xf32> to vector<2x32xf32>
    %380 = arith.negf %379 : vector<2x32xf32>
    %381 = math.exp %380 : vector<2x32xf32>
    %cst_99 = arith.constant 1.000000e+00 : f32
    %382 = vector.broadcast %cst_99 : f32 to vector<2x32xf32>
    %383 = arith.addf %382, %381 : vector<2x32xf32>
    %384 = arith.divf %382, %383 : vector<2x32xf32>
    %385 = arith.mulf %376, %357 : vector<2x32xf32>
    %386 = arith.mulf %370, %378 : vector<2x32xf32>
    %387 = arith.addf %385, %386 : vector<2x32xf32>
    %388 = math.tanh %387 : vector<2x32xf32>
    %389 = arith.mulf %384, %388 : vector<2x32xf32>
    %390 = arith.index_cast %358 : i32 to index
    %c0_100 = arith.constant 0 : index
    %391 = vector.load %arg12[%390, %c0_100] : memref<16x32xf32, #tpu.memory_space<vmem>>, vector<2x32xf32>
    tpu.vector_store %arg12[%390, %c0_100], %389 {strides = array<i32>} : memref<16x32xf32, #tpu.memory_space<vmem>>, vector<2x32xf32>,
    %392 = arith.index_cast %358 : i32 to index
    %c0_101 = arith.constant 0 : index
    %393 = vector.load %arg1[%392, %c0_101] : memref<16x1xf32, #tpu.memory_space<vmem>>, vector<2x1xf32>
    %394 = vector.broadcast %393 : vector<2x1xf32> to vector<2x32xf32>
    %395 = arith.mulf %394, %389 : vector<2x32xf32>
    %cst_102 = arith.constant 1.000000e+00 : f32
    %396 = vector.broadcast %cst_102 : f32 to vector<2x1xf32>
    %397 = arith.subf %396, %393 : vector<2x1xf32>
    %398 = vector.broadcast %397 : vector<2x1xf32> to vector<2x32xf32>
    %399 = arith.mulf %398, %350 : vector<2x32xf32>
    %400 = arith.addf %395, %399 : vector<2x32xf32>
    %401 = vector.broadcast %393 : vector<2x1xf32> to vector<2x32xf32>
    %402 = arith.mulf %401, %387 : vector<2x32xf32>
    %cst_103 = arith.constant 1.000000e+00 : f32
    %403 = vector.broadcast %cst_103 : f32 to vector<2x1xf32>
    %404 = arith.subf %403, %393 : vector<2x1xf32>
    %405 = vector.broadcast %404 : vector<2x1xf32> to vector<2x32xf32>
    %406 = arith.mulf %405, %357 : vector<2x32xf32>
    %407 = arith.addf %402, %406 : vector<2x32xf32>
    %c8_i32 = arith.constant 8 : i32
    %c0_104 = arith.constant 0 : index
    %c0_105 = arith.constant 0 : index
    %408 = vector.load %arg9[%c0_104, %c0_105] : memref<4x32xf32, #tpu.memory_space<vmem>>, vector<2x32xf32>
    tpu.vector_store %arg9[%c0_104, %c0_105], %400 {strides = array<i32>} : memref<4x32xf32, #tpu.memory_space<vmem>>, vector<2x32xf32>,
    %c0_106 = arith.constant 0 : index
    %c0_107 = arith.constant 0 : index
    %409 = vector.load %arg10[%c0_106, %c0_107] : memref<4x32xf32, #tpu.memory_space<vmem>>, vector<2x32xf32>
    tpu.vector_store %arg10[%c0_106, %c0_107], %407 {strides = array<i32>} : memref<4x32xf32, #tpu.memory_space<vmem>>, vector<2x32xf32>,
    %c0_108 = arith.constant 0 : index
    %c0_109 = arith.constant 0 : index
    %410 = vector.load %arg12[%c0_108, %c0_109] : memref<16x32xf32, #tpu.memory_space<vmem>>, vector<16x32xf32>
    %411 = arith.truncf %410 : vector<16x32xf32> to vector<16x32xbf16>
    %c0_110 = arith.constant 0 : index
    %c0_111 = arith.constant 0 : index
    %412 = vector.load %arg5[%c0_110, %c0_111] : memref<32x128xbf16, #tpu.memory_space<vmem>>, vector<32x128xbf16>
    %cst_112 = arith.constant dense<0.000000e+00> : vector<16x128xf32>
    %413 = tpu.matmul %411, %412, %cst_112 {dimension_numbers = #tpu.dot_dimension_numbers<[1], [0], [0], [1], [0, 0, 1, 1], [], []>} : vector<16x32xbf16>, vector<32x128xbf16>, vector<16x128xf32> -> vector<16x128xf32>
    %c0_113 = arith.constant 0 : index
    %c0_114 = arith.constant 0 : index
    %414 = vector.load %arg7[%c0_113, %c0_114] : memref<1x128xf32, #tpu.memory_space<vmem>>, vector<1x128xf32>
    %415 = vector.broadcast %414 : vector<1x128xf32> to vector<16x128xf32>
    %416 = arith.addf %413, %415 : vector<16x128xf32>
    %c0_115 = arith.constant 0 : index
    %c0_116 = arith.constant 0 : index
    %417 = vector.load %arg11[%c0_115, %c0_116] : memref<16x128xf32, #tpu.memory_space<vmem>>, vector<16x128xf32>
    tpu.vector_store %arg11[%c0_115, %c0_116], %416 {strides = array<i32>} : memref<16x128xf32, #tpu.memory_space<vmem>>, vector<16x128xf32>,
    %cst_117 = arith.constant 0.000000e+00 : f32
    %418 = vector.broadcast %cst_117 : f32 to vector<2x32xf32>
    %c0_i32_118 = arith.constant 0 : i32
    %c2_i32_119 = arith.constant 2 : i32
    %419 = arith.muli %c0_i32_118, %c2_i32_119 : i32
    %420 = arith.index_cast %419 : i32 to index
    %c0_120 = arith.constant 0 : index
    %421 = vector.load %arg11[%420, %c0_120] : memref<16x128xf32, #tpu.memory_space<vmem>>, vector<2x128xf32>
    %422 = arith.truncf %418 : vector<2x32xf32> to vector<2x32xbf16>
    %c0_121 = arith.constant 0 : index
    %c0_122 = arith.constant 0 : index
    %423 = vector.load %arg6[%c0_121, %c0_122] : memref<32x128xbf16, #tpu.memory_space<vmem>>, vector<32x128xbf16>
    %cst_123 = arith.constant dense<0.000000e+00> : vector<2x128xf32>
    %424 = tpu.matmul %422, %423, %cst_123 {dimension_numbers = #tpu.dot_dimension_numbers<[1], [0], [0], [1], [0, 0, 1, 1], [], []>} : vector<2x32xbf16>, vector<32x128xbf16>, vector<2x128xf32> -> vector<2x128xf32>
    %425 = arith.addf %421, %424 : vector<2x128xf32>
    %426 = vector.extract_strided_slice %425 {offsets = [0, 0], sizes = [2, 32], strides = [1, 1]} : vector<2x128xf32> to vector<2x32xf32>
    %427 = arith.negf %426 : vector<2x32xf32>
    %428 = math.exp %427 : vector<2x32xf32>
    %cst_124 = arith.constant 1.000000e+00 : f32
    %429 = vector.broadcast %cst_124 : f32 to vector<2x32xf32>
    %430 = arith.addf %429, %428 : vector<2x32xf32>
    %431 = arith.divf %429, %430 : vector<2x32xf32>
    %432 = vector.extract_strided_slice %425 {offsets = [0, 32], sizes = [2, 32], strides = [1, 1]} : vector<2x128xf32> to vector<2x32xf32>
    %433 = arith.negf %432 : vector<2x32xf32>
    %434 = math.exp %433 : vector<2x32xf32>
    %cst_125 = arith.constant 1.000000e+00 : f32
    %435 = vector.broadcast %cst_125 : f32 to vector<2x32xf32>
    %436 = arith.addf %435, %434 : vector<2x32xf32>
    %437 = arith.divf %435, %436 : vector<2x32xf32>
    %438 = vector.extract_strided_slice %425 {offsets = [0, 64], sizes = [2, 32], strides = [1, 1]} : vector<2x128xf32> to vector<2x32xf32>
    %439 = math.tanh %438 : vector<2x32xf32>
    %440 = vector.extract_strided_slice %425 {offsets = [0, 96], sizes = [2, 32], strides = [1, 1]} : vector<2x128xf32> to vector<2x32xf32>
    %441 = arith.negf %440 : vector<2x32xf32>
    %442 = math.exp %441 : vector<2x32xf32>
    %cst_126 = arith.constant 1.000000e+00 : f32
    %443 = vector.broadcast %cst_126 : f32 to vector<2x32xf32>
    %444 = arith.addf %443, %442 : vector<2x32xf32>
    %445 = arith.divf %443, %444 : vector<2x32xf32>
    %446 = arith.mulf %437, %418 : vector<2x32xf32>
    %447 = arith.mulf %431, %439 : vector<2x32xf32>
    %448 = arith.addf %446, %447 : vector<2x32xf32>
    %449 = math.tanh %448 : vector<2x32xf32>
    %450 = arith.mulf %445, %449 : vector<2x32xf32>
    %451 = arith.index_cast %419 : i32 to index
    %c0_127 = arith.constant 0 : index
    %452 = vector.load %arg8[%451, %c0_127] : memref<16x32xf32, #tpu.memory_space<vmem>>, vector<2x32xf32>
    tpu.vector_store %arg8[%451, %c0_127], %450 {strides = array<i32>} : memref<16x32xf32, #tpu.memory_space<vmem>>, vector<2x32xf32>,
    %453 = arith.index_cast %419 : i32 to index
    %c0_128 = arith.constant 0 : index
    %454 = vector.load %arg1[%453, %c0_128] : memref<16x1xf32, #tpu.memory_space<vmem>>, vector<2x1xf32>
    %455 = vector.broadcast %454 : vector<2x1xf32> to vector<2x32xf32>
    %456 = arith.mulf %455, %450 : vector<2x32xf32>
    %cst_129 = arith.constant 1.000000e+00 : f32
    %457 = vector.broadcast %cst_129 : f32 to vector<2x1xf32>
    %458 = arith.subf %457, %454 : vector<2x1xf32>
    %459 = vector.broadcast %458 : vector<2x1xf32> to vector<2x32xf32>
    %460 = arith.mulf %459, %418 : vector<2x32xf32>
    %461 = arith.addf %456, %460 : vector<2x32xf32>
    %462 = vector.broadcast %454 : vector<2x1xf32> to vector<2x32xf32>
    %463 = arith.mulf %462, %448 : vector<2x32xf32>
    %cst_130 = arith.constant 1.000000e+00 : f32
    %464 = vector.broadcast %cst_130 : f32 to vector<2x1xf32>
    %465 = arith.subf %464, %454 : vector<2x1xf32>
    %466 = vector.broadcast %465 : vector<2x1xf32> to vector<2x32xf32>
    %467 = arith.mulf %466, %418 : vector<2x32xf32>
    %468 = arith.addf %463, %467 : vector<2x32xf32>
    %c1_i32_131 = arith.constant 1 : i32
    %c2_i32_132 = arith.constant 2 : i32
    %469 = arith.muli %c1_i32_131, %c2_i32_132 : i32
    %470 = arith.index_cast %469 : i32 to index
    %c0_133 = arith.constant 0 : index
    %471 = vector.load %arg11[%470, %c0_133] : memref<16x128xf32, #tpu.memory_space<vmem>>, vector<2x128xf32>
    %472 = arith.truncf %461 : vector<2x32xf32> to vector<2x32xbf16>
    %c0_134 = arith.constant 0 : index
    %c0_135 = arith.constant 0 : index
    %473 = vector.load %arg6[%c0_134, %c0_135] : memref<32x128xbf16, #tpu.memory_space<vmem>>, vector<32x128xbf16>
    %cst_136 = arith.constant dense<0.000000e+00> : vector<2x128xf32>
    %474 = tpu.matmul %472, %473, %cst_136 {dimension_numbers = #tpu.dot_dimension_numbers<[1], [0], [0], [1], [0, 0, 1, 1], [], []>} : vector<2x32xbf16>, vector<32x128xbf16>, vector<2x128xf32> -> vector<2x128xf32>
    %475 = arith.addf %471, %474 : vector<2x128xf32>
    %476 = vector.extract_strided_slice %475 {offsets = [0, 0], sizes = [2, 32], strides = [1, 1]} : vector<2x128xf32> to vector<2x32xf32>
    %477 = arith.negf %476 : vector<2x32xf32>
    %478 = math.exp %477 : vector<2x32xf32>
    %cst_137 = arith.constant 1.000000e+00 : f32
    %479 = vector.broadcast %cst_137 : f32 to vector<2x32xf32>
    %480 = arith.addf %479, %478 : vector<2x32xf32>
    %481 = arith.divf %479, %480 : vector<2x32xf32>
    %482 = vector.extract_strided_slice %475 {offsets = [0, 32], sizes = [2, 32], strides = [1, 1]} : vector<2x128xf32> to vector<2x32xf32>
    %483 = arith.negf %482 : vector<2x32xf32>
    %484 = math.exp %483 : vector<2x32xf32>
    %cst_138 = arith.constant 1.000000e+00 : f32
    %485 = vector.broadcast %cst_138 : f32 to vector<2x32xf32>
    %486 = arith.addf %485, %484 : vector<2x32xf32>
    %487 = arith.divf %485, %486 : vector<2x32xf32>
    %488 = vector.extract_strided_slice %475 {offsets = [0, 64], sizes = [2, 32], strides = [1, 1]} : vector<2x128xf32> to vector<2x32xf32>
    %489 = math.tanh %488 : vector<2x32xf32>
    %490 = vector.extract_strided_slice %475 {offsets = [0, 96], sizes = [2, 32], strides = [1, 1]} : vector<2x128xf32> to vector<2x32xf32>
    %491 = arith.negf %490 : vector<2x32xf32>
    %492 = math.exp %491 : vector<2x32xf32>
    %cst_139 = arith.constant 1.000000e+00 : f32
    %493 = vector.broadcast %cst_139 : f32 to vector<2x32xf32>
    %494 = arith.addf %493, %492 : vector<2x32xf32>
    %495 = arith.divf %493, %494 : vector<2x32xf32>
    %496 = arith.mulf %487, %468 : vector<2x32xf32>
    %497 = arith.mulf %481, %489 : vector<2x32xf32>
    %498 = arith.addf %496, %497 : vector<2x32xf32>
    %499 = math.tanh %498 : vector<2x32xf32>
    %500 = arith.mulf %495, %499 : vector<2x32xf32>
    %501 = arith.index_cast %469 : i32 to index
    %c0_140 = arith.constant 0 : index
    %502 = vector.load %arg8[%501, %c0_140] : memref<16x32xf32, #tpu.memory_space<vmem>>, vector<2x32xf32>
    tpu.vector_store %arg8[%501, %c0_140], %500 {strides = array<i32>} : memref<16x32xf32, #tpu.memory_space<vmem>>, vector<2x32xf32>,
    %503 = arith.index_cast %469 : i32 to index
    %c0_141 = arith.constant 0 : index
    %504 = vector.load %arg1[%503, %c0_141] : memref<16x1xf32, #tpu.memory_space<vmem>>, vector<2x1xf32>
    %505 = vector.broadcast %504 : vector<2x1xf32> to vector<2x32xf32>
    %506 = arith.mulf %505, %500 : vector<2x32xf32>
    %cst_142 = arith.constant 1.000000e+00 : f32
    %507 = vector.broadcast %cst_142 : f32 to vector<2x1xf32>
    %508 = arith.subf %507, %504 : vector<2x1xf32>
    %509 = vector.broadcast %508 : vector<2x1xf32> to vector<2x32xf32>
    %510 = arith.mulf %509, %461 : vector<2x32xf32>
    %511 = arith.addf %506, %510 : vector<2x32xf32>
    %512 = vector.broadcast %504 : vector<2x1xf32> to vector<2x32xf32>
    %513 = arith.mulf %512, %498 : vector<2x32xf32>
    %cst_143 = arith.constant 1.000000e+00 : f32
    %514 = vector.broadcast %cst_143 : f32 to vector<2x1xf32>
    %515 = arith.subf %514, %504 : vector<2x1xf32>
    %516 = vector.broadcast %515 : vector<2x1xf32> to vector<2x32xf32>
    %517 = arith.mulf %516, %468 : vector<2x32xf32>
    %518 = arith.addf %513, %517 : vector<2x32xf32>
    %c2_i32_144 = arith.constant 2 : i32
    %c2_i32_145 = arith.constant 2 : i32
    %519 = arith.muli %c2_i32_144, %c2_i32_145 : i32
    %520 = arith.index_cast %519 : i32 to index
    %c0_146 = arith.constant 0 : index
    %521 = vector.load %arg11[%520, %c0_146] : memref<16x128xf32, #tpu.memory_space<vmem>>, vector<2x128xf32>
    %522 = arith.truncf %511 : vector<2x32xf32> to vector<2x32xbf16>
    %c0_147 = arith.constant 0 : index
    %c0_148 = arith.constant 0 : index
    %523 = vector.load %arg6[%c0_147, %c0_148] : memref<32x128xbf16, #tpu.memory_space<vmem>>, vector<32x128xbf16>
    %cst_149 = arith.constant dense<0.000000e+00> : vector<2x128xf32>
    %524 = tpu.matmul %522, %523, %cst_149 {dimension_numbers = #tpu.dot_dimension_numbers<[1], [0], [0], [1], [0, 0, 1, 1], [], []>} : vector<2x32xbf16>, vector<32x128xbf16>, vector<2x128xf32> -> vector<2x128xf32>
    %525 = arith.addf %521, %524 : vector<2x128xf32>
    %526 = vector.extract_strided_slice %525 {offsets = [0, 0], sizes = [2, 32], strides = [1, 1]} : vector<2x128xf32> to vector<2x32xf32>
    %527 = arith.negf %526 : vector<2x32xf32>
    %528 = math.exp %527 : vector<2x32xf32>
    %cst_150 = arith.constant 1.000000e+00 : f32
    %529 = vector.broadcast %cst_150 : f32 to vector<2x32xf32>
    %530 = arith.addf %529, %528 : vector<2x32xf32>
    %531 = arith.divf %529, %530 : vector<2x32xf32>
    %532 = vector.extract_strided_slice %525 {offsets = [0, 32], sizes = [2, 32], strides = [1, 1]} : vector<2x128xf32> to vector<2x32xf32>
    %533 = arith.negf %532 : vector<2x32xf32>
    %534 = math.exp %533 : vector<2x32xf32>
    %cst_151 = arith.constant 1.000000e+00 : f32
    %535 = vector.broadcast %cst_151 : f32 to vector<2x32xf32>
    %536 = arith.addf %535, %534 : vector<2x32xf32>
    %537 = arith.divf %535, %536 : vector<2x32xf32>
    %538 = vector.extract_strided_slice %525 {offsets = [0, 64], sizes = [2, 32], strides = [1, 1]} : vector<2x128xf32> to vector<2x32xf32>
    %539 = math.tanh %538 : vector<2x32xf32>
    %540 = vector.extract_strided_slice %525 {offsets = [0, 96], sizes = [2, 32], strides = [1, 1]} : vector<2x128xf32> to vector<2x32xf32>
    %541 = arith.negf %540 : vector<2x32xf32>
    %542 = math.exp %541 : vector<2x32xf32>
    %cst_152 = arith.constant 1.000000e+00 : f32
    %543 = vector.broadcast %cst_152 : f32 to vector<2x32xf32>
    %544 = arith.addf %543, %542 : vector<2x32xf32>
    %545 = arith.divf %543, %544 : vector<2x32xf32>
    %546 = arith.mulf %537, %518 : vector<2x32xf32>
    %547 = arith.mulf %531, %539 : vector<2x32xf32>
    %548 = arith.addf %546, %547 : vector<2x32xf32>
    %549 = math.tanh %548 : vector<2x32xf32>
    %550 = arith.mulf %545, %549 : vector<2x32xf32>
    %551 = arith.index_cast %519 : i32 to index
    %c0_153 = arith.constant 0 : index
    %552 = vector.load %arg8[%551, %c0_153] : memref<16x32xf32, #tpu.memory_space<vmem>>, vector<2x32xf32>
    tpu.vector_store %arg8[%551, %c0_153], %550 {strides = array<i32>} : memref<16x32xf32, #tpu.memory_space<vmem>>, vector<2x32xf32>,
    %553 = arith.index_cast %519 : i32 to index
    %c0_154 = arith.constant 0 : index
    %554 = vector.load %arg1[%553, %c0_154] : memref<16x1xf32, #tpu.memory_space<vmem>>, vector<2x1xf32>
    %555 = vector.broadcast %554 : vector<2x1xf32> to vector<2x32xf32>
    %556 = arith.mulf %555, %550 : vector<2x32xf32>
    %cst_155 = arith.constant 1.000000e+00 : f32
    %557 = vector.broadcast %cst_155 : f32 to vector<2x1xf32>
    %558 = arith.subf %557, %554 : vector<2x1xf32>
    %559 = vector.broadcast %558 : vector<2x1xf32> to vector<2x32xf32>
    %560 = arith.mulf %559, %511 : vector<2x32xf32>
    %561 = arith.addf %556, %560 : vector<2x32xf32>
    %562 = vector.broadcast %554 : vector<2x1xf32> to vector<2x32xf32>
    %563 = arith.mulf %562, %548 : vector<2x32xf32>
    %cst_156 = arith.constant 1.000000e+00 : f32
    %564 = vector.broadcast %cst_156 : f32 to vector<2x1xf32>
    %565 = arith.subf %564, %554 : vector<2x1xf32>
    %566 = vector.broadcast %565 : vector<2x1xf32> to vector<2x32xf32>
    %567 = arith.mulf %566, %518 : vector<2x32xf32>
    %568 = arith.addf %563, %567 : vector<2x32xf32>
    %c3_i32_157 = arith.constant 3 : i32
    %c2_i32_158 = arith.constant 2 : i32
    %569 = arith.muli %c3_i32_157, %c2_i32_158 : i32
    %570 = arith.index_cast %569 : i32 to index
    %c0_159 = arith.constant 0 : index
    %571 = vector.load %arg11[%570, %c0_159] : memref<16x128xf32, #tpu.memory_space<vmem>>, vector<2x128xf32>
    %572 = arith.truncf %561 : vector<2x32xf32> to vector<2x32xbf16>
    %c0_160 = arith.constant 0 : index
    %c0_161 = arith.constant 0 : index
    %573 = vector.load %arg6[%c0_160, %c0_161] : memref<32x128xbf16, #tpu.memory_space<vmem>>, vector<32x128xbf16>
    %cst_162 = arith.constant dense<0.000000e+00> : vector<2x128xf32>
    %574 = tpu.matmul %572, %573, %cst_162 {dimension_numbers = #tpu.dot_dimension_numbers<[1], [0], [0], [1], [0, 0, 1, 1], [], []>} : vector<2x32xbf16>, vector<32x128xbf16>, vector<2x128xf32> -> vector<2x128xf32>
    %575 = arith.addf %571, %574 : vector<2x128xf32>
    %576 = vector.extract_strided_slice %575 {offsets = [0, 0], sizes = [2, 32], strides = [1, 1]} : vector<2x128xf32> to vector<2x32xf32>
    %577 = arith.negf %576 : vector<2x32xf32>
    %578 = math.exp %577 : vector<2x32xf32>
    %cst_163 = arith.constant 1.000000e+00 : f32
    %579 = vector.broadcast %cst_163 : f32 to vector<2x32xf32>
    %580 = arith.addf %579, %578 : vector<2x32xf32>
    %581 = arith.divf %579, %580 : vector<2x32xf32>
    %582 = vector.extract_strided_slice %575 {offsets = [0, 32], sizes = [2, 32], strides = [1, 1]} : vector<2x128xf32> to vector<2x32xf32>
    %583 = arith.negf %582 : vector<2x32xf32>
    %584 = math.exp %583 : vector<2x32xf32>
    %cst_164 = arith.constant 1.000000e+00 : f32
    %585 = vector.broadcast %cst_164 : f32 to vector<2x32xf32>
    %586 = arith.addf %585, %584 : vector<2x32xf32>
    %587 = arith.divf %585, %586 : vector<2x32xf32>
    %588 = vector.extract_strided_slice %575 {offsets = [0, 64], sizes = [2, 32], strides = [1, 1]} : vector<2x128xf32> to vector<2x32xf32>
    %589 = math.tanh %588 : vector<2x32xf32>
    %590 = vector.extract_strided_slice %575 {offsets = [0, 96], sizes = [2, 32], strides = [1, 1]} : vector<2x128xf32> to vector<2x32xf32>
    %591 = arith.negf %590 : vector<2x32xf32>
    %592 = math.exp %591 : vector<2x32xf32>
    %cst_165 = arith.constant 1.000000e+00 : f32
    %593 = vector.broadcast %cst_165 : f32 to vector<2x32xf32>
    %594 = arith.addf %593, %592 : vector<2x32xf32>
    %595 = arith.divf %593, %594 : vector<2x32xf32>
    %596 = arith.mulf %587, %568 : vector<2x32xf32>
    %597 = arith.mulf %581, %589 : vector<2x32xf32>
    %598 = arith.addf %596, %597 : vector<2x32xf32>
    %599 = math.tanh %598 : vector<2x32xf32>
    %600 = arith.mulf %595, %599 : vector<2x32xf32>
    %601 = arith.index_cast %569 : i32 to index
    %c0_166 = arith.constant 0 : index
    %602 = vector.load %arg8[%601, %c0_166] : memref<16x32xf32, #tpu.memory_space<vmem>>, vector<2x32xf32>
    tpu.vector_store %arg8[%601, %c0_166], %600 {strides = array<i32>} : memref<16x32xf32, #tpu.memory_space<vmem>>, vector<2x32xf32>,
    %603 = arith.index_cast %569 : i32 to index
    %c0_167 = arith.constant 0 : index
    %604 = vector.load %arg1[%603, %c0_167] : memref<16x1xf32, #tpu.memory_space<vmem>>, vector<2x1xf32>
    %605 = vector.broadcast %604 : vector<2x1xf32> to vector<2x32xf32>
    %606 = arith.mulf %605, %600 : vector<2x32xf32>
    %cst_168 = arith.constant 1.000000e+00 : f32
    %607 = vector.broadcast %cst_168 : f32 to vector<2x1xf32>
    %608 = arith.subf %607, %604 : vector<2x1xf32>
    %609 = vector.broadcast %608 : vector<2x1xf32> to vector<2x32xf32>
    %610 = arith.mulf %609, %561 : vector<2x32xf32>
    %611 = arith.addf %606, %610 : vector<2x32xf32>
    %612 = vector.broadcast %604 : vector<2x1xf32> to vector<2x32xf32>
    %613 = arith.mulf %612, %598 : vector<2x32xf32>
    %cst_169 = arith.constant 1.000000e+00 : f32
    %614 = vector.broadcast %cst_169 : f32 to vector<2x1xf32>
    %615 = arith.subf %614, %604 : vector<2x1xf32>
    %616 = vector.broadcast %615 : vector<2x1xf32> to vector<2x32xf32>
    %617 = arith.mulf %616, %568 : vector<2x32xf32>
    %618 = arith.addf %613, %617 : vector<2x32xf32>
    %c4_i32_170 = arith.constant 4 : i32
    %c2_i32_171 = arith.constant 2 : i32
    %619 = arith.muli %c4_i32_170, %c2_i32_171 : i32
    %620 = arith.index_cast %619 : i32 to index
    %c0_172 = arith.constant 0 : index
    %621 = vector.load %arg11[%620, %c0_172] : memref<16x128xf32, #tpu.memory_space<vmem>>, vector<2x128xf32>
    %622 = arith.truncf %611 : vector<2x32xf32> to vector<2x32xbf16>
    %c0_173 = arith.constant 0 : index
    %c0_174 = arith.constant 0 : index
    %623 = vector.load %arg6[%c0_173, %c0_174] : memref<32x128xbf16, #tpu.memory_space<vmem>>, vector<32x128xbf16>
    %cst_175 = arith.constant dense<0.000000e+00> : vector<2x128xf32>
    %624 = tpu.matmul %622, %623, %cst_175 {dimension_numbers = #tpu.dot_dimension_numbers<[1], [0], [0], [1], [0, 0, 1, 1], [], []>} : vector<2x32xbf16>, vector<32x128xbf16>, vector<2x128xf32> -> vector<2x128xf32>
    %625 = arith.addf %621, %624 : vector<2x128xf32>
    %626 = vector.extract_strided_slice %625 {offsets = [0, 0], sizes = [2, 32], strides = [1, 1]} : vector<2x128xf32> to vector<2x32xf32>
    %627 = arith.negf %626 : vector<2x32xf32>
    %628 = math.exp %627 : vector<2x32xf32>
    %cst_176 = arith.constant 1.000000e+00 : f32
    %629 = vector.broadcast %cst_176 : f32 to vector<2x32xf32>
    %630 = arith.addf %629, %628 : vector<2x32xf32>
    %631 = arith.divf %629, %630 : vector<2x32xf32>
    %632 = vector.extract_strided_slice %625 {offsets = [0, 32], sizes = [2, 32], strides = [1, 1]} : vector<2x128xf32> to vector<2x32xf32>
    %633 = arith.negf %632 : vector<2x32xf32>
    %634 = math.exp %633 : vector<2x32xf32>
    %cst_177 = arith.constant 1.000000e+00 : f32
    %635 = vector.broadcast %cst_177 : f32 to vector<2x32xf32>
    %636 = arith.addf %635, %634 : vector<2x32xf32>
    %637 = arith.divf %635, %636 : vector<2x32xf32>
    %638 = vector.extract_strided_slice %625 {offsets = [0, 64], sizes = [2, 32], strides = [1, 1]} : vector<2x128xf32> to vector<2x32xf32>
    %639 = math.tanh %638 : vector<2x32xf32>
    %640 = vector.extract_strided_slice %625 {offsets = [0, 96], sizes = [2, 32], strides = [1, 1]} : vector<2x128xf32> to vector<2x32xf32>
    %641 = arith.negf %640 : vector<2x32xf32>
    %642 = math.exp %641 : vector<2x32xf32>
    %cst_178 = arith.constant 1.000000e+00 : f32
    %643 = vector.broadcast %cst_178 : f32 to vector<2x32xf32>
    %644 = arith.addf %643, %642 : vector<2x32xf32>
    %645 = arith.divf %643, %644 : vector<2x32xf32>
    %646 = arith.mulf %637, %618 : vector<2x32xf32>
    %647 = arith.mulf %631, %639 : vector<2x32xf32>
    %648 = arith.addf %646, %647 : vector<2x32xf32>
    %649 = math.tanh %648 : vector<2x32xf32>
    %650 = arith.mulf %645, %649 : vector<2x32xf32>
    %651 = arith.index_cast %619 : i32 to index
    %c0_179 = arith.constant 0 : index
    %652 = vector.load %arg8[%651, %c0_179] : memref<16x32xf32, #tpu.memory_space<vmem>>, vector<2x32xf32>
    tpu.vector_store %arg8[%651, %c0_179], %650 {strides = array<i32>} : memref<16x32xf32, #tpu.memory_space<vmem>>, vector<2x32xf32>,
    %653 = arith.index_cast %619 : i32 to index
    %c0_180 = arith.constant 0 : index
    %654 = vector.load %arg1[%653, %c0_180] : memref<16x1xf32, #tpu.memory_space<vmem>>, vector<2x1xf32>
    %655 = vector.broadcast %654 : vector<2x1xf32> to vector<2x32xf32>
    %656 = arith.mulf %655, %650 : vector<2x32xf32>
    %cst_181 = arith.constant 1.000000e+00 : f32
    %657 = vector.broadcast %cst_181 : f32 to vector<2x1xf32>
    %658 = arith.subf %657, %654 : vector<2x1xf32>
    %659 = vector.broadcast %658 : vector<2x1xf32> to vector<2x32xf32>
    %660 = arith.mulf %659, %611 : vector<2x32xf32>
    %661 = arith.addf %656, %660 : vector<2x32xf32>
    %662 = vector.broadcast %654 : vector<2x1xf32> to vector<2x32xf32>
    %663 = arith.mulf %662, %648 : vector<2x32xf32>
    %cst_182 = arith.constant 1.000000e+00 : f32
    %664 = vector.broadcast %cst_182 : f32 to vector<2x1xf32>
    %665 = arith.subf %664, %654 : vector<2x1xf32>
    %666 = vector.broadcast %665 : vector<2x1xf32> to vector<2x32xf32>
    %667 = arith.mulf %666, %618 : vector<2x32xf32>
    %668 = arith.addf %663, %667 : vector<2x32xf32>
    %c5_i32_183 = arith.constant 5 : i32
    %c2_i32_184 = arith.constant 2 : i32
    %669 = arith.muli %c5_i32_183, %c2_i32_184 : i32
    %670 = arith.index_cast %669 : i32 to index
    %c0_185 = arith.constant 0 : index
    %671 = vector.load %arg11[%670, %c0_185] : memref<16x128xf32, #tpu.memory_space<vmem>>, vector<2x128xf32>
    %672 = arith.truncf %661 : vector<2x32xf32> to vector<2x32xbf16>
    %c0_186 = arith.constant 0 : index
    %c0_187 = arith.constant 0 : index
    %673 = vector.load %arg6[%c0_186, %c0_187] : memref<32x128xbf16, #tpu.memory_space<vmem>>, vector<32x128xbf16>
    %cst_188 = arith.constant dense<0.000000e+00> : vector<2x128xf32>
    %674 = tpu.matmul %672, %673, %cst_188 {dimension_numbers = #tpu.dot_dimension_numbers<[1], [0], [0], [1], [0, 0, 1, 1], [], []>} : vector<2x32xbf16>, vector<32x128xbf16>, vector<2x128xf32> -> vector<2x128xf32>
    %675 = arith.addf %671, %674 : vector<2x128xf32>
    %676 = vector.extract_strided_slice %675 {offsets = [0, 0], sizes = [2, 32], strides = [1, 1]} : vector<2x128xf32> to vector<2x32xf32>
    %677 = arith.negf %676 : vector<2x32xf32>
    %678 = math.exp %677 : vector<2x32xf32>
    %cst_189 = arith.constant 1.000000e+00 : f32
    %679 = vector.broadcast %cst_189 : f32 to vector<2x32xf32>
    %680 = arith.addf %679, %678 : vector<2x32xf32>
    %681 = arith.divf %679, %680 : vector<2x32xf32>
    %682 = vector.extract_strided_slice %675 {offsets = [0, 32], sizes = [2, 32], strides = [1, 1]} : vector<2x128xf32> to vector<2x32xf32>
    %683 = arith.negf %682 : vector<2x32xf32>
    %684 = math.exp %683 : vector<2x32xf32>
    %cst_190 = arith.constant 1.000000e+00 : f32
    %685 = vector.broadcast %cst_190 : f32 to vector<2x32xf32>
    %686 = arith.addf %685, %684 : vector<2x32xf32>
    %687 = arith.divf %685, %686 : vector<2x32xf32>
    %688 = vector.extract_strided_slice %675 {offsets = [0, 64], sizes = [2, 32], strides = [1, 1]} : vector<2x128xf32> to vector<2x32xf32>
    %689 = math.tanh %688 : vector<2x32xf32>
    %690 = vector.extract_strided_slice %675 {offsets = [0, 96], sizes = [2, 32], strides = [1, 1]} : vector<2x128xf32> to vector<2x32xf32>
    %691 = arith.negf %690 : vector<2x32xf32>
    %692 = math.exp %691 : vector<2x32xf32>
    %cst_191 = arith.constant 1.000000e+00 : f32
    %693 = vector.broadcast %cst_191 : f32 to vector<2x32xf32>
    %694 = arith.addf %693, %692 : vector<2x32xf32>
    %695 = arith.divf %693, %694 : vector<2x32xf32>
    %696 = arith.mulf %687, %668 : vector<2x32xf32>
    %697 = arith.mulf %681, %689 : vector<2x32xf32>
    %698 = arith.addf %696, %697 : vector<2x32xf32>
    %699 = math.tanh %698 : vector<2x32xf32>
    %700 = arith.mulf %695, %699 : vector<2x32xf32>
    %701 = arith.index_cast %669 : i32 to index
    %c0_192 = arith.constant 0 : index
    %702 = vector.load %arg8[%701, %c0_192] : memref<16x32xf32, #tpu.memory_space<vmem>>, vector<2x32xf32>
    tpu.vector_store %arg8[%701, %c0_192], %700 {strides = array<i32>} : memref<16x32xf32, #tpu.memory_space<vmem>>, vector<2x32xf32>,
    %703 = arith.index_cast %669 : i32 to index
    %c0_193 = arith.constant 0 : index
    %704 = vector.load %arg1[%703, %c0_193] : memref<16x1xf32, #tpu.memory_space<vmem>>, vector<2x1xf32>
    %705 = vector.broadcast %704 : vector<2x1xf32> to vector<2x32xf32>
    %706 = arith.mulf %705, %700 : vector<2x32xf32>
    %cst_194 = arith.constant 1.000000e+00 : f32
    %707 = vector.broadcast %cst_194 : f32 to vector<2x1xf32>
    %708 = arith.subf %707, %704 : vector<2x1xf32>
    %709 = vector.broadcast %708 : vector<2x1xf32> to vector<2x32xf32>
    %710 = arith.mulf %709, %661 : vector<2x32xf32>
    %711 = arith.addf %706, %710 : vector<2x32xf32>
    %712 = vector.broadcast %704 : vector<2x1xf32> to vector<2x32xf32>
    %713 = arith.mulf %712, %698 : vector<2x32xf32>
    %cst_195 = arith.constant 1.000000e+00 : f32
    %714 = vector.broadcast %cst_195 : f32 to vector<2x1xf32>
    %715 = arith.subf %714, %704 : vector<2x1xf32>
    %716 = vector.broadcast %715 : vector<2x1xf32> to vector<2x32xf32>
    %717 = arith.mulf %716, %668 : vector<2x32xf32>
    %718 = arith.addf %713, %717 : vector<2x32xf32>
    %c6_i32_196 = arith.constant 6 : i32
    %c2_i32_197 = arith.constant 2 : i32
    %719 = arith.muli %c6_i32_196, %c2_i32_197 : i32
    %720 = arith.index_cast %719 : i32 to index
    %c0_198 = arith.constant 0 : index
    %721 = vector.load %arg11[%720, %c0_198] : memref<16x128xf32, #tpu.memory_space<vmem>>, vector<2x128xf32>
    %722 = arith.truncf %711 : vector<2x32xf32> to vector<2x32xbf16>
    %c0_199 = arith.constant 0 : index
    %c0_200 = arith.constant 0 : index
    %723 = vector.load %arg6[%c0_199, %c0_200] : memref<32x128xbf16, #tpu.memory_space<vmem>>, vector<32x128xbf16>
    %cst_201 = arith.constant dense<0.000000e+00> : vector<2x128xf32>
    %724 = tpu.matmul %722, %723, %cst_201 {dimension_numbers = #tpu.dot_dimension_numbers<[1], [0], [0], [1], [0, 0, 1, 1], [], []>} : vector<2x32xbf16>, vector<32x128xbf16>, vector<2x128xf32> -> vector<2x128xf32>
    %725 = arith.addf %721, %724 : vector<2x128xf32>
    %726 = vector.extract_strided_slice %725 {offsets = [0, 0], sizes = [2, 32], strides = [1, 1]} : vector<2x128xf32> to vector<2x32xf32>
    %727 = arith.negf %726 : vector<2x32xf32>
    %728 = math.exp %727 : vector<2x32xf32>
    %cst_202 = arith.constant 1.000000e+00 : f32
    %729 = vector.broadcast %cst_202 : f32 to vector<2x32xf32>
    %730 = arith.addf %729, %728 : vector<2x32xf32>
    %731 = arith.divf %729, %730 : vector<2x32xf32>
    %732 = vector.extract_strided_slice %725 {offsets = [0, 32], sizes = [2, 32], strides = [1, 1]} : vector<2x128xf32> to vector<2x32xf32>
    %733 = arith.negf %732 : vector<2x32xf32>
    %734 = math.exp %733 : vector<2x32xf32>
    %cst_203 = arith.constant 1.000000e+00 : f32
    %735 = vector.broadcast %cst_203 : f32 to vector<2x32xf32>
    %736 = arith.addf %735, %734 : vector<2x32xf32>
    %737 = arith.divf %735, %736 : vector<2x32xf32>
    %738 = vector.extract_strided_slice %725 {offsets = [0, 64], sizes = [2, 32], strides = [1, 1]} : vector<2x128xf32> to vector<2x32xf32>
    %739 = math.tanh %738 : vector<2x32xf32>
    %740 = vector.extract_strided_slice %725 {offsets = [0, 96], sizes = [2, 32], strides = [1, 1]} : vector<2x128xf32> to vector<2x32xf32>
    %741 = arith.negf %740 : vector<2x32xf32>
    %742 = math.exp %741 : vector<2x32xf32>
    %cst_204 = arith.constant 1.000000e+00 : f32
    %743 = vector.broadcast %cst_204 : f32 to vector<2x32xf32>
    %744 = arith.addf %743, %742 : vector<2x32xf32>
    %745 = arith.divf %743, %744 : vector<2x32xf32>
    %746 = arith.mulf %737, %718 : vector<2x32xf32>
    %747 = arith.mulf %731, %739 : vector<2x32xf32>
    %748 = arith.addf %746, %747 : vector<2x32xf32>
    %749 = math.tanh %748 : vector<2x32xf32>
    %750 = arith.mulf %745, %749 : vector<2x32xf32>
    %751 = arith.index_cast %719 : i32 to index
    %c0_205 = arith.constant 0 : index
    %752 = vector.load %arg8[%751, %c0_205] : memref<16x32xf32, #tpu.memory_space<vmem>>, vector<2x32xf32>
    tpu.vector_store %arg8[%751, %c0_205], %750 {strides = array<i32>} : memref<16x32xf32, #tpu.memory_space<vmem>>, vector<2x32xf32>,
    %753 = arith.index_cast %719 : i32 to index
    %c0_206 = arith.constant 0 : index
    %754 = vector.load %arg1[%753, %c0_206] : memref<16x1xf32, #tpu.memory_space<vmem>>, vector<2x1xf32>
    %755 = vector.broadcast %754 : vector<2x1xf32> to vector<2x32xf32>
    %756 = arith.mulf %755, %750 : vector<2x32xf32>
    %cst_207 = arith.constant 1.000000e+00 : f32
    %757 = vector.broadcast %cst_207 : f32 to vector<2x1xf32>
    %758 = arith.subf %757, %754 : vector<2x1xf32>
    %759 = vector.broadcast %758 : vector<2x1xf32> to vector<2x32xf32>
    %760 = arith.mulf %759, %711 : vector<2x32xf32>
    %761 = arith.addf %756, %760 : vector<2x32xf32>
    %762 = vector.broadcast %754 : vector<2x1xf32> to vector<2x32xf32>
    %763 = arith.mulf %762, %748 : vector<2x32xf32>
    %cst_208 = arith.constant 1.000000e+00 : f32
    %764 = vector.broadcast %cst_208 : f32 to vector<2x1xf32>
    %765 = arith.subf %764, %754 : vector<2x1xf32>
    %766 = vector.broadcast %765 : vector<2x1xf32> to vector<2x32xf32>
    %767 = arith.mulf %766, %718 : vector<2x32xf32>
    %768 = arith.addf %763, %767 : vector<2x32xf32>
    %c7_i32_209 = arith.constant 7 : i32
    %c2_i32_210 = arith.constant 2 : i32
    %769 = arith.muli %c7_i32_209, %c2_i32_210 : i32
    %770 = arith.index_cast %769 : i32 to index
    %c0_211 = arith.constant 0 : index
    %771 = vector.load %arg11[%770, %c0_211] : memref<16x128xf32, #tpu.memory_space<vmem>>, vector<2x128xf32>
    %772 = arith.truncf %761 : vector<2x32xf32> to vector<2x32xbf16>
    %c0_212 = arith.constant 0 : index
    %c0_213 = arith.constant 0 : index
    %773 = vector.load %arg6[%c0_212, %c0_213] : memref<32x128xbf16, #tpu.memory_space<vmem>>, vector<32x128xbf16>
    %cst_214 = arith.constant dense<0.000000e+00> : vector<2x128xf32>
    %774 = tpu.matmul %772, %773, %cst_214 {dimension_numbers = #tpu.dot_dimension_numbers<[1], [0], [0], [1], [0, 0, 1, 1], [], []>} : vector<2x32xbf16>, vector<32x128xbf16>, vector<2x128xf32> -> vector<2x128xf32>
    %775 = arith.addf %771, %774 : vector<2x128xf32>
    %776 = vector.extract_strided_slice %775 {offsets = [0, 0], sizes = [2, 32], strides = [1, 1]} : vector<2x128xf32> to vector<2x32xf32>
    %777 = arith.negf %776 : vector<2x32xf32>
    %778 = math.exp %777 : vector<2x32xf32>
    %cst_215 = arith.constant 1.000000e+00 : f32
    %779 = vector.broadcast %cst_215 : f32 to vector<2x32xf32>
    %780 = arith.addf %779, %778 : vector<2x32xf32>
    %781 = arith.divf %779, %780 : vector<2x32xf32>
    %782 = vector.extract_strided_slice %775 {offsets = [0, 32], sizes = [2, 32], strides = [1, 1]} : vector<2x128xf32> to vector<2x32xf32>
    %783 = arith.negf %782 : vector<2x32xf32>
    %784 = math.exp %783 : vector<2x32xf32>
    %cst_216 = arith.constant 1.000000e+00 : f32
    %785 = vector.broadcast %cst_216 : f32 to vector<2x32xf32>
    %786 = arith.addf %785, %784 : vector<2x32xf32>
    %787 = arith.divf %785, %786 : vector<2x32xf32>
    %788 = vector.extract_strided_slice %775 {offsets = [0, 64], sizes = [2, 32], strides = [1, 1]} : vector<2x128xf32> to vector<2x32xf32>
    %789 = math.tanh %788 : vector<2x32xf32>
    %790 = vector.extract_strided_slice %775 {offsets = [0, 96], sizes = [2, 32], strides = [1, 1]} : vector<2x128xf32> to vector<2x32xf32>
    %791 = arith.negf %790 : vector<2x32xf32>
    %792 = math.exp %791 : vector<2x32xf32>
    %cst_217 = arith.constant 1.000000e+00 : f32
    %793 = vector.broadcast %cst_217 : f32 to vector<2x32xf32>
    %794 = arith.addf %793, %792 : vector<2x32xf32>
    %795 = arith.divf %793, %794 : vector<2x32xf32>
    %796 = arith.mulf %787, %768 : vector<2x32xf32>
    %797 = arith.mulf %781, %789 : vector<2x32xf32>
    %798 = arith.addf %796, %797 : vector<2x32xf32>
    %799 = math.tanh %798 : vector<2x32xf32>
    %800 = arith.mulf %795, %799 : vector<2x32xf32>
    %801 = arith.index_cast %769 : i32 to index
    %c0_218 = arith.constant 0 : index
    %802 = vector.load %arg8[%801, %c0_218] : memref<16x32xf32, #tpu.memory_space<vmem>>, vector<2x32xf32>
    tpu.vector_store %arg8[%801, %c0_218], %800 {strides = array<i32>} : memref<16x32xf32, #tpu.memory_space<vmem>>, vector<2x32xf32>,
    %803 = arith.index_cast %769 : i32 to index
    %c0_219 = arith.constant 0 : index
    %804 = vector.load %arg1[%803, %c0_219] : memref<16x1xf32, #tpu.memory_space<vmem>>, vector<2x1xf32>
    %805 = vector.broadcast %804 : vector<2x1xf32> to vector<2x32xf32>
    %806 = arith.mulf %805, %800 : vector<2x32xf32>
    %cst_220 = arith.constant 1.000000e+00 : f32
    %807 = vector.broadcast %cst_220 : f32 to vector<2x1xf32>
    %808 = arith.subf %807, %804 : vector<2x1xf32>
    %809 = vector.broadcast %808 : vector<2x1xf32> to vector<2x32xf32>
    %810 = arith.mulf %809, %761 : vector<2x32xf32>
    %811 = arith.addf %806, %810 : vector<2x32xf32>
    %812 = vector.broadcast %804 : vector<2x1xf32> to vector<2x32xf32>
    %813 = arith.mulf %812, %798 : vector<2x32xf32>
    %cst_221 = arith.constant 1.000000e+00 : f32
    %814 = vector.broadcast %cst_221 : f32 to vector<2x1xf32>
    %815 = arith.subf %814, %804 : vector<2x1xf32>
    %816 = vector.broadcast %815 : vector<2x1xf32> to vector<2x32xf32>
    %817 = arith.mulf %816, %768 : vector<2x32xf32>
    %818 = arith.addf %813, %817 : vector<2x32xf32>
    %c8_i32_222 = arith.constant 8 : i32
    %c2 = arith.constant 2 : index
    %c0_223 = arith.constant 0 : index
    %819 = vector.load %arg9[%c2, %c0_223] : memref<4x32xf32, #tpu.memory_space<vmem>>, vector<2x32xf32>
    tpu.vector_store %arg9[%c2, %c0_223], %811 {strides = array<i32>} : memref<4x32xf32, #tpu.memory_space<vmem>>, vector<2x32xf32>,
    %c2_224 = arith.constant 2 : index
    %c0_225 = arith.constant 0 : index
    %820 = vector.load %arg10[%c2_224, %c0_225] : memref<4x32xf32, #tpu.memory_space<vmem>>, vector<2x32xf32>
    tpu.vector_store %arg10[%c2_224, %c0_225], %818 {strides = array<i32>} : memref<4x32xf32, #tpu.memory_space<vmem>>, vector<2x32xf32>,
    %c0_226 = arith.constant 0 : index
    %c0_227 = arith.constant 0 : index
    %821 = vector.load %arg8[%c0_226, %c0_227] : memref<16x32xf32, #tpu.memory_space<vmem>>, vector<16x32xf32>
    %c0_228 = arith.constant 0 : index
    %c0_229 = arith.constant 0 : index
    %822 = vector.load %arg1[%c0_228, %c0_229] : memref<16x1xf32, #tpu.memory_space<vmem>>, vector<16x1xf32>
    %823 = vector.broadcast %822 : vector<16x1xf32> to vector<16x32xf32>
    %824 = arith.mulf %821, %823 : vector<16x32xf32>
    %c0_230 = arith.constant 0 : index
    %c0_231 = arith.constant 0 : index
    %825 = vector.load %arg8[%c0_230, %c0_231] : memref<16x32xf32, #tpu.memory_space<vmem>>, vector<16x32xf32>
    tpu.vector_store %arg8[%c0_230, %c0_231], %824 {strides = array<i32>} : memref<16x32xf32, #tpu.memory_space<vmem>>, vector<16x32xf32>,
    return
  }
}

</mosaic_0001>

<llo_original>
// kernel: neg.1
$region0: #{neg.1}
  #allocation0 [shape = 's32[1]{0}', space=sflag, size = 0x4, scoped, tag = 'scoped memory for neg.1']
  %s0 = inlined_call_operand.vmem [shape: s32[2], index: 0, kind: input, shape index: {}]
  %s1 = inlined_call_operand.vmem [shape: s32[2], index: 1, kind: output, shape index: {}]
  %v2 = vld [vmem:[%s0] sm:$0x1]
  %3 = xla_tuple %v2
  %4 = xla_tuple %3
  %v5 = vsub.s32 0, %v2
  %6 = xla_tuple %v5
  %7 = vst [vmem:[%s1] sm:$0x1] %v5

// kernel: lstm_encoder_forward.1
$region0: #{lstm_encoder_forward.1}
  #allocation0 [shape = 'u32[]', space=smem, size = 0x4, offset = 0x4, fixed_abs, tag = 'smem constant byte address 0x4 - core index']
  #allocation1 [shape = 'u32[144,128]{1,0:T(1,128)}', space=vmem, size = 0x12000, scoped, tag = 'internal scratch']
  #allocation2 [shape = 'f32[16,128]{1,0:T(8,128)}', space=vmem, size = 0x2000, scoped, tag = 'scratch operand']
  #allocation3 [shape = 'f32[16,32]{1,0:T(8,128)}', space=vmem, size = 0x2000, scoped, tag = 'scratch operand']
  %s0 = inlined_call_operand.vmem [shape: bf16[16,16], index: 0, kind: input, shape index: {}]
  %s1 = inlined_call_operand.vmem [shape: f32[16,1], index: 1, kind: input, shape index: {}]
  %s2 = inlined_call_operand.vmem [shape: bf16[16,128], index: 2, kind: input, shape index: {}]
  %s3 = inlined_call_operand.vmem [shape: bf16[32,128], index: 3, kind: input, shape index: {}]
  %s4 = inlined_call_operand.vmem [shape: f32[1,128], index: 4, kind: input, shape index: {}]
  %s5 = inlined_call_operand.vmem [shape: bf16[32,128], index: 5, kind: input, shape index: {}]
  %s6 = inlined_call_operand.vmem [shape: bf16[32,128], index: 6, kind: input, shape index: {}]
  %s7 = inlined_call_operand.vmem [shape: f32[1,128], index: 7, kind: input, shape index: {}]
  %s8 = inlined_call_operand.vmem [shape: f32[16,32], index: 8, kind: output, shape index: {0}]
  %s9 = inlined_call_operand.vmem [shape: f32[4,32], index: 9, kind: output, shape index: {1}]
  %s10 = inlined_call_operand.vmem [shape: f32[4,32], index: 10, kind: output, shape index: {2}]
  %11 = xla_tuple %s8, %s9, %s10
  %s12 = sld [smem:[#allocation0]]
  $region58: #{lstm_encoder_forward.1} parent=0
    _
  %s14 = ssub.s32 1, %s12
  %s15 = scalar_select 0, %s14, %s12
  // Predicated region
  $region2: #{lstm_encoder_forward.1} parent=0 // pred_check
    _
  $region3: #{lstm_encoder_forward.1} parent=0 // pred_check_branch
    %17 = sbr.rel (0) target = $region5
  $region4: #{lstm_encoder_forward.1} parent=0 // pred_region
    _
  $region5: #{lstm_encoder_forward.1} parent=0 // pred_fallthru
    _
  // Predicated region
  $region6: #{lstm_encoder_forward.1} parent=0 // pred_check
    _
  $region7: #{lstm_encoder_forward.1} parent=0 // pred_check_branch
    %19 = sbr.rel (0) target = $region9
  $region8: #{lstm_encoder_forward.1} parent=0 // pred_region
    _
  $region9: #{lstm_encoder_forward.1} parent=0 // pred_fallthru
    _
  // Predicated region
  $region10: #{lstm_encoder_forward.1} parent=0 // pred_check
    _
  $region11: #{lstm_encoder_forward.1} parent=0 // pred_check_branch
    %21 = sbr.rel (0) target = $region13
  $region12: #{lstm_encoder_forward.1} parent=0 // pred_region
    _
  $region13: #{lstm_encoder_forward.1} parent=0 // pred_fallthru
    _
  // Predicated region
  $region14: #{lstm_encoder_forward.1} parent=0 // pred_check
    _
  $region15: #{lstm_encoder_forward.1} parent=0 // pred_check_branch
    %23 = sbr.rel (0) target = $region17
  $region16: #{lstm_encoder_forward.1} parent=0 // pred_region
    _
  $region17: #{lstm_encoder_forward.1} parent=0 // pred_fallthru
    _
  // Predicated region
  $region18: #{lstm_encoder_forward.1} parent=0 // pred_check
    _
  $region19: #{lstm_encoder_forward.1} parent=0 // pred_check_branch
    %25 = sbr.rel (0) target = $region21
  $region20: #{lstm_encoder_forward.1} parent=0 // pred_region
    _
  $region21: #{lstm_encoder_forward.1} parent=0 // pred_fallthru
    _
  // Predicated region
  $region22: #{lstm_encoder_forward.1} parent=0 // pred_check
    _
  $region23: #{lstm_encoder_forward.1} parent=0 // pred_check_branch
    %27 = sbr.rel (0) target = $region25
  $region24: #{lstm_encoder_forward.1} parent=0 // pred_region
    _
  $region25: #{lstm_encoder_forward.1} parent=0 // pred_fallthru
    _
  // Predicated region
  $region26: #{lstm_encoder_forward.1} parent=0 // pred_check
    _
  $region27: #{lstm_encoder_forward.1} parent=0 // pred_check_branch
    %29 = sbr.rel (0) target = $region29
  $region28: #{lstm_encoder_forward.1} parent=0 // pred_region
    _
  $region29: #{lstm_encoder_forward.1} parent=0 // pred_fallthru
    _
  // Predicated region
  $region30: #{lstm_encoder_forward.1} parent=0 // pred_check
    _
  $region31: #{lstm_encoder_forward.1} parent=0 // pred_check_branch
    %31 = sbr.rel (0) target = $region33
  $region32: #{lstm_encoder_forward.1} parent=0 // pred_region
    _
  $region33: #{lstm_encoder_forward.1} parent=0 // pred_fallthru
    _
  %v33 = vld [vmem:[%s0] sm:$0xf]
  %v34 = vld [vmem:[%s0 + $0x4] sm:$0xf]
  %v35 = vld [vmem:[%s2] sm:$0xf]
  %v36 = vld [vmem:[%s2 + $0x4] sm:$0xf]
  %v37 = vld [vmem:[%s4] sm:$0x1]
  %v39 = vlaneseq
  %v40 = vshrl.u32 %v39, 7
  %v41 = vsub.s32 0, %v40
  %v42 = vrot.slane %v37, %v41
  %v46 = vunpack.c.l.b16 %v33
  %v47 = vunpack.c.l.b16 %v34
  %v48 = vpack.c.b16 %v47, %v46
  %v51 = vunpack.c.l.b16 %v35
  %v52 = vunpack.c.l.b16 %v36
  %v53 = vpack.c.b16 %v52, %v51
  %vm55 = vcmask 130048
  %v57 = vsel %vm55, %v48, 0
  %59 = vmatprep.subr.bf16.mxu0 0
  %60 = vmatpush1.bf16.msra.mxu0 %v53
  %61 = vmatprep.subr.bf16.mxu0 0
  %62 = vmatpush1.bf16.msra.mxu0 0
  %63 = vmatprep.subr.bf16.mxu0 0
  %64 = vmatpush1.bf16.msra.mxu0 0
  %65 = vmatprep.subr.bf16.mxu0 0
  %66 = vmatpush1.bf16.msra.mxu0 0
  %67 = vmatprep.subr.bf16.mxu0 0
  %68 = vmatpush1.bf16.msra.mxu0 0
  %69 = vmatprep.subr.bf16.mxu0 0
  %70 = vmatpush1.bf16.msra.mxu0 0
  %71 = vmatprep.subr.bf16.mxu0 0
  %72 = vmatpush1.bf16.msra.mxu0 0
  %73 = vmatprep.subr.bf16.mxu0 0
  %74 = vmatpush1.bf16.msra.mxu0 0
  %75 = vmatprep.subr.bf16.mxu0 0
  %76 = vmatpush1.bf16.msra.mxu0 0
  %77 = vmatprep.subr.bf16.mxu0 0
  %78 = vmatpush1.bf16.msra.mxu0 0
  %79 = vmatprep.subr.bf16.mxu0 0
  %80 = vmatpush1.bf16.msra.mxu0 0
  %81 = vmatprep.subr.bf16.mxu0 0
  %82 = vmatpush1.bf16.msra.mxu0 0
  %83 = vmatprep.subr.bf16.mxu0 0
  %84 = vmatpush1.bf16.msra.mxu0 0
  %85 = vmatprep.subr.bf16.mxu0 0
  %86 = vmatpush1.bf16.msra.mxu0 0
  %87 = vmatprep.subr.bf16.mxu0 0
  %88 = vmatpush1.bf16.msra.mxu0 0
  %89 = vmatprep.subr.bf16.mxu0 0
  %90 = vmatpush1.bf16.msra.mxu0 0
  %91 = vmatprep.mubr.bf16.mxu0 0
  %92 = vmatmul.mubr.bf16.gmra.mrb[0].mxu0 %v57
  %v93 = vpop.f32.mrb[0].mxu0
  %v94 = vadd.f32 %v42, %v93
  %v95 = vpop.f32.mrb[0].mxu0
  %v96 = vpop.f32.mrb[0].mxu0
  %v97 = vadd.f32 %v42, %v96
  %v98 = vpop.f32.mrb[0].mxu0
  %99 = vdwg.mxu0
  %100 = vst [vmem:[#allocation2] sm:$0xff] %v94
  %101 = vst [vmem:[#allocation2 + $0x8] sm:$0xff] %v97
  %v102 = vld [vmem:[#allocation2] sm:$0x3]
  %v103 = vld [vmem:[%s3] sm:$0xf]
  %v104 = vld [vmem:[%s3 + $0x4] sm:$0xf]
  %v105 = vld [vmem:[%s3 + $0x8] sm:$0xf]
  %v106 = vld [vmem:[%s3 + $0xc] sm:$0xf]
  %v111 = vunpack.c.l.b16 %v103
  %v112 = vunpack.c.l.b16 %v104
  %v113 = vunpack.c.l.b16 %v105
  %v114 = vunpack.c.l.b16 %v106
  %v115 = vpack.c.b16 %v112, %v111
  %v116 = vpack.c.b16 %v114, %v113
  %vm119 = vcmask 261120
  %v121 = vsel %vm119, 0, 0
  %123 = vmatprep.subr.bf16.mxu0 0
  %124 = vmatpush1.bf16.msra.mxu0 %v115
  %125 = vmatprep.subr.bf16.mxu0 0
  %126 = vmatpush1.bf16.msra.mxu0 %v116
  %127 = vmatprep.subr.bf16.mxu0 0
  %128 = vmatpush1.bf16.msra.mxu0 0
  %129 = vmatprep.subr.bf16.mxu0 0
  %130 = vmatpush1.bf16.msra.mxu0 0
  %131 = vmatprep.subr.bf16.mxu0 0
  %132 = vmatpush1.bf16.msra.mxu0 0
  %133 = vmatprep.subr.bf16.mxu0 0
  %134 = vmatpush1.bf16.msra.mxu0 0
  %135 = vmatprep.subr.bf16.mxu0 0
  %136 = vmatpush1.bf16.msra.mxu0 0
  %137 = vmatprep.subr.bf16.mxu0 0
  %138 = vmatpush1.bf16.msra.mxu0 0
  %139 = vmatprep.subr.bf16.mxu0 0
  %140 = vmatpush1.bf16.msra.mxu0 0
  %141 = vmatprep.subr.bf16.mxu0 0
  %142 = vmatpush1.bf16.msra.mxu0 0
  %143 = vmatprep.subr.bf16.mxu0 0
  %144 = vmatpush1.bf16.msra.mxu0 0
  %145 = vmatprep.subr.bf16.mxu0 0
  %146 = vmatpush1.bf16.msra.mxu0 0
  %147 = vmatprep.subr.bf16.mxu0 0
  %148 = vmatpush1.bf16.msra.mxu0 0
  %149 = vmatprep.subr.bf16.mxu0 0
  %150 = vmatpush1.bf16.msra.mxu0 0
  %151 = vmatprep.subr.bf16.mxu0 0
  %152 = vmatpush1.bf16.msra.mxu0 0
  %153 = vmatprep.subr.bf16.mxu0 0
  %154 = vmatpush1.bf16.msra.mxu0 0
  %155 = vmatprep.mubr.bf16.mxu0 0
  %156 = vmatmul.mubr.bf16.gmra.mrb[0].mxu0 %v121
  %v157 = vpop.f32.mrb[0].mxu0
  %v158 = vadd.f32 0.0, %v157
  %v159 = vpop.f32.mrb[0].mxu0
  %v160 = vpop.f32.mrb[0].mxu0
  %v161 = vpop.f32.mrb[0].mxu0
  %162 = vdwg.mxu0
  %v163 = vadd.f32 %v102, %v158
  %v164 = vxor.u32 %v163, 2147483648
  %v165 = vmul.f32 %v164, 1.442695
  %v166 = vpow.pop %v165
  %v167 = vadd.f32 %v166, 1.0
  %v168 = vrcp.pop %v167
  %v169 = vmul.f32 1.0, %v168
  %v170 = vtanh.pop %v163
  %v171 = vmul.f32 %v169, 0.0
  %173 = vrot.lane.b32.xlu0 %v170, 64
  %v174 = vpop.permute.xlu0 %173
  %v176 = vmul.f32 %v169, %v174
  %178 = vrot.lane.b32.xlu0 %v176, 32
  %v179 = vpop.permute.xlu0 %178
  %v181 = vadd.f32 %v171, %v179
  %v182 = vtanh.pop %v181
  %184 = vrot.lane.b32.xlu0 %v182, 64
  %v185 = vpop.permute.xlu0 %184
  %v187 = vmul.f32 %v169, %v185
  %189 = vrot.lane.b32.xlu0 %v187, 32
  %v190 = vpop.permute.xlu0 %189
  %vm192 = vcmask 254976
  %193 = vst.msk [vmem:[#allocation3] sm:$0x3] %vm192, %v190
  %v194 = vld [vmem:[%s1] sm:$0x3]
  %196 = vset.pattern.permute.xlu0 0
  %197 = vperm.xlu0 %196, %v194
  %v198 = vpop.permute.xlu0 %197
  %v200 = vmul.f32 %v198, %v187
  %v201 = vsub.f32 1.0, %v194
  %203 = vset.pattern.permute.xlu0 0
  %204 = vperm.xlu0 %203, %v201
  %v205 = vpop.permute.xlu0 %204
  %v207 = vmul.f32 %v205, 0.0
  %v208 = vadd.f32 %v200, %v207
  %v209 = vmul.f32 %v198, %v181
  %v210 = vadd.f32 %v209, %v207
  %v211 = vld [vmem:[#allocation2 + $0x2] sm:$0x3]
  %v212 = vpack.c.bf16 %v208, %v208
  %v213 = vld [vmem:[%s3] sm:$0xf]
  %v214 = vld [vmem:[%s3 + $0x4] sm:$0xf]
  %v215 = vld [vmem:[%s3 + $0x8] sm:$0xf]
  %v216 = vld [vmem:[%s3 + $0xc] sm:$0xf]
  %218 = vrot.lane.b32.xlu0 %v212, 32
  %v219 = vpop.permute.xlu0 %218
  %v224 = vunpack.c.l.b16 %v213
  %v225 = vunpack.c.l.b16 %v214
  %v226 = vunpack.c.l.b16 %v215
  %v227 = vunpack.c.l.b16 %v216
  %v228 = vpack.c.b16 %v225, %v224
  %v229 = vpack.c.b16 %v227, %v226
  %v233 = vsel %vm119, %v219, 0
  %235 = vmatprep.subr.bf16.mxu0 0
  %236 = vmatpush1.bf16.msra.mxu0 %v228
  %237 = vmatprep.subr.bf16.mxu0 0
  %238 = vmatpush1.bf16.msra.mxu0 %v229
  %239 = vmatprep.subr.bf16.mxu0 0
  %240 = vmatpush1.bf16.msra.mxu0 0
  %241 = vmatprep.subr.bf16.mxu0 0
  %242 = vmatpush1.bf16.msra.mxu0 0
  %243 = vmatprep.subr.bf16.mxu0 0
  %244 = vmatpush1.bf16.msra.mxu0 0
  %245 = vmatprep.subr.bf16.mxu0 0
  %246 = vmatpush1.bf16.msra.mxu0 0
  %247 = vmatprep.subr.bf16.mxu0 0
  %248 = vmatpush1.bf16.msra.mxu0 0
  %249 = vmatprep.subr.bf16.mxu0 0
  %250 = vmatpush1.bf16.msra.mxu0 0
  %251 = vmatprep.subr.bf16.mxu0 0
  %252 = vmatpush1.bf16.msra.mxu0 0
  %253 = vmatprep.subr.bf16.mxu0 0
  %254 = vmatpush1.bf16.msra.mxu0 0
  %255 = vmatprep.subr.bf16.mxu0 0
  %256 = vmatpush1.bf16.msra.mxu0 0
  %257 = vmatprep.subr.bf16.mxu0 0
  %258 = vmatpush1.bf16.msra.mxu0 0
  %259 = vmatprep.subr.bf16.mxu0 0
  %260 = vmatpush1.bf16.msra.mxu0 0
  %261 = vmatprep.subr.bf16.mxu0 0
  %262 = vmatpush1.bf16.msra.mxu0 0
  %263 = vmatprep.subr.bf16.mxu0 0
  %264 = vmatpush1.bf16.msra.mxu0 0
  %265 = vmatprep.subr.bf16.mxu0 0
  %266 = vmatpush1.bf16.msra.mxu0 0
  %267 = vmatprep.mubr.bf16.mxu0 0
  %268 = vmatmul.mubr.bf16.gmra.mrb[0].mxu0 %v233
  %v269 = vpop.f32.mrb[0].mxu0
  %v270 = vadd.f32 0.0, %v269
  %v271 = vpop.f32.mrb[0].mxu0
  %v272 = vpop.f32.mrb[0].mxu0
  %v273 = vpop.f32.mrb[0].mxu0
  %274 = vdwg.mxu0
  %v275 = vadd.f32 %v211, %v270
  %v276 = vxor.u32 %v275, 2147483648
  %v277 = vmul.f32 %v276, 1.442695
  %v278 = vpow.pop %v277
  %v279 = vadd.f32 %v278, 1.0
  %v280 = vrcp.pop %v279
  %v281 = vmul.f32 1.0, %v280
  %v282 = vtanh.pop %v275
  %v283 = vmul.f32 %v281, %v210
  %285 = vrot.lane.b32.xlu0 %v282, 64
  %v286 = vpop.permute.xlu0 %285
  %v288 = vmul.f32 %v281, %v286
  %290 = vrot.lane.b32.xlu0 %v288, 32
  %v291 = vpop.permute.xlu0 %290
  %v293 = vadd.f32 %v283, %v291
  %v294 = vtanh.pop %v293
  %296 = vrot.lane.b32.xlu0 %v294, 64
  %v297 = vpop.permute.xlu0 %296
  %v299 = vmul.f32 %v281, %v297
  %301 = vrot.lane.b32.xlu0 %v299, 32
  %v302 = vpop.permute.xlu0 %301
  %304 = vst.msk [vmem:[#allocation3 + $0x2] sm:$0x3] %vm192, %v302
  %v305 = vld [vmem:[%s1 + $0x2] sm:$0x3]
  %307 = vset.pattern.permute.xlu0 0
  %308 = vperm.xlu0 %307, %v305
  %v309 = vpop.permute.xlu0 %308
  %v311 = vmul.f32 %v309, %v299
  %v312 = vsub.f32 1.0, %v305
  %314 = vset.pattern.permute.xlu0 0
  %315 = vperm.xlu0 %314, %v312
  %v316 = vpop.permute.xlu0 %315
  %v318 = vmul.f32 %v316, %v208
  %v319 = vadd.f32 %v311, %v318
  %v320 = vmul.f32 %v309, %v293
  %v321 = vmul.f32 %v316, %v210
  %v322 = vadd.f32 %v320, %v321
  %v323 = vld [vmem:[#allocation2 + $0x4] sm:$0x3]
  %v324 = vpack.c.bf16 %v319, %v319
  %v325 = vld [vmem:[%s3] sm:$0xf]
  %v326 = vld [vmem:[%s3 + $0x4] sm:$0xf]
  %v327 = vld [vmem:[%s3 + $0x8] sm:$0xf]
  %v328 = vld [vmem:[%s3 + $0xc] sm:$0xf]
  %330 = vrot.lane.b32.xlu0 %v324, 32
  %v331 = vpop.permute.xlu0 %330
  %v336 = vunpack.c.l.b16 %v325
  %v337 = vunpack.c.l.b16 %v326
  %v338 = vunpack.c.l.b16 %v327
  %v339 = vunpack.c.l.b16 %v328
  %v340 = vpack.c.b16 %v337, %v336
  %v341 = vpack.c.b16 %v339, %v338
  %v345 = vsel %vm119, %v331, 0
  %347 = vmatprep.subr.bf16.mxu0 0
  %348 = vmatpush1.bf16.msra.mxu0 %v340
  %349 = vmatprep.subr.bf16.mxu0 0
  %350 = vmatpush1.bf16.msra.mxu0 %v341
  %351 = vmatprep.subr.bf16.mxu0 0
  %352 = vmatpush1.bf16.msra.mxu0 0
  %353 = vmatprep.subr.bf16.mxu0 0
  %354 = vmatpush1.bf16.msra.mxu0 0
  %355 = vmatprep.subr.bf16.mxu0 0
  %356 = vmatpush1.bf16.msra.mxu0 0
  %357 = vmatprep.subr.bf16.mxu0 0
  %358 = vmatpush1.bf16.msra.mxu0 0
  %359 = vmatprep.subr.bf16.mxu0 0
  %360 = vmatpush1.bf16.msra.mxu0 0
  %361 = vmatprep.subr.bf16.mxu0 0
  %362 = vmatpush1.bf16.msra.mxu0 0
  %363 = vmatprep.subr.bf16.mxu0 0
  %364 = vmatpush1.bf16.msra.mxu0 0
  %365 = vmatprep.subr.bf16.mxu0 0
  %366 = vmatpush1.bf16.msra.mxu0 0
  %367 = vmatprep.subr.bf16.mxu0 0
  %368 = vmatpush1.bf16.msra.mxu0 0
  %369 = vmatprep.subr.bf16.mxu0 0
  %370 = vmatpush1.bf16.msra.mxu0 0
  %371 = vmatprep.subr.bf16.mxu0 0
  %372 = vmatpush1.bf16.msra.mxu0 0
  %373 = vmatprep.subr.bf16.mxu0 0
  %374 = vmatpush1.bf16.msra.mxu0 0
  %375 = vmatprep.subr.bf16.mxu0 0
  %376 = vmatpush1.bf16.msra.mxu0 0
  %377 = vmatprep.subr.bf16.mxu0 0
  %378 = vmatpush1.bf16.msra.mxu0 0
  %379 = vmatprep.mubr.bf16.mxu0 0
  %380 = vmatmul.mubr.bf16.gmra.mrb[0].mxu0 %v345
  %v381 = vpop.f32.mrb[0].mxu0
  %v382 = vadd.f32 0.0, %v381
  %v383 = vpop.f32.mrb[0].mxu0
  %v384 = vpop.f32.mrb[0].mxu0
  %v385 = vpop.f32.mrb[0].mxu0
  %386 = vdwg.mxu0
  %v387 = vadd.f32 %v323, %v382
  %v388 = vxor.u32 %v387, 2147483648
  %v389 = vmul.f32 %v388, 1.442695
  %v390 = vpow.pop %v389
  %v391 = vadd.f32 %v390, 1.0
  %v392 = vrcp.pop %v391
  %v393 = vmul.f32 1.0, %v392
  %v394 = vtanh.pop %v387
  %v395 = vmul.f32 %v393, %v322
  %397 = vrot.lane.b32.xlu0 %v394, 64
  %v398 = vpop.permute.xlu0 %397
  %v400 = vmul.f32 %v393, %v398
  %402 = vrot.lane.b32.xlu0 %v400, 32
  %v403 = vpop.permute.xlu0 %402
  %v405 = vadd.f32 %v395, %v403
  %v406 = vtanh.pop %v405
  %408 = vrot.lane.b32.xlu0 %v406, 64
  %v409 = vpop.permute.xlu0 %408
  %v411 = vmul.f32 %v393, %v409
  %413 = vrot.lane.b32.xlu0 %v411, 32
  %v414 = vpop.permute.xlu0 %413
  %416 = vst.msk [vmem:[#allocation3 + $0x4] sm:$0x3] %vm192, %v414
  %v417 = vld [vmem:[%s1 + $0x4] sm:$0x3]
  %419 = vset.pattern.permute.xlu0 0
  %420 = vperm.xlu0 %419, %v417
  %v421 = vpop.permute.xlu0 %420
  %v423 = vmul.f32 %v421, %v411
  %v424 = vsub.f32 1.0, %v417
  %426 = vset.pattern.permute.xlu0 0
  %427 = vperm.xlu0 %426, %v424
  %v428 = vpop.permute.xlu0 %427
  %v430 = vmul.f32 %v428, %v319
  %v431 = vadd.f32 %v423, %v430
  %v432 = vmul.f32 %v421, %v405
  %v433 = vmul.f32 %v428, %v322
  %v434 = vadd.f32 %v432, %v433
  %v435 = vld [vmem:[#allocation2 + $0x6] sm:$0x3]
  %v436 = vpack.c.bf16 %v431, %v431
  %v437 = vld [vmem:[%s3] sm:$0xf]
  %v438 = vld [vmem:[%s3 + $0x4] sm:$0xf]
  %v439 = vld [vmem:[%s3 + $0x8] sm:$0xf]
  %v440 = vld [vmem:[%s3 + $0xc] sm:$0xf]
  %442 = vrot.lane.b32.xlu0 %v436, 32
  %v443 = vpop.permute.xlu0 %442
  %v448 = vunpack.c.l.b16 %v437
  %v449 = vunpack.c.l.b16 %v438
  %v450 = vunpack.c.l.b16 %v439
  %v451 = vunpack.c.l.b16 %v440
  %v452 = vpack.c.b16 %v449, %v448
  %v453 = vpack.c.b16 %v451, %v450
  %v457 = vsel %vm119, %v443, 0
  %459 = vmatprep.subr.bf16.mxu0 0
  %460 = vmatpush1.bf16.msra.mxu0 %v452
  %461 = vmatprep.subr.bf16.mxu0 0
  %462 = vmatpush1.bf16.msra.mxu0 %v453
  %463 = vmatprep.subr.bf16.mxu0 0
  %464 = vmatpush1.bf16.msra.mxu0 0
  %465 = vmatprep.subr.bf16.mxu0 0
  %466 = vmatpush1.bf16.msra.mxu0 0
  %467 = vmatprep.subr.bf16.mxu0 0
  %468 = vmatpush1.bf16.msra.mxu0 0
  %469 = vmatprep.subr.bf16.mxu0 0
  %470 = vmatpush1.bf16.msra.mxu0 0
  %471 = vmatprep.subr.bf16.mxu0 0
  %472 = vmatpush1.bf16.msra.mxu0 0
  %473 = vmatprep.subr.bf16.mxu0 0
  %474 = vmatpush1.bf16.msra.mxu0 0
  %475 = vmatprep.subr.bf16.mxu0 0
  %476 = vmatpush1.bf16.msra.mxu0 0
  %477 = vmatprep.subr.bf16.mxu0 0
  %478 = vmatpush1.bf16.msra.mxu0 0
  %479 = vmatprep.subr.bf16.mxu0 0
  %480 = vmatpush1.bf16.msra.mxu0 0
  %481 = vmatprep.subr.bf16.mxu0 0
  %482 = vmatpush1.bf16.msra.mxu0 0
  %483 = vmatprep.subr.bf16.mxu0 0
  %484 = vmatpush1.bf16.msra.mxu0 0
  %485 = vmatprep.subr.bf16.mxu0 0
  %486 = vmatpush1.bf16.msra.mxu0 0
  %487 = vmatprep.subr.bf16.mxu0 0
  %488 = vmatpush1.bf16.msra.mxu0 0
  %489 = vmatprep.subr.bf16.mxu0 0
  %490 = vmatpush1.bf16.msra.mxu0 0
  %491 = vmatprep.mubr.bf16.mxu0 0
  %492 = vmatmul.mubr.bf16.gmra.mrb[0].mxu0 %v457
  %v493 = vpop.f32.mrb[0].mxu0
  %v494 = vadd.f32 0.0, %v493
  %v495 = vpop.f32.mrb[0].mxu0
  %v496 = vpop.f32.mrb[0].mxu0
  %v497 = vpop.f32.mrb[0].mxu0
  %498 = vdwg.mxu0
  %v499 = vadd.f32 %v435, %v494
  %v500 = vxor.u32 %v499, 2147483648
  %v501 = vmul.f32 %v500, 1.442695
  %v502 = vpow.pop %v501
  %v503 = vadd.f32 %v502, 1.0
  %v504 = vrcp.pop %v503
  %v505 = vmul.f32 1.0, %v504
  %v506 = vtanh.pop %v499
  %v507 = vmul.f32 %v505, %v434
  %509 = vrot.lane.b32.xlu0 %v506, 64
  %v510 = vpop.permute.xlu0 %509
  %v512 = vmul.f32 %v505, %v510
  %514 = vrot.lane.b32.xlu0 %v512, 32
  %v515 = vpop.permute.xlu0 %514
  %v517 = vadd.f32 %v507, %v515
  %v518 = vtanh.pop %v517
  %520 = vrot.lane.b32.xlu0 %v518, 64
  %v521 = vpop.permute.xlu0 %520
  %v523 = vmul.f32 %v505, %v521
  %525 = vrot.lane.b32.xlu0 %v523, 32
  %v526 = vpop.permute.xlu0 %525
  %528 = vst.msk [vmem:[#allocation3 + $0x6] sm:$0x3] %vm192, %v526
  %v529 = vld [vmem:[%s1 + $0x6] sm:$0x3]
  %531 = vset.pattern.permute.xlu0 0
  %532 = vperm.xlu0 %531, %v529
  %v533 = vpop.permute.xlu0 %532
  %v535 = vmul.f32 %v533, %v523
  %v536 = vsub.f32 1.0, %v529
  %538 = vset.pattern.permute.xlu0 0
  %539 = vperm.xlu0 %538, %v536
  %v540 = vpop.permute.xlu0 %539
  %v542 = vmul.f32 %v540, %v431
  %v543 = vadd.f32 %v535, %v542
  %v544 = vmul.f32 %v533, %v517
  %v545 = vmul.f32 %v540, %v434
  %v546 = vadd.f32 %v544, %v545
  %v547 = vld [vmem:[#allocation2 + $0x8] sm:$0x3]
  %v548 = vpack.c.bf16 %v543, %v543
  %v549 = vld [vmem:[%s3] sm:$0xf]
  %v550 = vld [vmem:[%s3 + $0x4] sm:$0xf]
  %v551 = vld [vmem:[%s3 + $0x8] sm:$0xf]
  %v552 = vld [vmem:[%s3 + $0xc] sm:$0xf]
  %554 = vrot.lane.b32.xlu0 %v548, 32
  %v555 = vpop.permute.xlu0 %554
  %v560 = vunpack.c.l.b16 %v549
  %v561 = vunpack.c.l.b16 %v550
  %v562 = vunpack.c.l.b16 %v551
  %v563 = vunpack.c.l.b16 %v552
  %v564 = vpack.c.b16 %v561, %v560
  %v565 = vpack.c.b16 %v563, %v562
  %v569 = vsel %vm119, %v555, 0
  %571 = vmatprep.subr.bf16.mxu0 0
  %572 = vmatpush1.bf16.msra.mxu0 %v564
  %573 = vmatprep.subr.bf16.mxu0 0
  %574 = vmatpush1.bf16.msra.mxu0 %v565
  %575 = vmatprep.subr.bf16.mxu0 0
  %576 = vmatpush1.bf16.msra.mxu0 0
  %577 = vmatprep.subr.bf16.mxu0 0
  %578 = vmatpush1.bf16.msra.mxu0 0
  %579 = vmatprep.subr.bf16.mxu0 0
  %580 = vmatpush1.bf16.msra.mxu0 0
  %581 = vmatprep.subr.bf16.mxu0 0
  %582 = vmatpush1.bf16.msra.mxu0 0
  %583 = vmatprep.subr.bf16.mxu0 0
  %584 = vmatpush1.bf16.msra.mxu0 0
  %585 = vmatprep.subr.bf16.mxu0 0
  %586 = vmatpush1.bf16.msra.mxu0 0
  %587 = vmatprep.subr.bf16.mxu0 0
  %588 = vmatpush1.bf16.msra.mxu0 0
  %589 = vmatprep.subr.bf16.mxu0 0
  %590 = vmatpush1.bf16.msra.mxu0 0
  %591 = vmatprep.subr.bf16.mxu0 0
  %592 = vmatpush1.bf16.msra.mxu0 0
  %593 = vmatprep.subr.bf16.mxu0 0
  %594 = vmatpush1.bf16.msra.mxu0 0
  %595 = vmatprep.subr.bf16.mxu0 0
  %596 = vmatpush1.bf16.msra.mxu0 0
  %597 = vmatprep.subr.bf16.mxu0 0
  %598 = vmatpush1.bf16.msra.mxu0 0
  %599 = vmatprep.subr.bf16.mxu0 0
  %600 = vmatpush1.bf16.msra.mxu0 0
  %601 = vmatprep.subr.bf16.mxu0 0
  %602 = vmatpush1.bf16.msra.mxu0 0
  %603 = vmatprep.mubr.bf16.mxu0 0
  %604 = vmatmul.mubr.bf16.gmra.mrb[0].mxu0 %v569
  %v605 = vpop.f32.mrb[0].mxu0
  %v606 = vadd.f32 0.0, %v605
  %v607 = vpop.f32.mrb[0].mxu0
  %v608 = vpop.f32.mrb[0].mxu0
  %v609 = vpop.f32.mrb[0].mxu0
  %610 = vdwg.mxu0
  %v611 = vadd.f32 %v547, %v606
  %v612 = vxor.u32 %v611, 2147483648
  %v613 = vmul.f32 %v612, 1.442695
  %v614 = vpow.pop %v613
  %v615 = vadd.f32 %v614, 1.0
  %v616 = vrcp.pop %v615
  %v617 = vmul.f32 1.0, %v616
  %v618 = vtanh.pop %v611
  %v619 = vmul.f32 %v617, %v546
  %621 = vrot.lane.b32.xlu0 %v618, 64
  %v622 = vpop.permute.xlu0 %621
  %v624 = vmul.f32 %v617, %v622
  %626 = vrot.lane.b32.xlu0 %v624, 32
  %v627 = vpop.permute.xlu0 %626
  %v629 = vadd.f32 %v619, %v627
  %v630 = vtanh.pop %v629
  %632 = vrot.lane.b32.xlu0 %v630, 64
  %v633 = vpop.permute.xlu0 %632
  %v635 = vmul.f32 %v617, %v633
  %637 = vrot.lane.b32.xlu0 %v635, 32
  %v638 = vpop.permute.xlu0 %637
  %640 = vst.msk [vmem:[#allocation3 + $0x8] sm:$0x3] %vm192, %v638
  %v641 = vld [vmem:[%s1 + $0x8] sm:$0x3]
  %643 = vset.pattern.permute.xlu0 0
  %644 = vperm.xlu0 %643, %v641
  %v645 = vpop.permute.xlu0 %644
  %v647 = vmul.f32 %v645, %v635
  %v648 = vsub.f32 1.0, %v641
  %650 = vset.pattern.permute.xlu0 0
  %651 = vperm.xlu0 %650, %v648
  %v652 = vpop.permute.xlu0 %651
  %v654 = vmul.f32 %v652, %v543
  %v655 = vadd.f32 %v647, %v654
  %v656 = vmul.f32 %v645, %v629
  %v657 = vmul.f32 %v652, %v546
  %v658 = vadd.f32 %v656, %v657
  %v659 = vld [vmem:[#allocation2 + $0xa] sm:$0x3]
  %v660 = vpack.c.bf16 %v655, %v655
  %v661 = vld [vmem:[%s3] sm:$0xf]
  %v662 = vld [vmem:[%s3 + $0x4] sm:$0xf]
  %v663 = vld [vmem:[%s3 + $0x8] sm:$0xf]
  %v664 = vld [vmem:[%s3 + $0xc] sm:$0xf]
  %666 = vrot.lane.b32.xlu0 %v660, 32
  %v667 = vpop.permute.xlu0 %666
  %v672 = vunpack.c.l.b16 %v661
  %v673 = vunpack.c.l.b16 %v662
  %v674 = vunpack.c.l.b16 %v663
  %v675 = vunpack.c.l.b16 %v664
  %v676 = vpack.c.b16 %v673, %v672
  %v677 = vpack.c.b16 %v675, %v674
  %v681 = vsel %vm119, %v667, 0
  %683 = vmatprep.subr.bf16.mxu0 0
  %684 = vmatpush1.bf16.msra.mxu0 %v676
  %685 = vmatprep.subr.bf16.mxu0 0
  %686 = vmatpush1.bf16.msra.mxu0 %v677
  %687 = vmatprep.subr.bf16.mxu0 0
  %688 = vmatpush1.bf16.msra.mxu0 0
  %689 = vmatprep.subr.bf16.mxu0 0
  %690 = vmatpush1.bf16.msra.mxu0 0
  %691 = vmatprep.subr.bf16.mxu0 0
  %692 = vmatpush1.bf16.msra.mxu0 0
  %693 = vmatprep.subr.bf16.mxu0 0
  %694 = vmatpush1.bf16.msra.mxu0 0
  %695 = vmatprep.subr.bf16.mxu0 0
  %696 = vmatpush1.bf16.msra.mxu0 0
  %697 = vmatprep.subr.bf16.mxu0 0
  %698 = vmatpush1.bf16.msra.mxu0 0
  %699 = vmatprep.subr.bf16.mxu0 0
  %700 = vmatpush1.bf16.msra.mxu0 0
  %701 = vmatprep.subr.bf16.mxu0 0
  %702 = vmatpush1.bf16.msra.mxu0 0
  %703 = vmatprep.subr.bf16.mxu0 0
  %704 = vmatpush1.bf16.msra.mxu0 0
  %705 = vmatprep.subr.bf16.mxu0 0
  %706 = vmatpush1.bf16.msra.mxu0 0
  %707 = vmatprep.subr.bf16.mxu0 0
  %708 = vmatpush1.bf16.msra.mxu0 0
  %709 = vmatprep.subr.bf16.mxu0 0
  %710 = vmatpush1.bf16.msra.mxu0 0
  %711 = vmatprep.subr.bf16.mxu0 0
  %712 = vmatpush1.bf16.msra.mxu0 0
  %713 = vmatprep.subr.bf16.mxu0 0
  %714 = vmatpush1.bf16.msra.mxu0 0
  %715 = vmatprep.mubr.bf16.mxu0 0
  %716 = vmatmul.mubr.bf16.gmra.mrb[0].mxu0 %v681
  %v717 = vpop.f32.mrb[0].mxu0
  %v718 = vadd.f32 0.0, %v717
  %v719 = vpop.f32.mrb[0].mxu0
  %v720 = vpop.f32.mrb[0].mxu0
  %v721 = vpop.f32.mrb[0].mxu0
  %722 = vdwg.mxu0
  %v723 = vadd.f32 %v659, %v718
  %v724 = vxor.u32 %v723, 2147483648
  %v725 = vmul.f32 %v724, 1.442695
  %v726 = vpow.pop %v725
  %v727 = vadd.f32 %v726, 1.0
  %v728 = vrcp.pop %v727
  %v729 = vmul.f32 1.0, %v728
  %v730 = vtanh.pop %v723
  %v731 = vmul.f32 %v729, %v658
  %733 = vrot.lane.b32.xlu0 %v730, 64
  %v734 = vpop.permute.xlu0 %733
  %v736 = vmul.f32 %v729, %v734
  %738 = vrot.lane.b32.xlu0 %v736, 32
  %v739 = vpop.permute.xlu0 %738
  %v741 = vadd.f32 %v731, %v739
  %v742 = vtanh.pop %v741
  %744 = vrot.lane.b32.xlu0 %v742, 64
  %v745 = vpop.permute.xlu0 %744
  %v747 = vmul.f32 %v729, %v745
  %749 = vrot.lane.b32.xlu0 %v747, 32
  %v750 = vpop.permute.xlu0 %749
  %752 = vst.msk [vmem:[#allocation3 + $0xa] sm:$0x3] %vm192, %v750
  %v753 = vld [vmem:[%s1 + $0xa] sm:$0x3]
  %755 = vset.pattern.permute.xlu0 0
  %756 = vperm.xlu0 %755, %v753
  %v757 = vpop.permute.xlu0 %756
  %v759 = vmul.f32 %v757, %v747
  %v760 = vsub.f32 1.0, %v753
  %762 = vset.pattern.permute.xlu0 0
  %763 = vperm.xlu0 %762, %v760
  %v764 = vpop.permute.xlu0 %763
  %v766 = vmul.f32 %v764, %v655
  %v767 = vadd.f32 %v759, %v766
  %v768 = vmul.f32 %v757, %v741
  %v769 = vmul.f32 %v764, %v658
  %v770 = vadd.f32 %v768, %v769
  %v771 = vld [vmem:[#allocation2 + $0xc] sm:$0x3]
  %v772 = vpack.c.bf16 %v767, %v767
  %v773 = vld [vmem:[%s3] sm:$0xf]
  %v774 = vld [vmem:[%s3 + $0x4] sm:$0xf]
  %v775 = vld [vmem:[%s3 + $0x8] sm:$0xf]
  %v776 = vld [vmem:[%s3 + $0xc] sm:$0xf]
  %778 = vrot.lane.b32.xlu0 %v772, 32
  %v779 = vpop.permute.xlu0 %778
  %v784 = vunpack.c.l.b16 %v773
  %v785 = vunpack.c.l.b16 %v774
  %v786 = vunpack.c.l.b16 %v775
  %v787 = vunpack.c.l.b16 %v776
  %v788 = vpack.c.b16 %v785, %v784
  %v789 = vpack.c.b16 %v787, %v786
  %v793 = vsel %vm119, %v779, 0
  %795 = vmatprep.subr.bf16.mxu0 0
  %796 = vmatpush1.bf16.msra.mxu0 %v788
  %797 = vmatprep.subr.bf16.mxu0 0
  %798 = vmatpush1.bf16.msra.mxu0 %v789
  %799 = vmatprep.subr.bf16.mxu0 0
  %800 = vmatpush1.bf16.msra.mxu0 0
  %801 = vmatprep.subr.bf16.mxu0 0
  %802 = vmatpush1.bf16.msra.mxu0 0
  %803 = vmatprep.subr.bf16.mxu0 0
  %804 = vmatpush1.bf16.msra.mxu0 0
  %805 = vmatprep.subr.bf16.mxu0 0
  %806 = vmatpush1.bf16.msra.mxu0 0
  %807 = vmatprep.subr.bf16.mxu0 0
  %808 = vmatpush1.bf16.msra.mxu0 0
  %809 = vmatprep.subr.bf16.mxu0 0
  %810 = vmatpush1.bf16.msra.mxu0 0
  %811 = vmatprep.subr.bf16.mxu0 0
  %812 = vmatpush1.bf16.msra.mxu0 0
  %813 = vmatprep.subr.bf16.mxu0 0
  %814 = vmatpush1.bf16.msra.mxu0 0
  %815 = vmatprep.subr.bf16.mxu0 0
  %816 = vmatpush1.bf16.msra.mxu0 0
  %817 = vmatprep.subr.bf16.mxu0 0
  %818 = vmatpush1.bf16.msra.mxu0 0
  %819 = vmatprep.subr.bf16.mxu0 0
  %820 = vmatpush1.bf16.msra.mxu0 0
  %821 = vmatprep.subr.bf16.mxu0 0
  %822 = vmatpush1.bf16.msra.mxu0 0
  %823 = vmatprep.subr.bf16.mxu0 0
  %824 = vmatpush1.bf16.msra.mxu0 0
  %825 = vmatprep.subr.bf16.mxu0 0
  %826 = vmatpush1.bf16.msra.mxu0 0
  %827 = vmatprep.mubr.bf16.mxu0 0
  %828 = vmatmul.mubr.bf16.gmra.mrb[0].mxu0 %v793
  %v829 = vpop.f32.mrb[0].mxu0
  %v830 = vadd.f32 0.0, %v829
  %v831 = vpop.f32.mrb[0].mxu0
  %v832 = vpop.f32.mrb[0].mxu0
  %v833 = vpop.f32.mrb[0].mxu0
  %834 = vdwg.mxu0
  %v835 = vadd.f32 %v771, %v830
  %v836 = vxor.u32 %v835, 2147483648
  %v837 = vmul.f32 %v836, 1.442695
  %v838 = vpow.pop %v837
  %v839 = vadd.f32 %v838, 1.0
  %v840 = vrcp.pop %v839
  %v841 = vmul.f32 1.0, %v840
  %v842 = vtanh.pop %v835
  %v843 = vmul.f32 %v841, %v770
  %845 = vrot.lane.b32.xlu0 %v842, 64
  %v846 = vpop.permute.xlu0 %845
  %v848 = vmul.f32 %v841, %v846
  %850 = vrot.lane.b32.xlu0 %v848, 32
  %v851 = vpop.permute.xlu0 %850
  %v853 = vadd.f32 %v843, %v851
  %v854 = vtanh.pop %v853
  %856 = vrot.lane.b32.xlu0 %v854, 64
  %v857 = vpop.permute.xlu0 %856
  %v859 = vmul.f32 %v841, %v857
  %861 = vrot.lane.b32.xlu0 %v859, 32
  %v862 = vpop.permute.xlu0 %861
  %864 = vst.msk [vmem:[#allocation3 + $0xc] sm:$0x3] %vm192, %v862
  %v865 = vld [vmem:[%s1 + $0xc] sm:$0x3]
  %867 = vset.pattern.permute.xlu0 0
  %868 = vperm.xlu0 %867, %v865
  %v869 = vpop.permute.xlu0 %868
  %v871 = vmul.f32 %v869, %v859
  %v872 = vsub.f32 1.0, %v865
  %874 = vset.pattern.permute.xlu0 0
  %875 = vperm.xlu0 %874, %v872
  %v876 = vpop.permute.xlu0 %875
  %v878 = vmul.f32 %v876, %v767
  %v879 = vadd.f32 %v871, %v878
  %v880 = vmul.f32 %v869, %v853
  %v881 = vmul.f32 %v876, %v770
  %v882 = vadd.f32 %v880, %v881
  %v883 = vld [vmem:[#allocation2 + $0xe] sm:$0x3]
  %v884 = vpack.c.bf16 %v879, %v879
  %v885 = vld [vmem:[%s3] sm:$0xf]
  %v886 = vld [vmem:[%s3 + $0x4] sm:$0xf]
  %v887 = vld [vmem:[%s3 + $0x8] sm:$0xf]
  %v888 = vld [vmem:[%s3 + $0xc] sm:$0xf]
  %890 = vrot.lane.b32.xlu0 %v884, 32
  %v891 = vpop.permute.xlu0 %890
  %v896 = vunpack.c.l.b16 %v885
  %v897 = vunpack.c.l.b16 %v886
  %v898 = vunpack.c.l.b16 %v887
  %v899 = vunpack.c.l.b16 %v888
  %v900 = vpack.c.b16 %v897, %v896
  %v901 = vpack.c.b16 %v899, %v898
  %v905 = vsel %vm119, %v891, 0
  %907 = vmatprep.subr.bf16.mxu0 0
  %908 = vmatpush1.bf16.msra.mxu0 %v900
  %909 = vmatprep.subr.bf16.mxu0 0
  %910 = vmatpush1.bf16.msra.mxu0 %v901
  %911 = vmatprep.subr.bf16.mxu0 0
  %912 = vmatpush1.bf16.msra.mxu0 0
  %913 = vmatprep.subr.bf16.mxu0 0
  %914 = vmatpush1.bf16.msra.mxu0 0
  %915 = vmatprep.subr.bf16.mxu0 0
  %916 = vmatpush1.bf16.msra.mxu0 0
  %917 = vmatprep.subr.bf16.mxu0 0
  %918 = vmatpush1.bf16.msra.mxu0 0
  %919 = vmatprep.subr.bf16.mxu0 0
  %920 = vmatpush1.bf16.msra.mxu0 0
  %921 = vmatprep.subr.bf16.mxu0 0
  %922 = vmatpush1.bf16.msra.mxu0 0
  %923 = vmatprep.subr.bf16.mxu0 0
  %924 = vmatpush1.bf16.msra.mxu0 0
  %925 = vmatprep.subr.bf16.mxu0 0
  %926 = vmatpush1.bf16.msra.mxu0 0
  %927 = vmatprep.subr.bf16.mxu0 0
  %928 = vmatpush1.bf16.msra.mxu0 0
  %929 = vmatprep.subr.bf16.mxu0 0
  %930 = vmatpush1.bf16.msra.mxu0 0
  %931 = vmatprep.subr.bf16.mxu0 0
  %932 = vmatpush1.bf16.msra.mxu0 0
  %933 = vmatprep.subr.bf16.mxu0 0
  %934 = vmatpush1.bf16.msra.mxu0 0
  %935 = vmatprep.subr.bf16.mxu0 0
  %936 = vmatpush1.bf16.msra.mxu0 0
  %937 = vmatprep.subr.bf16.mxu0 0
  %938 = vmatpush1.bf16.msra.mxu0 0
  %939 = vmatprep.mubr.bf16.mxu0 0
  %940 = vmatmul.mubr.bf16.gmra.mrb[0].mxu0 %v905
  %v941 = vpop.f32.mrb[0].mxu0
  %v942 = vadd.f32 0.0, %v941
  %v943 = vpop.f32.mrb[0].mxu0
  %v944 = vpop.f32.mrb[0].mxu0
  %v945 = vpop.f32.mrb[0].mxu0
  %946 = vdwg.mxu0
  %v947 = vadd.f32 %v883, %v942
  %v948 = vxor.u32 %v947, 2147483648
  %v949 = vmul.f32 %v948, 1.442695
  %v950 = vpow.pop %v949
  %v951 = vadd.f32 %v950, 1.0
  %v952 = vrcp.pop %v951
  %v953 = vmul.f32 1.0, %v952
  %v954 = vtanh.pop %v947
  %v955 = vmul.f32 %v953, %v882
  %957 = vrot.lane.b32.xlu0 %v954, 64
  %v958 = vpop.permute.xlu0 %957
  %v960 = vmul.f32 %v953, %v958
  %962 = vrot.lane.b32.xlu0 %v960, 32
  %v963 = vpop.permute.xlu0 %962
  %v965 = vadd.f32 %v955, %v963
  %v966 = vtanh.pop %v965
  %968 = vrot.lane.b32.xlu0 %v966, 64
  %v969 = vpop.permute.xlu0 %968
  %v971 = vmul.f32 %v953, %v969
  %973 = vrot.lane.b32.xlu0 %v971, 32
  %v974 = vpop.permute.xlu0 %973
  %976 = vst.msk [vmem:[#allocation3 + $0xe] sm:$0x3] %vm192, %v974
  %v977 = vld [vmem:[%s1 + $0xe] sm:$0x3]
  %979 = vset.pattern.permute.xlu0 0
  %980 = vperm.xlu0 %979, %v977
  %v981 = vpop.permute.xlu0 %980
  %v983 = vmul.f32 %v981, %v971
  %v984 = vsub.f32 1.0, %v977
  %986 = vset.pattern.permute.xlu0 0
  %987 = vperm.xlu0 %986, %v984
  %v988 = vpop.permute.xlu0 %987
  %v990 = vmul.f32 %v988, %v879
  %v991 = vadd.f32 %v983, %v990
  %v992 = vmul.f32 %v981, %v965
  %v993 = vmul.f32 %v988, %v882
  %v994 = vadd.f32 %v992, %v993
  %996 = vrot.lane.b32.xlu0 %v991, 32
  %v997 = vpop.permute.xlu0 %996
  %999 = vst.msk [vmem:[%s9] sm:$0x3] %vm192, %v997
  %1001 = vrot.lane.b32.xlu0 %v994, 96
  %v1002 = vpop.permute.xlu0 %1001
  %1004 = vst.msk [vmem:[%s10] sm:$0x3] %vm192, %v1002
  %v1005 = vld [vmem:[#allocation3] sm:$0xff]
  %v1006 = vld [vmem:[#allocation3 + $0x8] sm:$0xff]
  %v1007 = vpack.c.bf16 %v1006, %v1005
  %v1008 = vld [vmem:[%s5] sm:$0xf]
  %v1009 = vld [vmem:[%s5 + $0x4] sm:$0xf]
  %v1010 = vld [vmem:[%s5 + $0x8] sm:$0xf]
  %v1011 = vld [vmem:[%s5 + $0xc] sm:$0xf]
  %v1012 = vld [vmem:[%s7] sm:$0x1]
  %v1014 = vlaneseq
  %v1015 = vshrl.u32 %v1014, 7
  %v1016 = vsub.s32 0, %v1015
  %v1017 = vrot.slane %v1012, %v1016
  %v1023 = vunpack.c.l.b16 %v1008
  %v1024 = vunpack.c.l.b16 %v1009
  %v1025 = vunpack.c.l.b16 %v1010
  %v1026 = vunpack.c.l.b16 %v1011
  %v1027 = vpack.c.b16 %v1024, %v1023
  %v1028 = vpack.c.b16 %v1026, %v1025
  %v1032 = vsel %vm119, %v1007, 0
  %1034 = vmatprep.subr.bf16.mxu0 0
  %1035 = vmatpush1.bf16.msra.mxu0 %v1027
  %1036 = vmatprep.subr.bf16.mxu0 0
  %1037 = vmatpush1.bf16.msra.mxu0 %v1028
  %1038 = vmatprep.subr.bf16.mxu0 0
  %1039 = vmatpush1.bf16.msra.mxu0 0
  %1040 = vmatprep.subr.bf16.mxu0 0
  %1041 = vmatpush1.bf16.msra.mxu0 0
  %1042 = vmatprep.subr.bf16.mxu0 0
  %1043 = vmatpush1.bf16.msra.mxu0 0
  %1044 = vmatprep.subr.bf16.mxu0 0
  %1045 = vmatpush1.bf16.msra.mxu0 0
  %1046 = vmatprep.subr.bf16.mxu0 0
  %1047 = vmatpush1.bf16.msra.mxu0 0
  %1048 = vmatprep.subr.bf16.mxu0 0
  %1049 = vmatpush1.bf16.msra.mxu0 0
  %1050 = vmatprep.subr.bf16.mxu0 0
  %1051 = vmatpush1.bf16.msra.mxu0 0
  %1052 = vmatprep.subr.bf16.mxu0 0
  %1053 = vmatpush1.bf16.msra.mxu0 0
  %1054 = vmatprep.subr.bf16.mxu0 0
  %1055 = vmatpush1.bf16.msra.mxu0 0
  %1056 = vmatprep.subr.bf16.mxu0 0
  %1057 = vmatpush1.bf16.msra.mxu0 0
  %1058 = vmatprep.subr.bf16.mxu0 0
  %1059 = vmatpush1.bf16.msra.mxu0 0
  %1060 = vmatprep.subr.bf16.mxu0 0
  %1061 = vmatpush1.bf16.msra.mxu0 0
  %1062 = vmatprep.subr.bf16.mxu0 0
  %1063 = vmatpush1.bf16.msra.mxu0 0
  %1064 = vmatprep.subr.bf16.mxu0 0
  %1065 = vmatpush1.bf16.msra.mxu0 0
  %1066 = vmatprep.mubr.bf16.mxu0 0
  %1067 = vmatmul.mubr.bf16.gmra.mrb[0].mxu0 %v1032
  %v1068 = vpop.f32.mrb[0].mxu0
  %v1069 = vadd.f32 %v1017, %v1068
  %v1070 = vpop.f32.mrb[0].mxu0
  %v1071 = vpop.f32.mrb[0].mxu0
  %v1072 = vadd.f32 %v1017, %v1071
  %v1073 = vpop.f32.mrb[0].mxu0
  %1074 = vdwg.mxu0
  %1075 = vst [vmem:[#allocation2] sm:$0xff] %v1069
  %1076 = vst [vmem:[#allocation2 + $0x8] sm:$0xff] %v1072
  %v1077 = vld [vmem:[#allocation2] sm:$0x3]
  %v1078 = vld [vmem:[%s6] sm:$0xf]
  %v1079 = vld [vmem:[%s6 + $0x4] sm:$0xf]
  %v1080 = vld [vmem:[%s6 + $0x8] sm:$0xf]
  %v1081 = vld [vmem:[%s6 + $0xc] sm:$0xf]
  %v1086 = vunpack.c.l.b16 %v1078
  %v1087 = vunpack.c.l.b16 %v1079
  %v1088 = vunpack.c.l.b16 %v1080
  %v1089 = vunpack.c.l.b16 %v1081
  %v1090 = vpack.c.b16 %v1087, %v1086
  %v1091 = vpack.c.b16 %v1089, %v1088
  %1094 = vmatprep.subr.bf16.mxu0 0
  %1095 = vmatpush1.bf16.msra.mxu0 %v1090
  %1096 = vmatprep.subr.bf16.mxu0 0
  %1097 = vmatpush1.bf16.msra.mxu0 %v1091
  %1098 = vmatprep.subr.bf16.mxu0 0
  %1099 = vmatpush1.bf16.msra.mxu0 0
  %1100 = vmatprep.subr.bf16.mxu0 0
  %1101 = vmatpush1.bf16.msra.mxu0 0
  %1102 = vmatprep.subr.bf16.mxu0 0
  %1103 = vmatpush1.bf16.msra.mxu0 0
  %1104 = vmatprep.subr.bf16.mxu0 0
  %1105 = vmatpush1.bf16.msra.mxu0 0
  %1106 = vmatprep.subr.bf16.mxu0 0
  %1107 = vmatpush1.bf16.msra.mxu0 0
  %1108 = vmatprep.subr.bf16.mxu0 0
  %1109 = vmatpush1.bf16.msra.mxu0 0
  %1110 = vmatprep.subr.bf16.mxu0 0
  %1111 = vmatpush1.bf16.msra.mxu0 0
  %1112 = vmatprep.subr.bf16.mxu0 0
  %1113 = vmatpush1.bf16.msra.mxu0 0
  %1114 = vmatprep.subr.bf16.mxu0 0
  %1115 = vmatpush1.bf16.msra.mxu0 0
  %1116 = vmatprep.subr.bf16.mxu0 0
  %1117 = vmatpush1.bf16.msra.mxu0 0
  %1118 = vmatprep.subr.bf16.mxu0 0
  %1119 = vmatpush1.bf16.msra.mxu0 0
  %1120 = vmatprep.subr.bf16.mxu0 0
  %1121 = vmatpush1.bf16.msra.mxu0 0
  %1122 = vmatprep.subr.bf16.mxu0 0
  %1123 = vmatpush1.bf16.msra.mxu0 0
  %1124 = vmatprep.subr.bf16.mxu0 0
  %1125 = vmatpush1.bf16.msra.mxu0 0
  %1126 = vmatprep.mubr.bf16.mxu0 0
  %1127 = vmatmul.mubr.bf16.gmra.mrb[0].mxu0 %v121
  %v1128 = vpop.f32.mrb[0].mxu0
  %v1129 = vadd.f32 0.0, %v1128
  %v1130 = vpop.f32.mrb[0].mxu0
  %v1131 = vpop.f32.mrb[0].mxu0
  %v1132 = vpop.f32.mrb[0].mxu0
  %1133 = vdwg.mxu0
  %v1134 = vadd.f32 %v1077, %v1129
  %v1135 = vxor.u32 %v1134, 2147483648
  %v1136 = vmul.f32 %v1135, 1.442695
  %v1137 = vpow.pop %v1136
  %v1138 = vadd.f32 %v1137, 1.0
  %v1139 = vrcp.pop %v1138
  %v1140 = vmul.f32 1.0, %v1139
  %v1141 = vtanh.pop %v1134
  %v1142 = vmul.f32 %v1140, 0.0
  %1144 = vrot.lane.b32.xlu0 %v1141, 64
  %v1145 = vpop.permute.xlu0 %1144
  %v1147 = vmul.f32 %v1140, %v1145
  %1149 = vrot.lane.b32.xlu0 %v1147, 32
  %v1150 = vpop.permute.xlu0 %1149
  %v1152 = vadd.f32 %v1142, %v1150
  %v1153 = vtanh.pop %v1152
  %1155 = vrot.lane.b32.xlu0 %v1153, 64
  %v1156 = vpop.permute.xlu0 %1155
  %v1158 = vmul.f32 %v1140, %v1156
  %1160 = vrot.lane.b32.xlu0 %v1158, 32
  %v1161 = vpop.permute.xlu0 %1160
  %1163 = vst.msk [vmem:[%s8] sm:$0x3] %vm192, %v1161
  %v1164 = vld [vmem:[%s1] sm:$0x3]
  %1166 = vset.pattern.permute.xlu0 0
  %1167 = vperm.xlu0 %1166, %v1164
  %v1168 = vpop.permute.xlu0 %1167
  %v1170 = vmul.f32 %v1168, %v1158
  %v1171 = vsub.f32 1.0, %v1164
  %1173 = vset.pattern.permute.xlu0 0
  %1174 = vperm.xlu0 %1173, %v1171
  %v1175 = vpop.permute.xlu0 %1174
  %v1177 = vmul.f32 %v1175, 0.0
  %v1178 = vadd.f32 %v1170, %v1177
  %v1179 = vmul.f32 %v1168, %v1152
  %v1180 = vadd.f32 %v1179, %v1177
  %v1181 = vld [vmem:[#allocation2 + $0x2] sm:$0x3]
  %v1182 = vpack.c.bf16 %v1178, %v1178
  %v1183 = vld [vmem:[%s6] sm:$0xf]
  %v1184 = vld [vmem:[%s6 + $0x4] sm:$0xf]
  %v1185 = vld [vmem:[%s6 + $0x8] sm:$0xf]
  %v1186 = vld [vmem:[%s6 + $0xc] sm:$0xf]
  %1188 = vrot.lane.b32.xlu0 %v1182, 32
  %v1189 = vpop.permute.xlu0 %1188
  %v1194 = vunpack.c.l.b16 %v1183
  %v1195 = vunpack.c.l.b16 %v1184
  %v1196 = vunpack.c.l.b16 %v1185
  %v1197 = vunpack.c.l.b16 %v1186
  %v1198 = vpack.c.b16 %v1195, %v1194
  %v1199 = vpack.c.b16 %v1197, %v1196
  %v1203 = vsel %vm119, %v1189, 0
  %1205 = vmatprep.subr.bf16.mxu0 0
  %1206 = vmatpush1.bf16.msra.mxu0 %v1198
  %1207 = vmatprep.subr.bf16.mxu0 0
  %1208 = vmatpush1.bf16.msra.mxu0 %v1199
  %1209 = vmatprep.subr.bf16.mxu0 0
  %1210 = vmatpush1.bf16.msra.mxu0 0
  %1211 = vmatprep.subr.bf16.mxu0 0
  %1212 = vmatpush1.bf16.msra.mxu0 0
  %1213 = vmatprep.subr.bf16.mxu0 0
  %1214 = vmatpush1.bf16.msra.mxu0 0
  %1215 = vmatprep.subr.bf16.mxu0 0
  %1216 = vmatpush1.bf16.msra.mxu0 0
  %1217 = vmatprep.subr.bf16.mxu0 0
  %1218 = vmatpush1.bf16.msra.mxu0 0
  %1219 = vmatprep.subr.bf16.mxu0 0
  %1220 = vmatpush1.bf16.msra.mxu0 0
  %1221 = vmatprep.subr.bf16.mxu0 0
  %1222 = vmatpush1.bf16.msra.mxu0 0
  %1223 = vmatprep.subr.bf16.mxu0 0
  %1224 = vmatpush1.bf16.msra.mxu0 0
  %1225 = vmatprep.subr.bf16.mxu0 0
  %1226 = vmatpush1.bf16.msra.mxu0 0
  %1227 = vmatprep.subr.bf16.mxu0 0
  %1228 = vmatpush1.bf16.msra.mxu0 0
  %1229 = vmatprep.subr.bf16.mxu0 0
  %1230 = vmatpush1.bf16.msra.mxu0 0
  %1231 = vmatprep.subr.bf16.mxu0 0
  %1232 = vmatpush1.bf16.msra.mxu0 0
  %1233 = vmatprep.subr.bf16.mxu0 0
  %1234 = vmatpush1.bf16.msra.mxu0 0
  %1235 = vmatprep.subr.bf16.mxu0 0
  %1236 = vmatpush1.bf16.msra.mxu0 0
  %1237 = vmatprep.mubr.bf16.mxu0 0
  %1238 = vmatmul.mubr.bf16.gmra.mrb[0].mxu0 %v1203
  %v1239 = vpop.f32.mrb[0].mxu0
  %v1240 = vadd.f32 0.0, %v1239
  %v1241 = vpop.f32.mrb[0].mxu0
  %v1242 = vpop.f32.mrb[0].mxu0
  %v1243 = vpop.f32.mrb[0].mxu0
  %1244 = vdwg.mxu0
  %v1245 = vadd.f32 %v1181, %v1240
  %v1246 = vxor.u32 %v1245, 2147483648
  %v1247 = vmul.f32 %v1246, 1.442695
  %v1248 = vpow.pop %v1247
  %v1249 = vadd.f32 %v1248, 1.0
  %v1250 = vrcp.pop %v1249
  %v1251 = vmul.f32 1.0, %v1250
  %v1252 = vtanh.pop %v1245
  %v1253 = vmul.f32 %v1251, %v1180
  %1255 = vrot.lane.b32.xlu0 %v1252, 64
  %v1256 = vpop.permute.xlu0 %1255
  %v1258 = vmul.f32 %v1251, %v1256
  %1260 = vrot.lane.b32.xlu0 %v1258, 32
  %v1261 = vpop.permute.xlu0 %1260
  %v1263 = vadd.f32 %v1253, %v1261
  %v1264 = vtanh.pop %v1263
  %1266 = vrot.lane.b32.xlu0 %v1264, 64
  %v1267 = vpop.permute.xlu0 %1266
  %v1269 = vmul.f32 %v1251, %v1267
  %1271 = vrot.lane.b32.xlu0 %v1269, 32
  %v1272 = vpop.permute.xlu0 %1271
  %1274 = vst.msk [vmem:[%s8 + $0x2] sm:$0x3] %vm192, %v1272
  %v1275 = vld [vmem:[%s1 + $0x2] sm:$0x3]
  %1277 = vset.pattern.permute.xlu0 0
  %1278 = vperm.xlu0 %1277, %v1275
  %v1279 = vpop.permute.xlu0 %1278
  %v1281 = vmul.f32 %v1279, %v1269
  %v1282 = vsub.f32 1.0, %v1275
  %1284 = vset.pattern.permute.xlu0 0
  %1285 = vperm.xlu0 %1284, %v1282
  %v1286 = vpop.permute.xlu0 %1285
  %v1288 = vmul.f32 %v1286, %v1178
  %v1289 = vadd.f32 %v1281, %v1288
  %v1290 = vmul.f32 %v1279, %v1263
  %v1291 = vmul.f32 %v1286, %v1180
  %v1292 = vadd.f32 %v1290, %v1291
  %v1293 = vld [vmem:[#allocation2 + $0x4] sm:$0x3]
  %v1294 = vpack.c.bf16 %v1289, %v1289
  %v1295 = vld [vmem:[%s6] sm:$0xf]
  %v1296 = vld [vmem:[%s6 + $0x4] sm:$0xf]
  %v1297 = vld [vmem:[%s6 + $0x8] sm:$0xf]
  %v1298 = vld [vmem:[%s6 + $0xc] sm:$0xf]
  %1300 = vrot.lane.b32.xlu0 %v1294, 32
  %v1301 = vpop.permute.xlu0 %1300
  %v1306 = vunpack.c.l.b16 %v1295
  %v1307 = vunpack.c.l.b16 %v1296
  %v1308 = vunpack.c.l.b16 %v1297
  %v1309 = vunpack.c.l.b16 %v1298
  %v1310 = vpack.c.b16 %v1307, %v1306
  %v1311 = vpack.c.b16 %v1309, %v1308
  %v1315 = vsel %vm119, %v1301, 0
  %1317 = vmatprep.subr.bf16.mxu0 0
  %1318 = vmatpush1.bf16.msra.mxu0 %v1310
  %1319 = vmatprep.subr.bf16.mxu0 0
  %1320 = vmatpush1.bf16.msra.mxu0 %v1311
  %1321 = vmatprep.subr.bf16.mxu0 0
  %1322 = vmatpush1.bf16.msra.mxu0 0
  %1323 = vmatprep.subr.bf16.mxu0 0
  %1324 = vmatpush1.bf16.msra.mxu0 0
  %1325 = vmatprep.subr.bf16.mxu0 0
  %1326 = vmatpush1.bf16.msra.mxu0 0
  %1327 = vmatprep.subr.bf16.mxu0 0
  %1328 = vmatpush1.bf16.msra.mxu0 0
  %1329 = vmatprep.subr.bf16.mxu0 0
  %1330 = vmatpush1.bf16.msra.mxu0 0
  %1331 = vmatprep.subr.bf16.mxu0 0
  %1332 = vmatpush1.bf16.msra.mxu0 0
  %1333 = vmatprep.subr.bf16.mxu0 0
  %1334 = vmatpush1.bf16.msra.mxu0 0
  %1335 = vmatprep.subr.bf16.mxu0 0
  %1336 = vmatpush1.bf16.msra.mxu0 0
  %1337 = vmatprep.subr.bf16.mxu0 0
  %1338 = vmatpush1.bf16.msra.mxu0 0
  %1339 = vmatprep.subr.bf16.mxu0 0
  %1340 = vmatpush1.bf16.msra.mxu0 0
  %1341 = vmatprep.subr.bf16.mxu0 0
  %1342 = vmatpush1.bf16.msra.mxu0 0
  %1343 = vmatprep.subr.bf16.mxu0 0
  %1344 = vmatpush1.bf16.msra.mxu0 0
  %1345 = vmatprep.subr.bf16.mxu0 0
  %1346 = vmatpush1.bf16.msra.mxu0 0
  %1347 = vmatprep.subr.bf16.mxu0 0
  %1348 = vmatpush1.bf16.msra.mxu0 0
  %1349 = vmatprep.mubr.bf16.mxu0 0
  %1350 = vmatmul.mubr.bf16.gmra.mrb[0].mxu0 %v1315
  %v1351 = vpop.f32.mrb[0].mxu0
  %v1352 = vadd.f32 0.0, %v1351
  %v1353 = vpop.f32.mrb[0].mxu0
  %v1354 = vpop.f32.mrb[0].mxu0
  %v1355 = vpop.f32.mrb[0].mxu0
  %1356 = vdwg.mxu0
  %v1357 = vadd.f32 %v1293, %v1352
  %v1358 = vxor.u32 %v1357, 2147483648
  %v1359 = vmul.f32 %v1358, 1.442695
  %v1360 = vpow.pop %v1359
  %v1361 = vadd.f32 %v1360, 1.0
  %v1362 = vrcp.pop %v1361
  %v1363 = vmul.f32 1.0, %v1362
  %v1364 = vtanh.pop %v1357
  %v1365 = vmul.f32 %v1363, %v1292
  %1367 = vrot.lane.b32.xlu0 %v1364, 64
  %v1368 = vpop.permute.xlu0 %1367
  %v1370 = vmul.f32 %v1363, %v1368
  %1372 = vrot.lane.b32.xlu0 %v1370, 32
  %v1373 = vpop.permute.xlu0 %1372
  %v1375 = vadd.f32 %v1365, %v1373
  %v1376 = vtanh.pop %v1375
  %1378 = vrot.lane.b32.xlu0 %v1376, 64
  %v1379 = vpop.permute.xlu0 %1378
  %v1381 = vmul.f32 %v1363, %v1379
  %1383 = vrot.lane.b32.xlu0 %v1381, 32
  %v1384 = vpop.permute.xlu0 %1383
  %1386 = vst.msk [vmem:[%s8 + $0x4] sm:$0x3] %vm192, %v1384
  %v1387 = vld [vmem:[%s1 + $0x4] sm:$0x3]
  %1389 = vset.pattern.permute.xlu0 0
  %1390 = vperm.xlu0 %1389, %v1387
  %v1391 = vpop.permute.xlu0 %1390
  %v1393 = vmul.f32 %v1391, %v1381
  %v1394 = vsub.f32 1.0, %v1387
  %1396 = vset.pattern.permute.xlu0 0
  %1397 = vperm.xlu0 %1396, %v1394
  %v1398 = vpop.permute.xlu0 %1397
  %v1400 = vmul.f32 %v1398, %v1289
  %v1401 = vadd.f32 %v1393, %v1400
  %v1402 = vmul.f32 %v1391, %v1375
  %v1403 = vmul.f32 %v1398, %v1292
  %v1404 = vadd.f32 %v1402, %v1403
  %v1405 = vld [vmem:[#allocation2 + $0x6] sm:$0x3]
  %v1406 = vpack.c.bf16 %v1401, %v1401
  %v1407 = vld [vmem:[%s6] sm:$0xf]
  %v1408 = vld [vmem:[%s6 + $0x4] sm:$0xf]
  %v1409 = vld [vmem:[%s6 + $0x8] sm:$0xf]
  %v1410 = vld [vmem:[%s6 + $0xc] sm:$0xf]
  %1412 = vrot.lane.b32.xlu0 %v1406, 32
  %v1413 = vpop.permute.xlu0 %1412
  %v1418 = vunpack.c.l.b16 %v1407
  %v1419 = vunpack.c.l.b16 %v1408
  %v1420 = vunpack.c.l.b16 %v1409
  %v1421 = vunpack.c.l.b16 %v1410
  %v1422 = vpack.c.b16 %v1419, %v1418
  %v1423 = vpack.c.b16 %v1421, %v1420
  %v1427 = vsel %vm119, %v1413, 0
  %1429 = vmatprep.subr.bf16.mxu0 0
  %1430 = vmatpush1.bf16.msra.mxu0 %v1422
  %1431 = vmatprep.subr.bf16.mxu0 0
  %1432 = vmatpush1.bf16.msra.mxu0 %v1423
  %1433 = vmatprep.subr.bf16.mxu0 0
  %1434 = vmatpush1.bf16.msra.mxu0 0
  %1435 = vmatprep.subr.bf16.mxu0 0
  %1436 = vmatpush1.bf16.msra.mxu0 0
  %1437 = vmatprep.subr.bf16.mxu0 0
  %1438 = vmatpush1.bf16.msra.mxu0 0
  %1439 = vmatprep.subr.bf16.mxu0 0
  %1440 = vmatpush1.bf16.msra.mxu0 0
  %1441 = vmatprep.subr.bf16.mxu0 0
  %1442 = vmatpush1.bf16.msra.mxu0 0
  %1443 = vmatprep.subr.bf16.mxu0 0
  %1444 = vmatpush1.bf16.msra.mxu0 0
  %1445 = vmatprep.subr.bf16.mxu0 0
  %1446 = vmatpush1.bf16.msra.mxu0 0
  %1447 = vmatprep.subr.bf16.mxu0 0
  %1448 = vmatpush1.bf16.msra.mxu0 0
  %1449 = vmatprep.subr.bf16.mxu0 0
  %1450 = vmatpush1.bf16.msra.mxu0 0
  %1451 = vmatprep.subr.bf16.mxu0 0
  %1452 = vmatpush1.bf16.msra.mxu0 0
  %1453 = vmatprep.subr.bf16.mxu0 0
  %1454 = vmatpush1.bf16.msra.mxu0 0
  %1455 = vmatprep.subr.bf16.mxu0 0
  %1456 = vmatpush1.bf16.msra.mxu0 0
  %1457 = vmatprep.subr.bf16.mxu0 0
  %1458 = vmatpush1.bf16.msra.mxu0 0
  %1459 = vmatprep.subr.bf16.mxu0 0
  %1460 = vmatpush1.bf16.msra.mxu0 0
  %1461 = vmatprep.mubr.bf16.mxu0 0
  %1462 = vmatmul.mubr.bf16.gmra.mrb[0].mxu0 %v1427
  %v1463 = vpop.f32.mrb[0].mxu0
  %v1464 = vadd.f32 0.0, %v1463
  %v1465 = vpop.f32.mrb[0].mxu0
  %v1466 = vpop.f32.mrb[0].mxu0
  %v1467 = vpop.f32.mrb[0].mxu0
  %1468 = vdwg.mxu0
  %v1469 = vadd.f32 %v1405, %v1464
  %v1470 = vxor.u32 %v1469, 2147483648
  %v1471 = vmul.f32 %v1470, 1.442695
  %v1472 = vpow.pop %v1471
  %v1473 = vadd.f32 %v1472, 1.0
  %v1474 = vrcp.pop %v1473
  %v1475 = vmul.f32 1.0, %v1474
  %v1476 = vtanh.pop %v1469
  %v1477 = vmul.f32 %v1475, %v1404
  %1479 = vrot.lane.b32.xlu0 %v1476, 64
  %v1480 = vpop.permute.xlu0 %1479
  %v1482 = vmul.f32 %v1475, %v1480
  %1484 = vrot.lane.b32.xlu0 %v1482, 32
  %v1485 = vpop.permute.xlu0 %1484
  %v1487 = vadd.f32 %v1477, %v1485
  %v1488 = vtanh.pop %v1487
  %1490 = vrot.lane.b32.xlu0 %v1488, 64
  %v1491 = vpop.permute.xlu0 %1490
  %v1493 = vmul.f32 %v1475, %v1491
  %1495 = vrot.lane.b32.xlu0 %v1493, 32
  %v1496 = vpop.permute.xlu0 %1495
  %1498 = vst.msk [vmem:[%s8 + $0x6] sm:$0x3] %vm192, %v1496
  %v1499 = vld [vmem:[%s1 + $0x6] sm:$0x3]
  %1501 = vset.pattern.permute.xlu0 0
  %1502 = vperm.xlu0 %1501, %v1499
  %v1503 = vpop.permute.xlu0 %1502
  %v1505 = vmul.f32 %v1503, %v1493
  %v1506 = vsub.f32 1.0, %v1499
  %1508 = vset.pattern.permute.xlu0 0
  %1509 = vperm.xlu0 %1508, %v1506
  %v1510 = vpop.permute.xlu0 %1509
  %v1512 = vmul.f32 %v1510, %v1401
  %v1513 = vadd.f32 %v1505, %v1512
  %v1514 = vmul.f32 %v1503, %v1487
  %v1515 = vmul.f32 %v1510, %v1404
  %v1516 = vadd.f32 %v1514, %v1515
  %v1517 = vld [vmem:[#allocation2 + $0x8] sm:$0x3]
  %v1518 = vpack.c.bf16 %v1513, %v1513
  %v1519 = vld [vmem:[%s6] sm:$0xf]
  %v1520 = vld [vmem:[%s6 + $0x4] sm:$0xf]
  %v1521 = vld [vmem:[%s6 + $0x8] sm:$0xf]
  %v1522 = vld [vmem:[%s6 + $0xc] sm:$0xf]
  %1524 = vrot.lane.b32.xlu0 %v1518, 32
  %v1525 = vpop.permute.xlu0 %1524
  %v1530 = vunpack.c.l.b16 %v1519
  %v1531 = vunpack.c.l.b16 %v1520
  %v1532 = vunpack.c.l.b16 %v1521
  %v1533 = vunpack.c.l.b16 %v1522
  %v1534 = vpack.c.b16 %v1531, %v1530
  %v1535 = vpack.c.b16 %v1533, %v1532
  %v1539 = vsel %vm119, %v1525, 0
  %1541 = vmatprep.subr.bf16.mxu0 0
  %1542 = vmatpush1.bf16.msra.mxu0 %v1534
  %1543 = vmatprep.subr.bf16.mxu0 0
  %1544 = vmatpush1.bf16.msra.mxu0 %v1535
  %1545 = vmatprep.subr.bf16.mxu0 0
  %1546 = vmatpush1.bf16.msra.mxu0 0
  %1547 = vmatprep.subr.bf16.mxu0 0
  %1548 = vmatpush1.bf16.msra.mxu0 0
  %1549 = vmatprep.subr.bf16.mxu0 0
  %1550 = vmatpush1.bf16.msra.mxu0 0
  %1551 = vmatprep.subr.bf16.mxu0 0
  %1552 = vmatpush1.bf16.msra.mxu0 0
  %1553 = vmatprep.subr.bf16.mxu0 0
  %1554 = vmatpush1.bf16.msra.mxu0 0
  %1555 = vmatprep.subr.bf16.mxu0 0
  %1556 = vmatpush1.bf16.msra.mxu0 0
  %1557 = vmatprep.subr.bf16.mxu0 0
  %1558 = vmatpush1.bf16.msra.mxu0 0
  %1559 = vmatprep.subr.bf16.mxu0 0
  %1560 = vmatpush1.bf16.msra.mxu0 0
  %1561 = vmatprep.subr.bf16.mxu0 0
  %1562 = vmatpush1.bf16.msra.mxu0 0
  %1563 = vmatprep.subr.bf16.mxu0 0
  %1564 = vmatpush1.bf16.msra.mxu0 0
  %1565 = vmatprep.subr.bf16.mxu0 0
  %1566 = vmatpush1.bf16.msra.mxu0 0
  %1567 = vmatprep.subr.bf16.mxu0 0
  %1568 = vmatpush1.bf16.msra.mxu0 0
  %1569 = vmatprep.subr.bf16.mxu0 0
  %1570 = vmatpush1.bf16.msra.mxu0 0
  %1571 = vmatprep.subr.bf16.mxu0 0
  %1572 = vmatpush1.bf16.msra.mxu0 0
  %1573 = vmatprep.mubr.bf16.mxu0 0
  %1574 = vmatmul.mubr.bf16.gmra.mrb[0].mxu0 %v1539
  %v1575 = vpop.f32.mrb[0].mxu0
  %v1576 = vadd.f32 0.0, %v1575
  %v1577 = vpop.f32.mrb[0].mxu0
  %v1578 = vpop.f32.mrb[0].mxu0
  %v1579 = vpop.f32.mrb[0].mxu0
  %1580 = vdwg.mxu0
  %v1581 = vadd.f32 %v1517, %v1576
  %v1582 = vxor.u32 %v1581, 2147483648
  %v1583 = vmul.f32 %v1582, 1.442695
  %v1584 = vpow.pop %v1583
  %v1585 = vadd.f32 %v1584, 1.0
  %v1586 = vrcp.pop %v1585
  %v1587 = vmul.f32 1.0, %v1586
  %v1588 = vtanh.pop %v1581
  %v1589 = vmul.f32 %v1587, %v1516
  %1591 = vrot.lane.b32.xlu0 %v1588, 64
  %v1592 = vpop.permute.xlu0 %1591
  %v1594 = vmul.f32 %v1587, %v1592
  %1596 = vrot.lane.b32.xlu0 %v1594, 32
  %v1597 = vpop.permute.xlu0 %1596
  %v1599 = vadd.f32 %v1589, %v1597
  %v1600 = vtanh.pop %v1599
  %1602 = vrot.lane.b32.xlu0 %v1600, 64
  %v1603 = vpop.permute.xlu0 %1602
  %v1605 = vmul.f32 %v1587, %v1603
  %1607 = vrot.lane.b32.xlu0 %v1605, 32
  %v1608 = vpop.permute.xlu0 %1607
  %1610 = vst.msk [vmem:[%s8 + $0x8] sm:$0x3] %vm192, %v1608
  %v1611 = vld [vmem:[%s1 + $0x8] sm:$0x3]
  %1613 = vset.pattern.permute.xlu0 0
  %1614 = vperm.xlu0 %1613, %v1611
  %v1615 = vpop.permute.xlu0 %1614
  %v1617 = vmul.f32 %v1615, %v1605
  %v1618 = vsub.f32 1.0, %v1611
  %1620 = vset.pattern.permute.xlu0 0
  %1621 = vperm.xlu0 %1620, %v1618
  %v1622 = vpop.permute.xlu0 %1621
  %v1624 = vmul.f32 %v1622, %v1513
  %v1625 = vadd.f32 %v1617, %v1624
  %v1626 = vmul.f32 %v1615, %v1599
  %v1627 = vmul.f32 %v1622, %v1516
  %v1628 = vadd.f32 %v1626, %v1627
  %v1629 = vld [vmem:[#allocation2 + $0xa] sm:$0x3]
  %v1630 = vpack.c.bf16 %v1625, %v1625
  %v1631 = vld [vmem:[%s6] sm:$0xf]
  %v1632 = vld [vmem:[%s6 + $0x4] sm:$0xf]
  %v1633 = vld [vmem:[%s6 + $0x8] sm:$0xf]
  %v1634 = vld [vmem:[%s6 + $0xc] sm:$0xf]
  %1636 = vrot.lane.b32.xlu0 %v1630, 32
  %v1637 = vpop.permute.xlu0 %1636
  %v1642 = vunpack.c.l.b16 %v1631
  %v1643 = vunpack.c.l.b16 %v1632
  %v1644 = vunpack.c.l.b16 %v1633
  %v1645 = vunpack.c.l.b16 %v1634
  %v1646 = vpack.c.b16 %v1643, %v1642
  %v1647 = vpack.c.b16 %v1645, %v1644
  %v1651 = vsel %vm119, %v1637, 0
  %1653 = vmatprep.subr.bf16.mxu0 0
  %1654 = vmatpush1.bf16.msra.mxu0 %v1646
  %1655 = vmatprep.subr.bf16.mxu0 0
  %1656 = vmatpush1.bf16.msra.mxu0 %v1647
  %1657 = vmatprep.subr.bf16.mxu0 0
  %1658 = vmatpush1.bf16.msra.mxu0 0
  %1659 = vmatprep.subr.bf16.mxu0 0
  %1660 = vmatpush1.bf16.msra.mxu0 0
  %1661 = vmatprep.subr.bf16.mxu0 0
  %1662 = vmatpush1.bf16.msra.mxu0 0
  %1663 = vmatprep.subr.bf16.mxu0 0
  %1664 = vmatpush1.bf16.msra.mxu0 0
  %1665 = vmatprep.subr.bf16.mxu0 0
  %1666 = vmatpush1.bf16.msra.mxu0 0
  %1667 = vmatprep.subr.bf16.mxu0 0
  %1668 = vmatpush1.bf16.msra.mxu0 0
  %1669 = vmatprep.subr.bf16.mxu0 0
  %1670 = vmatpush1.bf16.msra.mxu0 0
  %1671 = vmatprep.subr.bf16.mxu0 0
  %1672 = vmatpush1.bf16.msra.mxu0 0
  %1673 = vmatprep.subr.bf16.mxu0 0
  %1674 = vmatpush1.bf16.msra.mxu0 0
  %1675 = vmatprep.subr.bf16.mxu0 0
  %1676 = vmatpush1.bf16.msra.mxu0 0
  %1677 = vmatprep.subr.bf16.mxu0 0
  %1678 = vmatpush1.bf16.msra.mxu0 0
  %1679 = vmatprep.subr.bf16.mxu0 0
  %1680 = vmatpush1.bf16.msra.mxu0 0
  %1681 = vmatprep.subr.bf16.mxu0 0
  %1682 = vmatpush1.bf16.msra.mxu0 0
  %1683 = vmatprep.subr.bf16.mxu0 0
  %1684 = vmatpush1.bf16.msra.mxu0 0
  %1685 = vmatprep.mubr.bf16.mxu0 0
  %1686 = vmatmul.mubr.bf16.gmra.mrb[0].mxu0 %v1651
  %v1687 = vpop.f32.mrb[0].mxu0
  %v1688 = vadd.f32 0.0, %v1687
  %v1689 = vpop.f32.mrb[0].mxu0
  %v1690 = vpop.f32.mrb[0].mxu0
  %v1691 = vpop.f32.mrb[0].mxu0
  %1692 = vdwg.mxu0
  %v1693 = vadd.f32 %v1629, %v1688
  %v1694 = vxor.u32 %v1693, 2147483648
  %v1695 = vmul.f32 %v1694, 1.442695
  %v1696 = vpow.pop %v1695
  %v1697 = vadd.f32 %v1696, 1.0
  %v1698 = vrcp.pop %v1697
  %v1699 = vmul.f32 1.0, %v1698
  %v1700 = vtanh.pop %v1693
  %v1701 = vmul.f32 %v1699, %v1628
  %1703 = vrot.lane.b32.xlu0 %v1700, 64
  %v1704 = vpop.permute.xlu0 %1703
  %v1706 = vmul.f32 %v1699, %v1704
  %1708 = vrot.lane.b32.xlu0 %v1706, 32
  %v1709 = vpop.permute.xlu0 %1708
  %v1711 = vadd.f32 %v1701, %v1709
  %v1712 = vtanh.pop %v1711
  %1714 = vrot.lane.b32.xlu0 %v1712, 64
  %v1715 = vpop.permute.xlu0 %1714
  %v1717 = vmul.f32 %v1699, %v1715
  %1719 = vrot.lane.b32.xlu0 %v1717, 32
  %v1720 = vpop.permute.xlu0 %1719
  %1722 = vst.msk [vmem:[%s8 + $0xa] sm:$0x3] %vm192, %v1720
  %v1723 = vld [vmem:[%s1 + $0xa] sm:$0x3]
  %1725 = vset.pattern.permute.xlu0 0
  %1726 = vperm.xlu0 %1725, %v1723
  %v1727 = vpop.permute.xlu0 %1726
  %v1729 = vmul.f32 %v1727, %v1717
  %v1730 = vsub.f32 1.0, %v1723
  %1732 = vset.pattern.permute.xlu0 0
  %1733 = vperm.xlu0 %1732, %v1730
  %v1734 = vpop.permute.xlu0 %1733
  %v1736 = vmul.f32 %v1734, %v1625
  %v1737 = vadd.f32 %v1729, %v1736
  %v1738 = vmul.f32 %v1727, %v1711
  %v1739 = vmul.f32 %v1734, %v1628
  %v1740 = vadd.f32 %v1738, %v1739
  %v1741 = vld [vmem:[#allocation2 + $0xc] sm:$0x3]
  %v1742 = vpack.c.bf16 %v1737, %v1737
  %v1743 = vld [vmem:[%s6] sm:$0xf]
  %v1744 = vld [vmem:[%s6 + $0x4] sm:$0xf]
  %v1745 = vld [vmem:[%s6 + $0x8] sm:$0xf]
  %v1746 = vld [vmem:[%s6 + $0xc] sm:$0xf]
  %1748 = vrot.lane.b32.xlu0 %v1742, 32
  %v1749 = vpop.permute.xlu0 %1748
  %v1754 = vunpack.c.l.b16 %v1743
  %v1755 = vunpack.c.l.b16 %v1744
  %v1756 = vunpack.c.l.b16 %v1745
  %v1757 = vunpack.c.l.b16 %v1746
  %v1758 = vpack.c.b16 %v1755, %v1754
  %v1759 = vpack.c.b16 %v1757, %v1756
  %v1763 = vsel %vm119, %v1749, 0
  %1765 = vmatprep.subr.bf16.mxu0 0
  %1766 = vmatpush1.bf16.msra.mxu0 %v1758
  %1767 = vmatprep.subr.bf16.mxu0 0
  %1768 = vmatpush1.bf16.msra.mxu0 %v1759
  %1769 = vmatprep.subr.bf16.mxu0 0
  %1770 = vmatpush1.bf16.msra.mxu0 0
  %1771 = vmatprep.subr.bf16.mxu0 0
  %1772 = vmatpush1.bf16.msra.mxu0 0
  %1773 = vmatprep.subr.bf16.mxu0 0
  %1774 = vmatpush1.bf16.msra.mxu0 0
  %1775 = vmatprep.subr.bf16.mxu0 0
  %1776 = vmatpush1.bf16.msra.mxu0 0
  %1777 = vmatprep.subr.bf16.mxu0 0
  %1778 = vmatpush1.bf16.msra.mxu0 0
  %1779 = vmatprep.subr.bf16.mxu0 0
  %1780 = vmatpush1.bf16.msra.mxu0 0
  %1781 = vmatprep.subr.bf16.mxu0 0
  %1782 = vmatpush1.bf16.msra.mxu0 0
  %1783 = vmatprep.subr.bf16.mxu0 0
  %1784 = vmatpush1.bf16.msra.mxu0 0
  %1785 = vmatprep.subr.bf16.mxu0 0
  %1786 = vmatpush1.bf16.msra.mxu0 0
  %1787 = vmatprep.subr.bf16.mxu0 0
  %1788 = vmatpush1.bf16.msra.mxu0 0
  %1789 = vmatprep.subr.bf16.mxu0 0
  %1790 = vmatpush1.bf16.msra.mxu0 0
  %1791 = vmatprep.subr.bf16.mxu0 0
  %1792 = vmatpush1.bf16.msra.mxu0 0
  %1793 = vmatprep.subr.bf16.mxu0 0
  %1794 = vmatpush1.bf16.msra.mxu0 0
  %1795 = vmatprep.subr.bf16.mxu0 0
  %1796 = vmatpush1.bf16.msra.mxu0 0
  %1797 = vmatprep.mubr.bf16.mxu0 0
  %1798 = vmatmul.mubr.bf16.gmra.mrb[0].mxu0 %v1763
  %v1799 = vpop.f32.mrb[0].mxu0
  %v1800 = vadd.f32 0.0, %v1799
  %v1801 = vpop.f32.mrb[0].mxu0
  %v1802 = vpop.f32.mrb[0].mxu0
  %v1803 = vpop.f32.mrb[0].mxu0
  %1804 = vdwg.mxu0
  %v1805 = vadd.f32 %v1741, %v1800
  %v1806 = vxor.u32 %v1805, 2147483648
  %v1807 = vmul.f32 %v1806, 1.442695
  %v1808 = vpow.pop %v1807
  %v1809 = vadd.f32 %v1808, 1.0
  %v1810 = vrcp.pop %v1809
  %v1811 = vmul.f32 1.0, %v1810
  %v1812 = vtanh.pop %v1805
  %v1813 = vmul.f32 %v1811, %v1740
  %1815 = vrot.lane.b32.xlu0 %v1812, 64
  %v1816 = vpop.permute.xlu0 %1815
  %v1818 = vmul.f32 %v1811, %v1816
  %1820 = vrot.lane.b32.xlu0 %v1818, 32
  %v1821 = vpop.permute.xlu0 %1820
  %v1823 = vadd.f32 %v1813, %v1821
  %v1824 = vtanh.pop %v1823
  %1826 = vrot.lane.b32.xlu0 %v1824, 64
  %v1827 = vpop.permute.xlu0 %1826
  %v1829 = vmul.f32 %v1811, %v1827
  %1831 = vrot.lane.b32.xlu0 %v1829, 32
  %v1832 = vpop.permute.xlu0 %1831
  %1834 = vst.msk [vmem:[%s8 + $0xc] sm:$0x3] %vm192, %v1832
  %v1835 = vld [vmem:[%s1 + $0xc] sm:$0x3]
  %1837 = vset.pattern.permute.xlu0 0
  %1838 = vperm.xlu0 %1837, %v1835
  %v1839 = vpop.permute.xlu0 %1838
  %v1841 = vmul.f32 %v1839, %v1829
  %v1842 = vsub.f32 1.0, %v1835
  %1844 = vset.pattern.permute.xlu0 0
  %1845 = vperm.xlu0 %1844, %v1842
  %v1846 = vpop.permute.xlu0 %1845
  %v1848 = vmul.f32 %v1846, %v1737
  %v1849 = vadd.f32 %v1841, %v1848
  %v1850 = vmul.f32 %v1839, %v1823
  %v1851 = vmul.f32 %v1846, %v1740
  %v1852 = vadd.f32 %v1850, %v1851
  %v1853 = vld [vmem:[#allocation2 + $0xe] sm:$0x3]
  %v1854 = vpack.c.bf16 %v1849, %v1849
  %v1855 = vld [vmem:[%s6] sm:$0xf]
  %v1856 = vld [vmem:[%s6 + $0x4] sm:$0xf]
  %v1857 = vld [vmem:[%s6 + $0x8] sm:$0xf]
  %v1858 = vld [vmem:[%s6 + $0xc] sm:$0xf]
  %1860 = vrot.lane.b32.xlu0 %v1854, 32
  %v1861 = vpop.permute.xlu0 %1860
  %v1866 = vunpack.c.l.b16 %v1855
  %v1867 = vunpack.c.l.b16 %v1856
  %v1868 = vunpack.c.l.b16 %v1857
  %v1869 = vunpack.c.l.b16 %v1858
  %v1870 = vpack.c.b16 %v1867, %v1866
  %v1871 = vpack.c.b16 %v1869, %v1868
  %v1875 = vsel %vm119, %v1861, 0
  %1877 = vmatprep.subr.bf16.mxu0 0
  %1878 = vmatpush1.bf16.msra.mxu0 %v1870
  %1879 = vmatprep.subr.bf16.mxu0 0
  %1880 = vmatpush1.bf16.msra.mxu0 %v1871
  %1881 = vmatprep.subr.bf16.mxu0 0
  %1882 = vmatpush1.bf16.msra.mxu0 0
  %1883 = vmatprep.subr.bf16.mxu0 0
  %1884 = vmatpush1.bf16.msra.mxu0 0
  %1885 = vmatprep.subr.bf16.mxu0 0
  %1886 = vmatpush1.bf16.msra.mxu0 0
  %1887 = vmatprep.subr.bf16.mxu0 0
  %1888 = vmatpush1.bf16.msra.mxu0 0
  %1889 = vmatprep.subr.bf16.mxu0 0
  %1890 = vmatpush1.bf16.msra.mxu0 0
  %1891 = vmatprep.subr.bf16.mxu0 0
  %1892 = vmatpush1.bf16.msra.mxu0 0
  %1893 = vmatprep.subr.bf16.mxu0 0
  %1894 = vmatpush1.bf16.msra.mxu0 0
  %1895 = vmatprep.subr.bf16.mxu0 0
  %1896 = vmatpush1.bf16.msra.mxu0 0
  %1897 = vmatprep.subr.bf16.mxu0 0
  %1898 = vmatpush1.bf16.msra.mxu0 0
  %1899 = vmatprep.subr.bf16.mxu0 0
  %1900 = vmatpush1.bf16.msra.mxu0 0
  %1901 = vmatprep.subr.bf16.mxu0 0
  %1902 = vmatpush1.bf16.msra.mxu0 0
  %1903 = vmatprep.subr.bf16.mxu0 0
  %1904 = vmatpush1.bf16.msra.mxu0 0
  %1905 = vmatprep.subr.bf16.mxu0 0
  %1906 = vmatpush1.bf16.msra.mxu0 0
  %1907 = vmatprep.subr.bf16.mxu0 0
  %1908 = vmatpush1.bf16.msra.mxu0 0
  %1909 = vmatprep.mubr.bf16.mxu0 0
  %1910 = vmatmul.mubr.bf16.gmra.mrb[0].mxu0 %v1875
  %v1911 = vpop.f32.mrb[0].mxu0
  %v1912 = vadd.f32 0.0, %v1911
  %v1913 = vpop.f32.mrb[0].mxu0
  %v1914 = vpop.f32.mrb[0].mxu0
  %v1915 = vpop.f32.mrb[0].mxu0
  %1916 = vdwg.mxu0
  %v1917 = vadd.f32 %v1853, %v1912
  %v1918 = vxor.u32 %v1917, 2147483648
  %v1919 = vmul.f32 %v1918, 1.442695
  %v1920 = vpow.pop %v1919
  %v1921 = vadd.f32 %v1920, 1.0
  %v1922 = vrcp.pop %v1921
  %v1923 = vmul.f32 1.0, %v1922
  %v1924 = vtanh.pop %v1917
  %v1925 = vmul.f32 %v1923, %v1852
  %1927 = vrot.lane.b32.xlu0 %v1924, 64
  %v1928 = vpop.permute.xlu0 %1927
  %v1930 = vmul.f32 %v1923, %v1928
  %1932 = vrot.lane.b32.xlu0 %v1930, 32
  %v1933 = vpop.permute.xlu0 %1932
  %v1935 = vadd.f32 %v1925, %v1933
  %v1936 = vtanh.pop %v1935
  %1938 = vrot.lane.b32.xlu0 %v1936, 64
  %v1939 = vpop.permute.xlu0 %1938
  %v1941 = vmul.f32 %v1923, %v1939
  %1943 = vrot.lane.b32.xlu0 %v1941, 32
  %v1944 = vpop.permute.xlu0 %1943
  %1946 = vst.msk [vmem:[%s8 + $0xe] sm:$0x3] %vm192, %v1944
  %v1947 = vld [vmem:[%s1 + $0xe] sm:$0x3]
  %1949 = vset.pattern.permute.xlu0 0
  %1950 = vperm.xlu0 %1949, %v1947
  %v1951 = vpop.permute.xlu0 %1950
  %v1953 = vmul.f32 %v1951, %v1941
  %v1954 = vsub.f32 1.0, %v1947
  %1956 = vset.pattern.permute.xlu0 0
  %1957 = vperm.xlu0 %1956, %v1954
  %v1958 = vpop.permute.xlu0 %1957
  %v1960 = vmul.f32 %v1958, %v1849
  %v1961 = vadd.f32 %v1953, %v1960
  %v1962 = vmul.f32 %v1951, %v1935
  %v1963 = vmul.f32 %v1958, %v1852
  %v1964 = vadd.f32 %v1962, %v1963
  %1966 = vrot.lane.b32.xlu0 %v1961, 32
  %v1967 = vpop.permute.xlu0 %1966
  %1969 = vst.msk [vmem:[%s9 + $0x2] sm:$0x3] %vm192, %v1967
  %1971 = vrot.lane.b32.xlu0 %v1964, 96
  %v1972 = vpop.permute.xlu0 %1971
  %1974 = vst.msk [vmem:[%s10 + $0x2] sm:$0x3] %vm192, %v1972
  %v1975 = vld [vmem:[%s8] sm:$0xff]
  %v1976 = vld [vmem:[%s8 + $0x8] sm:$0xff]
  %v1977 = vld [vmem:[%s1] sm:$0xff]
  %v1978 = vld [vmem:[%s1 + $0x8] sm:$0xff]
  %1980 = vset.pattern.permute.xlu0 0
  %1981 = vperm.xlu0 %1980, %v1977
  %v1982 = vpop.permute.xlu0 %1981
  %1985 = vset.pattern.permute.xlu0 0
  %1986 = vperm.xlu0 %1985, %v1978
  %v1987 = vpop.permute.xlu0 %1986
  %v1989 = vmul.f32 %v1975, %v1982
  %v1990 = vmul.f32 %v1976, %v1987
  %1991 = vst.msk [vmem:[%s8] sm:$0xff] %vm119, %v1989
  %1992 = vst.msk [vmem:[%s8 + $0x8] sm:$0xff] %vm119, %v1990
  // Predicated region
  $region34: #{lstm_encoder_forward.1} parent=0 // pred_check
    _
  $region35: #{lstm_encoder_forward.1} parent=0 // pred_check_branch
    %1994 = sbr.rel (0) target = $region37
  $region36: #{lstm_encoder_forward.1} parent=0 // pred_region
    _
  $region37: #{lstm_encoder_forward.1} parent=0 // pred_fallthru
    _
  // Predicated region
  $region38: #{lstm_encoder_forward.1} parent=0 // pred_check
    _
  $region39: #{lstm_encoder_forward.1} parent=0 // pred_check_branch
    %1996 = sbr.rel (0) target = $region41
  $region40: #{lstm_encoder_forward.1} parent=0 // pred_region
    _
  $region41: #{lstm_encoder_forward.1} parent=0 // pred_fallthru
    _
  // Predicated region
  $region42: #{lstm_encoder_forward.1} parent=0 // pred_check
    _
  $region43: #{lstm_encoder_forward.1} parent=0 // pred_check_branch
    %1998 = sbr.rel (0) target = $region45
  $region44: #{lstm_encoder_forward.1} parent=0 // pred_region
    _
  $region45: #{lstm_encoder_forward.1} parent=0 // pred_fallthru
    _
  // Predicated region
  $region46: #{lstm_encoder_forward.1} parent=0 // pred_check
    _
  $region47: #{lstm_encoder_forward.1} parent=0 // pred_check_branch
    %2000 = sbr.rel (0) target = $region49
  $region48: #{lstm_encoder_forward.1} parent=0 // pred_region
    _
  $region49: #{lstm_encoder_forward.1} parent=0 // pred_fallthru
    _
  // Predicated region
  $region50: #{lstm_encoder_forward.1} parent=0 // pred_check
    _
  $region51: #{lstm_encoder_forward.1} parent=0 // pred_check_branch
    %2002 = sbr.rel (0) target = $region53
  $region52: #{lstm_encoder_forward.1} parent=0 // pred_region
    _
  $region53: #{lstm_encoder_forward.1} parent=0 // pred_fallthru
    _
  // Predicated region
  $region54: #{lstm_encoder_forward.1} parent=0 // pred_check
    _
  $region55: #{lstm_encoder_forward.1} parent=0 // pred_check_branch
    %2004 = sbr.rel (0) target = $region57
  $region56: #{lstm_encoder_forward.1} parent=0 // pred_region
    _
  $region57: #{lstm_encoder_forward.1} parent=0 // pred_fallthru
    _

</llo_original>
